<compile_context>
chip_gen: v7x
topology: tpu7x:2x2x1
jax: 0.10.0
libtpu: 0.0.40
codegen_flags: <defaults>
</compile_context>

<pallas_src>
import jax
import jax.numpy as jnp
from jax.experimental import pallas as pl
from jax.experimental.pallas import tpu as pltpu

EPS = 1e-5
COMPUTE_DTYPE = jnp.bfloat16          # MXU input dtype (accumulation stays f32)
ROW_TILE_TARGET = 1024                # rows per grid step in the elementwise pass
VMEM_LIMIT_BYTES = 48 * 1024 * 1024   # below v7x's 64 MiB physical VMEM

_TAPS = tuple((dy, dx) for dy in range(3) for dx in range(3))


# ----------------------------- small helpers --------------------------------

def _conv_w_to_matrix(w_oihw):
    """PyTorch (Cout, Cin, 3, 3) -> (9*Cin, Cout); K index = (dy*3+dx)*Cin + cin.

    Matches the im2col column ordering built inside the conv kernels."""
    co, ci, kh, kw = w_oihw.shape
    return jnp.transpose(w_oihw, (2, 3, 1, 0)).reshape(kh * kw * ci, co)


def _fold_bn(s, q, gamma, beta, count):
    """Fold batch stats + affine into a single per-channel scale/shift."""
    mean = s / count
    var = jnp.maximum(q / count - mean * mean, 0.0)   # biased var (training BN)
    scale = gamma * jax.lax.rsqrt(var + EPS)
    shift = beta - mean * scale
    return scale, shift


def _pick_row_tile(m, target):
    """Largest divisor of m that is <= target (and sublane friendly)."""
    t = min(m, target)
    while m % t:
        t -= 1
    if t != m and t % 8 != 0:
        t = m            # fall back to a single full-extent block
    return t


# ------------------------------ Pallas kernels -------------------------------

def _conv1_kernel(x_ref, w_ref, y_ref, s_ref, q_ref, xpad_ref, col_ref):
    """Per image: Conv1 (a + gate halves fused into one [9C, 2C] weight) as a
    single K-stacked bf16 matmul on an in-VMEM im2col slab, plus per-image
    partial BN1 statistics (reduced across the batch in the wrapper)."""
    _, H, W, C = x_ref.shape
    C2 = y_ref.shape[-1]

    # Zero-padded f32 copy of the image tile: the 3x3 halo lives in VMEM, so
    # no host-side im2col / padding is needed.  Re-zeroed every step so the
    # kernel is safe under "parallel" (per-core scratch) batch sharding.
    xpad_ref[...] = jnp.zeros_like(xpad_ref)
    xpad_ref[1:H + 1, 1:W + 1, :] = x_ref[0]

    # Build the bf16 [H*W, 9*C] im2col slab (one shifted window per tap).
    for k, (dy, dx) in enumerate(_TAPS):
        col_ref[:, k * C:(k + 1) * C] = (
            xpad_ref[dy:dy + H, dx:dx + W, :]
            .reshape(H * W, C).astype(col_ref.dtype))

    # One MXU matmul with K = 9*C, N = 2*C (both GLU halves at once).
    acc = jnp.dot(col_ref[...], w_ref[...], preferred_element_type=jnp.float32)

    y_ref[0] = acc.reshape(H, W, C2).astype(y_ref.dtype)        # bf16 to HBM
    s_ref[0] = jnp.sum(acc, axis=0, keepdims=True)              # f32 partials
    q_ref[0] = jnp.sum(acc * acc, axis=0, keepdims=True)


def _glu_conv2_kernel(y1_ref, sc_ref, sh_ref, w_ref, y2_ref, s_ref, q_ref,
                      hpad_ref, col_ref):
    """Per image: folded BN1 + GLU, then Conv2 as a single K-stacked bf16
    matmul on the VMEM-resident GLU output (h never touches HBM), plus
    per-image partial BN2 statistics."""
    _, H, W, C2 = y1_ref.shape
    C = C2 // 2

    # BN1 fold is one FMA per element; GLU splits at a lane offset of C.
    z = y1_ref[0].astype(jnp.float32) * sc_ref[...] + sh_ref[...]
    h = z[..., :C] * jax.nn.sigmoid(z[..., C:])                 # sigmoid -> EUP

    hpad_ref[...] = jnp.zeros_like(hpad_ref)
    hpad_ref[1:H + 1, 1:W + 1, :] = h

    for k, (dy, dx) in enumerate(_TAPS):
        col_ref[:, k * C:(k + 1) * C] = (
            hpad_ref[dy:dy + H, dx:dx + W, :]
            .reshape(H * W, C).astype(col_ref.dtype))

    acc = jnp.dot(col_ref[...], w_ref[...], preferred_element_type=jnp.float32)

    y2_ref[0] = acc.reshape(H, W, C).astype(y2_ref.dtype)
    s_ref[0] = jnp.sum(acc, axis=0, keepdims=True)
    q_ref[0] = jnp.sum(acc * acc, axis=0, keepdims=True)


def _bn_residual_kernel(x_ref, y_ref, sc_ref, sh_ref, o_ref):
    """Tiled, parallel: out = x + (y2 * scale + shift)."""
    o_ref[...] = x_ref[...] + (y_ref[...] * sc_ref[...] + sh_ref[...])


# ------------------------------ pallas_call wrappers --------------------------

def _call_conv1(x_nhwc, w1):
    N, H, W, C = x_nhwc.shape
    C2 = 2 * C
    M = N * H * W
    img_in = pl.BlockSpec((1, H, W, C), lambda n: (n, 0, 0, 0))
    img_out = pl.BlockSpec((1, H, W, C2), lambda n: (n, 0, 0, 0))
    wsp = pl.BlockSpec((9 * C, C2), lambda n: (0, 0))
    vec = pl.BlockSpec((1, 1, C2), lambda n: (n, 0, 0))
    flops = 2 * M * 9 * C * C2
    bytes_accessed = 4 * M * C + 2 * 9 * C * C2 + 2 * M * C2 + 2 * 4 * N * C2
    return pl.pallas_call(
        _conv1_kernel,
        grid=(N,),
        in_specs=[img_in, wsp],
        out_specs=(img_out, vec, vec),
        out_shape=(
            jax.ShapeDtypeStruct((N, H, W, C2), COMPUTE_DTYPE),   # y1 (bf16)
            jax.ShapeDtypeStruct((N, 1, C2), jnp.float32),        # partial sum
            jax.ShapeDtypeStruct((N, 1, C2), jnp.float32),        # partial sumsq
        ),
        scratch_shapes=[pltpu.VMEM((H + 2, W + 2, C), jnp.float32),
                        pltpu.VMEM((H * W, 9 * C), COMPUTE_DTYPE)],
        compiler_params=pltpu.CompilerParams(
            dimension_semantics=("parallel",),    # per-image stats -> shardable
            vmem_limit_bytes=VMEM_LIMIT_BYTES),
        cost_estimate=pl.CostEstimate(
            flops=flops, transcendentals=0, bytes_accessed=bytes_accessed),
    )(x_nhwc, w1)


def _call_conv2(y1, sc1, sh1, w2):
    N, H, W, C2 = y1.shape
    C = C2 // 2
    M = N * H * W
    img_in = pl.BlockSpec((1, H, W, C2), lambda n: (n, 0, 0, 0))
    img_out = pl.BlockSpec((1, H, W, C), lambda n: (n, 0, 0, 0))
    wsp = pl.BlockSpec((9 * C, C), lambda n: (0, 0))
    bcvec = pl.BlockSpec((1, C2), lambda n: (0, 0))
    vec = pl.BlockSpec((1, 1, C), lambda n: (n, 0, 0))
    flops = 2 * M * 9 * C * C + 8 * M * C
    bytes_accessed = 2 * M * C2 + 2 * 9 * C * C + 4 * M * C + 2 * 4 * N * C
    return pl.pallas_call(
        _glu_conv2_kernel,
        grid=(N,),
        in_specs=[img_in, bcvec, bcvec, wsp],
        out_specs=(img_out, vec, vec),
        out_shape=(
            jax.ShapeDtypeStruct((N, H, W, C), jnp.float32),      # y2 (f32)
            jax.ShapeDtypeStruct((N, 1, C), jnp.float32),
            jax.ShapeDtypeStruct((N, 1, C), jnp.float32),
        ),
        scratch_shapes=[pltpu.VMEM((H + 2, W + 2, C), jnp.float32),
                        pltpu.VMEM((H * W, 9 * C), COMPUTE_DTYPE)],
        compiler_params=pltpu.CompilerParams(
            dimension_semantics=("parallel",),
            vmem_limit_bytes=VMEM_LIMIT_BYTES),
        cost_estimate=pl.CostEstimate(
            flops=flops, transcendentals=M * C, bytes_accessed=bytes_accessed),
    )(y1, sc1, sh1, w2)


def _call_bn_residual(x_flat, y_flat, scale, shift):
    M, C = x_flat.shape
    tm = _pick_row_tile(M, ROW_TILE_TARGET)
    row = pl.BlockSpec((tm, C), lambda i: (i, 0))
    vec = pl.BlockSpec((1, C), lambda i: (0, 0))
    return pl.pallas_call(
        _bn_residual_kernel,
        grid=(M // tm,),
        in_specs=[row, row, vec, vec],
        out_specs=row,
        out_shape=jax.ShapeDtypeStruct((M, C), jnp.float32),
        compiler_params=pltpu.CompilerParams(
            dimension_semantics=("parallel",),    # megacore-shardable
            vmem_limit_bytes=VMEM_LIMIT_BYTES),
        cost_estimate=pl.CostEstimate(
            flops=3 * M * C, transcendentals=0,
            bytes_accessed=3 * 4 * M * C + 8 * C),
    )(x_flat, y_flat, scale, shift)


# ------------------------------- module wrapper -------------------------------

def init_params(key, n_c):
    k1, k2, k3, k4, k5, k6 = jax.random.split(key, 6)
    w1 = jax.random.normal(k1, (2 * n_c, n_c, 3, 3), jnp.float32) * 0.1
    w2 = jax.random.normal(k2, (n_c, n_c, 3, 3), jnp.float32) * 0.1
    g1 = 1.0 + 0.1 * jax.random.normal(k3, (2 * n_c,), jnp.float32)
    b1 = 0.1 * jax.random.normal(k4, (2 * n_c,), jnp.float32)
    g2 = 1.0 + 0.1 * jax.random.normal(k5, (n_c,), jnp.float32)
    b2 = 0.1 * jax.random.normal(k6, (n_c,), jnp.float32)
    return dict(w1=w1, w2=w2, g1=g1, b1=b1, g2=g2, b2=b2)


@jax.jit
def residual_block(x_nchw, params):
    """x_nchw: [N, n_c, H, W] f32 -> [N, n_c, H, W] f32 (ResidualBlock.forward)."""
    N, C, H, W = x_nchw.shape
    x = jnp.transpose(x_nchw, (0, 2, 3, 1))                     # NCHW -> NHWC
    count = jnp.float32(N * H * W)

    # Fused [9C, 2C] Conv1 weight (a-half columns first, gate columns second),
    # and the [9C, C] Conv2 weight; MXU inputs are bf16.
    w1 = _conv_w_to_matrix(params["w1"]).astype(COMPUTE_DTYPE)
    w2 = _conv_w_to_matrix(params["w2"]).astype(COMPUTE_DTYPE)

    # Pass 1: Conv1 (bf16 output to HBM) + per-image BN1 partial statistics.
    y1, s1, q1 = _call_conv1(x, w1)
    s1 = jnp.sum(s1, axis=0)                                     # (1, 2C)
    q1 = jnp.sum(q1, axis=0)
    sc1, sh1 = _fold_bn(s1, q1, params["g1"].reshape(1, 2 * C),
                        params["b1"].reshape(1, 2 * C), count)

    # Pass 2: folded BN1 + GLU + Conv2 + per-image BN2 partial statistics
    # (the GLU output stays in VMEM).
    y2, s2, q2 = _call_conv2(y1, sc1, sh1, w2)
    s2 = jnp.sum(s2, axis=0)
    q2 = jnp.sum(q2, axis=0)
    sc2, sh2 = _fold_bn(s2, q2, params["g2"].reshape(1, C),
                        params["b2"].reshape(1, C), count)

    # Pass 3: folded BN2 + residual add, tiled & parallel over flattened rows.
    out_flat = _call_bn_residual(x.reshape(N * H * W, C),
                                 y2.reshape(N * H * W, C), sc2, sh2)
    out = out_flat.reshape(N, H, W, C)
    return jnp.transpose(out, (0, 3, 1, 2))                      # NHWC -> NCHW


# ------------------------------ pure-JAX reference ----------------------------

def _reference(x_nchw, params, conv_dtype=jnp.float32):
    def conv(x_, w):
        return jax.lax.conv_general_dilated(
            x_.astype(conv_dtype), w.astype(conv_dtype),
            window_strides=(1, 1), padding="SAME",
            dimension_numbers=("NCHW", "OIHW", "NCHW"),
            preferred_element_type=jnp.float32)

    def bn(y, g, b):
        m = jnp.mean(y, axis=(0, 2, 3), keepdims=True)
        v = jnp.mean((y - m) ** 2, axis=(0, 2, 3), keepdims=True)
        return (y - m) * jax.lax.rsqrt(v + EPS) * g[None, :, None, None] + \
               b[None, :, None, None]

    n_c = x_nchw.shape[1]
    y = bn(conv(x_nchw, params["w1"]), params["g1"], params["b1"])
    h = y[:, :n_c] * jax.nn.sigmoid(y[:, n_c:])
    y2 = bn(conv(h, params["w2"]), params["g2"], params["b2"])
    return x_nchw + y2


# ----------------------------------- main -------------------------------------

if __name__ == "__main__":
    key = jax.random.PRNGKey(0)
    configs = [
        (2, 4, 16, 16),     # shape from the task spec (tiny channel count)
        (2, 128, 16, 16),   # production-like channels -> lane-dense path
        (2, 8, 32, 32),     # exercises a multi-tile row grid in the final pass
    ]

    for (N, n_c, H, W) in configs:
        key, kx, kp = jax.random.split(key, 3)
        x = jax.random.normal(kx, (N, n_c, H, W), jnp.float32)
        params = init_params(kp, n_c)

        out = jax.block_until_ready(residual_block(x, params))
        assert out.shape == (N, n_c, H, W)
        assert bool(jnp.all(jnp.isfinite(out)))

        # Matched-precision reference (conv inputs in bf16, like the MXU feed).
        ref_bf16 = _reference(x, params, conv_dtype=COMPUTE_DTYPE)
        assert jnp.allclose(out, ref_bf16, rtol=2e-2, atol=2e-2), \
            f"mismatch vs matched-precision reference at {(N, n_c, H, W)}"

        # Loose sanity check against the full-f32 PyTorch-semantics reference.
        ref_f32 = _reference(x, params, conv_dtype=jnp.float32)
        assert jnp.allclose(out, ref_f32, rtol=1e-1, atol=2.5e-1), \
            f"mismatch vs f32 reference at {(N, n_c, H, W)}"

    print("KERNEL_OK")
</pallas_src>

<mosaic_0001>
module attributes {stable_mosaic.version = 11 : i64} {
  func.func @_conv1_kernel(%arg0: i32, %arg1: memref<1x16x16x4xf32, #tpu.memory_space<vmem>>, %arg2: memref<36x8xbf16, #tpu.memory_space<vmem>>, %arg3: memref<1x16x16x8xbf16, #tpu.memory_space<vmem>>, %arg4: memref<1x1x8xf32, #tpu.memory_space<vmem>>, %arg5: memref<1x1x8xf32, #tpu.memory_space<vmem>>, %arg6: memref<18x18x4xf32, #tpu.memory_space<vmem>>, %arg7: memref<256x36xbf16, #tpu.memory_space<vmem>>) attributes {dimension_semantics = [#tpu.dimension_semantics<parallel>], iteration_bounds = array<i64: 2>, scalar_prefetch = 0 : i64, scratch_operands = 2 : i64, tpu.core_type = #tpu.core_type<tc>, window_params = [{transform_indices = @transform_0, window_bounds = array<i64: 1, 16, 16, 4>}, {pipeline_mode = #tpu.pipeline_mode<synchronous>, transform_indices = @transform_1, window_bounds = array<i64: 36, 8>}, {transform_indices = @transform_2, window_bounds = array<i64: 1, 16, 16, 8>}, {transform_indices = @transform_3, window_bounds = array<i64: 1, 1, 8>}, {transform_indices = @transform_4, window_bounds = array<i64: 1, 1, 8>}]} {
    %cst = arith.constant 0.000000e+00 : f32
    %0 = vector.broadcast %cst : f32 to vector<18x18x4xf32>
    %c0 = arith.constant 0 : index
    %c0_0 = arith.constant 0 : index
    %c0_1 = arith.constant 0 : index
    %1 = vector.load %arg6[%c0, %c0_0, %c0_1] : memref<18x18x4xf32, #tpu.memory_space<vmem>>, vector<18x18x4xf32>
    tpu.vector_store %arg6[%c0, %c0_0, %c0_1], %0 {strides = array<i32>} : memref<18x18x4xf32, #tpu.memory_space<vmem>>, vector<18x18x4xf32>,
    %c0_2 = arith.constant 0 : index
    %c0_3 = arith.constant 0 : index
    %c0_4 = arith.constant 0 : index
    %c0_5 = arith.constant 0 : index
    %2 = vector.load %arg1[%c0_2, %c0_3, %c0_4, %c0_5] : memref<1x16x16x4xf32, #tpu.memory_space<vmem>>, vector<1x16x16x4xf32>
    %3 = vector.shape_cast %2 : vector<1x16x16x4xf32> to vector<16x16x4xf32>
    %c1 = arith.constant 1 : index
    %c1_6 = arith.constant 1 : index
    %c0_7 = arith.constant 0 : index
    %4 = vector.load %arg6[%c1, %c1_6, %c0_7] : memref<18x18x4xf32, #tpu.memory_space<vmem>>, vector<16x16x4xf32>
    tpu.vector_store %arg6[%c1, %c1_6, %c0_7], %3 {strides = array<i32>} : memref<18x18x4xf32, #tpu.memory_space<vmem>>, vector<16x16x4xf32>,
    %c0_8 = arith.constant 0 : index
    %c0_9 = arith.constant 0 : index
    %c0_10 = arith.constant 0 : index
    %5 = vector.load %arg6[%c0_8, %c0_9, %c0_10] : memref<18x18x4xf32, #tpu.memory_space<vmem>>, vector<16x16x4xf32>
    %6 = vector.shape_cast %5 : vector<16x16x4xf32> to vector<256x4xf32>
    %7 = arith.truncf %6 : vector<256x4xf32> to vector<256x4xbf16>
    %c0_11 = arith.constant 0 : index
    %c0_12 = arith.constant 0 : index
    %8 = vector.load %arg7[%c0_11, %c0_12] : memref<256x36xbf16, #tpu.memory_space<vmem>>, vector<256x4xbf16>
    tpu.vector_store %arg7[%c0_11, %c0_12], %7 {strides = array<i32>} : memref<256x36xbf16, #tpu.memory_space<vmem>>, vector<256x4xbf16>,
    %c0_13 = arith.constant 0 : index
    %c1_14 = arith.constant 1 : index
    %c0_15 = arith.constant 0 : index
    %9 = vector.load %arg6[%c0_13, %c1_14, %c0_15] : memref<18x18x4xf32, #tpu.memory_space<vmem>>, vector<16x16x4xf32>
    %10 = vector.shape_cast %9 : vector<16x16x4xf32> to vector<256x4xf32>
    %11 = arith.truncf %10 : vector<256x4xf32> to vector<256x4xbf16>
    %c0_16 = arith.constant 0 : index
    %c4 = arith.constant 4 : index
    %12 = vector.load %arg7[%c0_16, %c4] : memref<256x36xbf16, #tpu.memory_space<vmem>>, vector<256x4xbf16>
    tpu.vector_store %arg7[%c0_16, %c4], %11 {strides = array<i32>} : memref<256x36xbf16, #tpu.memory_space<vmem>>, vector<256x4xbf16>,
    %c0_17 = arith.constant 0 : index
    %c2 = arith.constant 2 : index
    %c0_18 = arith.constant 0 : index
    %13 = vector.load %arg6[%c0_17, %c2, %c0_18] : memref<18x18x4xf32, #tpu.memory_space<vmem>>, vector<16x16x4xf32>
    %14 = vector.shape_cast %13 : vector<16x16x4xf32> to vector<256x4xf32>
    %15 = arith.truncf %14 : vector<256x4xf32> to vector<256x4xbf16>
    %c0_19 = arith.constant 0 : index
    %c8 = arith.constant 8 : index
    %16 = vector.load %arg7[%c0_19, %c8] : memref<256x36xbf16, #tpu.memory_space<vmem>>, vector<256x4xbf16>
    tpu.vector_store %arg7[%c0_19, %c8], %15 {strides = array<i32>} : memref<256x36xbf16, #tpu.memory_space<vmem>>, vector<256x4xbf16>,
    %c1_20 = arith.constant 1 : index
    %c0_21 = arith.constant 0 : index
    %c0_22 = arith.constant 0 : index
    %17 = vector.load %arg6[%c1_20, %c0_21, %c0_22] : memref<18x18x4xf32, #tpu.memory_space<vmem>>, vector<16x16x4xf32>
    %18 = vector.shape_cast %17 : vector<16x16x4xf32> to vector<256x4xf32>
    %19 = arith.truncf %18 : vector<256x4xf32> to vector<256x4xbf16>
    %c0_23 = arith.constant 0 : index
    %c12 = arith.constant 12 : index
    %20 = vector.load %arg7[%c0_23, %c12] : memref<256x36xbf16, #tpu.memory_space<vmem>>, vector<256x4xbf16>
    tpu.vector_store %arg7[%c0_23, %c12], %19 {strides = array<i32>} : memref<256x36xbf16, #tpu.memory_space<vmem>>, vector<256x4xbf16>,
    %c1_24 = arith.constant 1 : index
    %c1_25 = arith.constant 1 : index
    %c0_26 = arith.constant 0 : index
    %21 = vector.load %arg6[%c1_24, %c1_25, %c0_26] : memref<18x18x4xf32, #tpu.memory_space<vmem>>, vector<16x16x4xf32>
    %22 = vector.shape_cast %21 : vector<16x16x4xf32> to vector<256x4xf32>
    %23 = arith.truncf %22 : vector<256x4xf32> to vector<256x4xbf16>
    %c0_27 = arith.constant 0 : index
    %c16 = arith.constant 16 : index
    %24 = vector.load %arg7[%c0_27, %c16] : memref<256x36xbf16, #tpu.memory_space<vmem>>, vector<256x4xbf16>
    tpu.vector_store %arg7[%c0_27, %c16], %23 {strides = array<i32>} : memref<256x36xbf16, #tpu.memory_space<vmem>>, vector<256x4xbf16>,
    %c1_28 = arith.constant 1 : index
    %c2_29 = arith.constant 2 : index
    %c0_30 = arith.constant 0 : index
    %25 = vector.load %arg6[%c1_28, %c2_29, %c0_30] : memref<18x18x4xf32, #tpu.memory_space<vmem>>, vector<16x16x4xf32>
    %26 = vector.shape_cast %25 : vector<16x16x4xf32> to vector<256x4xf32>
    %27 = arith.truncf %26 : vector<256x4xf32> to vector<256x4xbf16>
    %c0_31 = arith.constant 0 : index
    %c20 = arith.constant 20 : index
    %28 = vector.load %arg7[%c0_31, %c20] : memref<256x36xbf16, #tpu.memory_space<vmem>>, vector<256x4xbf16>
    tpu.vector_store %arg7[%c0_31, %c20], %27 {strides = array<i32>} : memref<256x36xbf16, #tpu.memory_space<vmem>>, vector<256x4xbf16>,
    %c2_32 = arith.constant 2 : index
    %c0_33 = arith.constant 0 : index
    %c0_34 = arith.constant 0 : index
    %29 = vector.load %arg6[%c2_32, %c0_33, %c0_34] : memref<18x18x4xf32, #tpu.memory_space<vmem>>, vector<16x16x4xf32>
    %30 = vector.shape_cast %29 : vector<16x16x4xf32> to vector<256x4xf32>
    %31 = arith.truncf %30 : vector<256x4xf32> to vector<256x4xbf16>
    %c0_35 = arith.constant 0 : index
    %c24 = arith.constant 24 : index
    %32 = vector.load %arg7[%c0_35, %c24] : memref<256x36xbf16, #tpu.memory_space<vmem>>, vector<256x4xbf16>
    tpu.vector_store %arg7[%c0_35, %c24], %31 {strides = array<i32>} : memref<256x36xbf16, #tpu.memory_space<vmem>>, vector<256x4xbf16>,
    %c2_36 = arith.constant 2 : index
    %c1_37 = arith.constant 1 : index
    %c0_38 = arith.constant 0 : index
    %33 = vector.load %arg6[%c2_36, %c1_37, %c0_38] : memref<18x18x4xf32, #tpu.memory_space<vmem>>, vector<16x16x4xf32>
    %34 = vector.shape_cast %33 : vector<16x16x4xf32> to vector<256x4xf32>
    %35 = arith.truncf %34 : vector<256x4xf32> to vector<256x4xbf16>
    %c0_39 = arith.constant 0 : index
    %c28 = arith.constant 28 : index
    %36 = vector.load %arg7[%c0_39, %c28] : memref<256x36xbf16, #tpu.memory_space<vmem>>, vector<256x4xbf16>
    tpu.vector_store %arg7[%c0_39, %c28], %35 {strides = array<i32>} : memref<256x36xbf16, #tpu.memory_space<vmem>>, vector<256x4xbf16>,
    %c2_40 = arith.constant 2 : index
    %c2_41 = arith.constant 2 : index
    %c0_42 = arith.constant 0 : index
    %37 = vector.load %arg6[%c2_40, %c2_41, %c0_42] : memref<18x18x4xf32, #tpu.memory_space<vmem>>, vector<16x16x4xf32>
    %38 = vector.shape_cast %37 : vector<16x16x4xf32> to vector<256x4xf32>
    %39 = arith.truncf %38 : vector<256x4xf32> to vector<256x4xbf16>
    %c0_43 = arith.constant 0 : index
    %c32 = arith.constant 32 : index
    %40 = vector.load %arg7[%c0_43, %c32] : memref<256x36xbf16, #tpu.memory_space<vmem>>, vector<256x4xbf16>
    tpu.vector_store %arg7[%c0_43, %c32], %39 {strides = array<i32>} : memref<256x36xbf16, #tpu.memory_space<vmem>>, vector<256x4xbf16>,
    %c0_44 = arith.constant 0 : index
    %c0_45 = arith.constant 0 : index
    %41 = vector.load %arg7[%c0_44, %c0_45] : memref<256x36xbf16, #tpu.memory_space<vmem>>, vector<256x36xbf16>
    %c0_46 = arith.constant 0 : index
    %c0_47 = arith.constant 0 : index
    %42 = vector.load %arg2[%c0_46, %c0_47] : memref<36x8xbf16, #tpu.memory_space<vmem>>, vector<36x8xbf16>
    %cst_48 = arith.constant dense<0.000000e+00> : vector<256x8xf32>
    %43 = tpu.matmul %41, %42, %cst_48 {dimension_numbers = #tpu.dot_dimension_numbers<[1], [0], [0], [1], [0, 0, 1, 1], [], []>} : vector<256x36xbf16>, vector<36x8xbf16>, vector<256x8xf32> -> vector<256x8xf32>
    %44 = vector.shape_cast %43 : vector<256x8xf32> to vector<16x16x8xf32>
    %45 = arith.truncf %44 : vector<16x16x8xf32> to vector<16x16x8xbf16>
    %c0_49 = arith.constant 0 : index
    %c0_50 = arith.constant 0 : index
    %c0_51 = arith.constant 0 : index
    %c0_52 = arith.constant 0 : index
    %46 = vector.load %arg3[%c0_49, %c0_50, %c0_51, %c0_52] : memref<1x16x16x8xbf16, #tpu.memory_space<vmem>>, vector<1x16x16x8xbf16>
    %47 = vector.shape_cast %46 : vector<1x16x16x8xbf16> to vector<16x16x8xbf16>
    %48 = vector.shape_cast %45 : vector<16x16x8xbf16> to vector<1x16x16x8xbf16>
    tpu.vector_store %arg3[%c0_49, %c0_50, %c0_51, %c0_52], %48 {strides = array<i32>} : memref<1x16x16x8xbf16, #tpu.memory_space<vmem>>, vector<1x16x16x8xbf16>,
    %cst_53 = arith.constant dense<0.000000e+00> : vector<8xf32>
    %49 = vector.multi_reduction <add>, %43, %cst_53 [0] : vector<256x8xf32> to vector<8xf32>
    %50 = vector.shape_cast %49 : vector<8xf32> to vector<1x8xf32>
    %c0_54 = arith.constant 0 : index
    %c0_55 = arith.constant 0 : index
    %c0_56 = arith.constant 0 : index
    %51 = vector.load %arg4[%c0_54, %c0_55, %c0_56] : memref<1x1x8xf32, #tpu.memory_space<vmem>>, vector<1x1x8xf32>
    %52 = vector.shape_cast %51 : vector<1x1x8xf32> to vector<1x8xf32>
    %53 = vector.shape_cast %50 : vector<1x8xf32> to vector<1x1x8xf32>
    tpu.vector_store %arg4[%c0_54, %c0_55, %c0_56], %53 {strides = array<i32>} : memref<1x1x8xf32, #tpu.memory_space<vmem>>, vector<1x1x8xf32>,
    %54 = arith.mulf %43, %43 : vector<256x8xf32>
    %cst_57 = arith.constant dense<0.000000e+00> : vector<8xf32>
    %55 = vector.multi_reduction <add>, %54, %cst_57 [0] : vector<256x8xf32> to vector<8xf32>
    %56 = vector.shape_cast %55 : vector<8xf32> to vector<1x8xf32>
    %c0_58 = arith.constant 0 : index
    %c0_59 = arith.constant 0 : index
    %c0_60 = arith.constant 0 : index
    %57 = vector.load %arg5[%c0_58, %c0_59, %c0_60] : memref<1x1x8xf32, #tpu.memory_space<vmem>>, vector<1x1x8xf32>
    %58 = vector.shape_cast %57 : vector<1x1x8xf32> to vector<1x8xf32>
    %59 = vector.shape_cast %56 : vector<1x8xf32> to vector<1x1x8xf32>
    tpu.vector_store %arg5[%c0_58, %c0_59, %c0_60], %59 {strides = array<i32>} : memref<1x1x8xf32, #tpu.memory_space<vmem>>, vector<1x1x8xf32>,
    return
  }
  func.func @transform_0(%arg0: i32) -> (i32, i32, i32, i32) {
    %c0_i32 = arith.constant 0 : i32
    %c0_i32_0 = arith.constant 0 : i32
    %c0_i32_1 = arith.constant 0 : i32
    %c0_i32_2 = arith.constant 0 : i32
    return %arg0, %c0_i32, %c0_i32_0, %c0_i32_1 : i32, i32, i32, i32
  }
  func.func @transform_1(%arg0: i32) -> (i32, i32) {
    %c0_i32 = arith.constant 0 : i32
    %c0_i32_0 = arith.constant 0 : i32
    %c0_i32_1 = arith.constant 0 : i32
    return %c0_i32, %c0_i32_0 : i32, i32
  }
  func.func @transform_2(%arg0: i32) -> (i32, i32, i32, i32) {
    %c0_i32 = arith.constant 0 : i32
    %c0_i32_0 = arith.constant 0 : i32
    %c0_i32_1 = arith.constant 0 : i32
    %c0_i32_2 = arith.constant 0 : i32
    return %arg0, %c0_i32, %c0_i32_0, %c0_i32_1 : i32, i32, i32, i32
  }
  func.func @transform_3(%arg0: i32) -> (i32, i32, i32) {
    %c0_i32 = arith.constant 0 : i32
    %c0_i32_0 = arith.constant 0 : i32
    %c0_i32_1 = arith.constant 0 : i32
    return %arg0, %c0_i32, %c0_i32_0 : i32, i32, i32
  }
  func.func @transform_4(%arg0: i32) -> (i32, i32, i32) {
    %c0_i32 = arith.constant 0 : i32
    %c0_i32_0 = arith.constant 0 : i32
    %c0_i32_1 = arith.constant 0 : i32
    return %arg0, %c0_i32, %c0_i32_0 : i32, i32, i32
  }
}

module attributes {stable_mosaic.version = 11 : i64} {
  func.func @_glu_conv2_kernel(%arg0: i32, %arg1: memref<1x16x16x8xbf16, #tpu.memory_space<vmem>>, %arg2: memref<1x8xf32, #tpu.memory_space<vmem>>, %arg3: memref<1x8xf32, #tpu.memory_space<vmem>>, %arg4: memref<36x4xbf16, #tpu.memory_space<vmem>>, %arg5: memref<1x16x16x4xf32, #tpu.memory_space<vmem>>, %arg6: memref<1x1x4xf32, #tpu.memory_space<vmem>>, %arg7: memref<1x1x4xf32, #tpu.memory_space<vmem>>, %arg8: memref<18x18x4xf32, #tpu.memory_space<vmem>>, %arg9: memref<256x36xbf16, #tpu.memory_space<vmem>>) attributes {dimension_semantics = [#tpu.dimension_semantics<parallel>], iteration_bounds = array<i64: 2>, scalar_prefetch = 0 : i64, scratch_operands = 2 : i64, tpu.core_type = #tpu.core_type<tc>, window_params = [{transform_indices = @transform_0, window_bounds = array<i64: 1, 16, 16, 8>}, {pipeline_mode = #tpu.pipeline_mode<synchronous>, transform_indices = @transform_1, window_bounds = array<i64: 1, 8>}, {pipeline_mode = #tpu.pipeline_mode<synchronous>, transform_indices = @transform_2, window_bounds = array<i64: 1, 8>}, {pipeline_mode = #tpu.pipeline_mode<synchronous>, transform_indices = @transform_3, window_bounds = array<i64: 36, 4>}, {transform_indices = @transform_4, window_bounds = array<i64: 1, 16, 16, 4>}, {transform_indices = @transform_5, window_bounds = array<i64: 1, 1, 4>}, {transform_indices = @transform_6, window_bounds = array<i64: 1, 1, 4>}]} {
    %c0 = arith.constant 0 : index
    %c0_0 = arith.constant 0 : index
    %c0_1 = arith.constant 0 : index
    %c0_2 = arith.constant 0 : index
    %0 = vector.load %arg1[%c0, %c0_0, %c0_1, %c0_2] : memref<1x16x16x8xbf16, #tpu.memory_space<vmem>>, vector<1x16x16x8xbf16>
    %1 = vector.shape_cast %0 : vector<1x16x16x8xbf16> to vector<16x16x8xbf16>
    %2 = arith.extf %1 : vector<16x16x8xbf16> to vector<16x16x8xf32>
    %c0_3 = arith.constant 0 : index
    %c0_4 = arith.constant 0 : index
    %3 = vector.load %arg2[%c0_3, %c0_4] : memref<1x8xf32, #tpu.memory_space<vmem>>, vector<1x8xf32>
    %4 = vector.shape_cast %3 : vector<1x8xf32> to vector<1x1x8xf32>
    %5 = vector.broadcast %4 : vector<1x1x8xf32> to vector<16x16x8xf32>
    %6 = arith.mulf %2, %5 : vector<16x16x8xf32>
    %c0_5 = arith.constant 0 : index
    %c0_6 = arith.constant 0 : index
    %7 = vector.load %arg3[%c0_5, %c0_6] : memref<1x8xf32, #tpu.memory_space<vmem>>, vector<1x8xf32>
    %8 = vector.shape_cast %7 : vector<1x8xf32> to vector<1x1x8xf32>
    %9 = vector.broadcast %8 : vector<1x1x8xf32> to vector<16x16x8xf32>
    %10 = arith.addf %6, %9 : vector<16x16x8xf32>
    %11 = vector.extract_strided_slice %10 {offsets = [0, 0, 0], sizes = [16, 16, 4], strides = [1, 1, 1]} : vector<16x16x8xf32> to vector<16x16x4xf32>
    %12 = vector.extract_strided_slice %10 {offsets = [0, 0, 4], sizes = [16, 16, 4], strides = [1, 1, 1]} : vector<16x16x8xf32> to vector<16x16x4xf32>
    %13 = arith.negf %12 : vector<16x16x4xf32>
    %14 = math.exp %13 : vector<16x16x4xf32>
    %cst = arith.constant 1.000000e+00 : f32
    %15 = vector.broadcast %cst : f32 to vector<16x16x4xf32>
    %16 = arith.addf %15, %14 : vector<16x16x4xf32>
    %17 = arith.divf %15, %16 : vector<16x16x4xf32>
    %18 = arith.mulf %11, %17 : vector<16x16x4xf32>
    %cst_7 = arith.constant 0.000000e+00 : f32
    %19 = vector.broadcast %cst_7 : f32 to vector<18x18x4xf32>
    %c0_8 = arith.constant 0 : index
    %c0_9 = arith.constant 0 : index
    %c0_10 = arith.constant 0 : index
    %20 = vector.load %arg8[%c0_8, %c0_9, %c0_10] : memref<18x18x4xf32, #tpu.memory_space<vmem>>, vector<18x18x4xf32>
    tpu.vector_store %arg8[%c0_8, %c0_9, %c0_10], %19 {strides = array<i32>} : memref<18x18x4xf32, #tpu.memory_space<vmem>>, vector<18x18x4xf32>,
    %c1 = arith.constant 1 : index
    %c1_11 = arith.constant 1 : index
    %c0_12 = arith.constant 0 : index
    %21 = vector.load %arg8[%c1, %c1_11, %c0_12] : memref<18x18x4xf32, #tpu.memory_space<vmem>>, vector<16x16x4xf32>
    tpu.vector_store %arg8[%c1, %c1_11, %c0_12], %18 {strides = array<i32>} : memref<18x18x4xf32, #tpu.memory_space<vmem>>, vector<16x16x4xf32>,
    %c0_13 = arith.constant 0 : index
    %c0_14 = arith.constant 0 : index
    %c0_15 = arith.constant 0 : index
    %22 = vector.load %arg8[%c0_13, %c0_14, %c0_15] : memref<18x18x4xf32, #tpu.memory_space<vmem>>, vector<16x16x4xf32>
    %23 = vector.shape_cast %22 : vector<16x16x4xf32> to vector<256x4xf32>
    %24 = arith.truncf %23 : vector<256x4xf32> to vector<256x4xbf16>
    %c0_16 = arith.constant 0 : index
    %c0_17 = arith.constant 0 : index
    %25 = vector.load %arg9[%c0_16, %c0_17] : memref<256x36xbf16, #tpu.memory_space<vmem>>, vector<256x4xbf16>
    tpu.vector_store %arg9[%c0_16, %c0_17], %24 {strides = array<i32>} : memref<256x36xbf16, #tpu.memory_space<vmem>>, vector<256x4xbf16>,
    %c0_18 = arith.constant 0 : index
    %c1_19 = arith.constant 1 : index
    %c0_20 = arith.constant 0 : index
    %26 = vector.load %arg8[%c0_18, %c1_19, %c0_20] : memref<18x18x4xf32, #tpu.memory_space<vmem>>, vector<16x16x4xf32>
    %27 = vector.shape_cast %26 : vector<16x16x4xf32> to vector<256x4xf32>
    %28 = arith.truncf %27 : vector<256x4xf32> to vector<256x4xbf16>
    %c0_21 = arith.constant 0 : index
    %c4 = arith.constant 4 : index
    %29 = vector.load %arg9[%c0_21, %c4] : memref<256x36xbf16, #tpu.memory_space<vmem>>, vector<256x4xbf16>
    tpu.vector_store %arg9[%c0_21, %c4], %28 {strides = array<i32>} : memref<256x36xbf16, #tpu.memory_space<vmem>>, vector<256x4xbf16>,
    %c0_22 = arith.constant 0 : index
    %c2 = arith.constant 2 : index
    %c0_23 = arith.constant 0 : index
    %30 = vector.load %arg8[%c0_22, %c2, %c0_23] : memref<18x18x4xf32, #tpu.memory_space<vmem>>, vector<16x16x4xf32>
    %31 = vector.shape_cast %30 : vector<16x16x4xf32> to vector<256x4xf32>
    %32 = arith.truncf %31 : vector<256x4xf32> to vector<256x4xbf16>
    %c0_24 = arith.constant 0 : index
    %c8 = arith.constant 8 : index
    %33 = vector.load %arg9[%c0_24, %c8] : memref<256x36xbf16, #tpu.memory_space<vmem>>, vector<256x4xbf16>
    tpu.vector_store %arg9[%c0_24, %c8], %32 {strides = array<i32>} : memref<256x36xbf16, #tpu.memory_space<vmem>>, vector<256x4xbf16>,
    %c1_25 = arith.constant 1 : index
    %c0_26 = arith.constant 0 : index
    %c0_27 = arith.constant 0 : index
    %34 = vector.load %arg8[%c1_25, %c0_26, %c0_27] : memref<18x18x4xf32, #tpu.memory_space<vmem>>, vector<16x16x4xf32>
    %35 = vector.shape_cast %34 : vector<16x16x4xf32> to vector<256x4xf32>
    %36 = arith.truncf %35 : vector<256x4xf32> to vector<256x4xbf16>
    %c0_28 = arith.constant 0 : index
    %c12 = arith.constant 12 : index
    %37 = vector.load %arg9[%c0_28, %c12] : memref<256x36xbf16, #tpu.memory_space<vmem>>, vector<256x4xbf16>
    tpu.vector_store %arg9[%c0_28, %c12], %36 {strides = array<i32>} : memref<256x36xbf16, #tpu.memory_space<vmem>>, vector<256x4xbf16>,
    %c1_29 = arith.constant 1 : index
    %c1_30 = arith.constant 1 : index
    %c0_31 = arith.constant 0 : index
    %38 = vector.load %arg8[%c1_29, %c1_30, %c0_31] : memref<18x18x4xf32, #tpu.memory_space<vmem>>, vector<16x16x4xf32>
    %39 = vector.shape_cast %38 : vector<16x16x4xf32> to vector<256x4xf32>
    %40 = arith.truncf %39 : vector<256x4xf32> to vector<256x4xbf16>
    %c0_32 = arith.constant 0 : index
    %c16 = arith.constant 16 : index
    %41 = vector.load %arg9[%c0_32, %c16] : memref<256x36xbf16, #tpu.memory_space<vmem>>, vector<256x4xbf16>
    tpu.vector_store %arg9[%c0_32, %c16], %40 {strides = array<i32>} : memref<256x36xbf16, #tpu.memory_space<vmem>>, vector<256x4xbf16>,
    %c1_33 = arith.constant 1 : index
    %c2_34 = arith.constant 2 : index
    %c0_35 = arith.constant 0 : index
    %42 = vector.load %arg8[%c1_33, %c2_34, %c0_35] : memref<18x18x4xf32, #tpu.memory_space<vmem>>, vector<16x16x4xf32>
    %43 = vector.shape_cast %42 : vector<16x16x4xf32> to vector<256x4xf32>
    %44 = arith.truncf %43 : vector<256x4xf32> to vector<256x4xbf16>
    %c0_36 = arith.constant 0 : index
    %c20 = arith.constant 20 : index
    %45 = vector.load %arg9[%c0_36, %c20] : memref<256x36xbf16, #tpu.memory_space<vmem>>, vector<256x4xbf16>
    tpu.vector_store %arg9[%c0_36, %c20], %44 {strides = array<i32>} : memref<256x36xbf16, #tpu.memory_space<vmem>>, vector<256x4xbf16>,
    %c2_37 = arith.constant 2 : index
    %c0_38 = arith.constant 0 : index
    %c0_39 = arith.constant 0 : index
    %46 = vector.load %arg8[%c2_37, %c0_38, %c0_39] : memref<18x18x4xf32, #tpu.memory_space<vmem>>, vector<16x16x4xf32>
    %47 = vector.shape_cast %46 : vector<16x16x4xf32> to vector<256x4xf32>
    %48 = arith.truncf %47 : vector<256x4xf32> to vector<256x4xbf16>
    %c0_40 = arith.constant 0 : index
    %c24 = arith.constant 24 : index
    %49 = vector.load %arg9[%c0_40, %c24] : memref<256x36xbf16, #tpu.memory_space<vmem>>, vector<256x4xbf16>
    tpu.vector_store %arg9[%c0_40, %c24], %48 {strides = array<i32>} : memref<256x36xbf16, #tpu.memory_space<vmem>>, vector<256x4xbf16>,
    %c2_41 = arith.constant 2 : index
    %c1_42 = arith.constant 1 : index
    %c0_43 = arith.constant 0 : index
    %50 = vector.load %arg8[%c2_41, %c1_42, %c0_43] : memref<18x18x4xf32, #tpu.memory_space<vmem>>, vector<16x16x4xf32>
    %51 = vector.shape_cast %50 : vector<16x16x4xf32> to vector<256x4xf32>
    %52 = arith.truncf %51 : vector<256x4xf32> to vector<256x4xbf16>
    %c0_44 = arith.constant 0 : index
    %c28 = arith.constant 28 : index
    %53 = vector.load %arg9[%c0_44, %c28] : memref<256x36xbf16, #tpu.memory_space<vmem>>, vector<256x4xbf16>
    tpu.vector_store %arg9[%c0_44, %c28], %52 {strides = array<i32>} : memref<256x36xbf16, #tpu.memory_space<vmem>>, vector<256x4xbf16>,
    %c2_45 = arith.constant 2 : index
    %c2_46 = arith.constant 2 : index
    %c0_47 = arith.constant 0 : index
    %54 = vector.load %arg8[%c2_45, %c2_46, %c0_47] : memref<18x18x4xf32, #tpu.memory_space<vmem>>, vector<16x16x4xf32>
    %55 = vector.shape_cast %54 : vector<16x16x4xf32> to vector<256x4xf32>
    %56 = arith.truncf %55 : vector<256x4xf32> to vector<256x4xbf16>
    %c0_48 = arith.constant 0 : index
    %c32 = arith.constant 32 : index
    %57 = vector.load %arg9[%c0_48, %c32] : memref<256x36xbf16, #tpu.memory_space<vmem>>, vector<256x4xbf16>
    tpu.vector_store %arg9[%c0_48, %c32], %56 {strides = array<i32>} : memref<256x36xbf16, #tpu.memory_space<vmem>>, vector<256x4xbf16>,
    %c0_49 = arith.constant 0 : index
    %c0_50 = arith.constant 0 : index
    %58 = vector.load %arg9[%c0_49, %c0_50] : memref<256x36xbf16, #tpu.memory_space<vmem>>, vector<256x36xbf16>
    %c0_51 = arith.constant 0 : index
    %c0_52 = arith.constant 0 : index
    %59 = vector.load %arg4[%c0_51, %c0_52] : memref<36x4xbf16, #tpu.memory_space<vmem>>, vector<36x4xbf16>
    %cst_53 = arith.constant dense<0.000000e+00> : vector<256x4xf32>
    %60 = tpu.matmul %58, %59, %cst_53 {dimension_numbers = #tpu.dot_dimension_numbers<[1], [0], [0], [1], [0, 0, 1, 1], [], []>} : vector<256x36xbf16>, vector<36x4xbf16>, vector<256x4xf32> -> vector<256x4xf32>
    %61 = vector.shape_cast %60 : vector<256x4xf32> to vector<16x16x4xf32>
    %c0_54 = arith.constant 0 : index
    %c0_55 = arith.constant 0 : index
    %c0_56 = arith.constant 0 : index
    %c0_57 = arith.constant 0 : index
    %62 = vector.load %arg5[%c0_54, %c0_55, %c0_56, %c0_57] : memref<1x16x16x4xf32, #tpu.memory_space<vmem>>, vector<1x16x16x4xf32>
    %63 = vector.shape_cast %62 : vector<1x16x16x4xf32> to vector<16x16x4xf32>
    %64 = vector.shape_cast %61 : vector<16x16x4xf32> to vector<1x16x16x4xf32>
    tpu.vector_store %arg5[%c0_54, %c0_55, %c0_56, %c0_57], %64 {strides = array<i32>} : memref<1x16x16x4xf32, #tpu.memory_space<vmem>>, vector<1x16x16x4xf32>,
    %cst_58 = arith.constant dense<0.000000e+00> : vector<4xf32>
    %65 = vector.multi_reduction <add>, %60, %cst_58 [0] : vector<256x4xf32> to vector<4xf32>
    %66 = vector.shape_cast %65 : vector<4xf32> to vector<1x4xf32>
    %c0_59 = arith.constant 0 : index
    %c0_60 = arith.constant 0 : index
    %c0_61 = arith.constant 0 : index
    %67 = vector.load %arg6[%c0_59, %c0_60, %c0_61] : memref<1x1x4xf32, #tpu.memory_space<vmem>>, vector<1x1x4xf32>
    %68 = vector.shape_cast %67 : vector<1x1x4xf32> to vector<1x4xf32>
    %69 = vector.shape_cast %66 : vector<1x4xf32> to vector<1x1x4xf32>
    tpu.vector_store %arg6[%c0_59, %c0_60, %c0_61], %69 {strides = array<i32>} : memref<1x1x4xf32, #tpu.memory_space<vmem>>, vector<1x1x4xf32>,
    %70 = arith.mulf %60, %60 : vector<256x4xf32>
    %cst_62 = arith.constant dense<0.000000e+00> : vector<4xf32>
    %71 = vector.multi_reduction <add>, %70, %cst_62 [0] : vector<256x4xf32> to vector<4xf32>
    %72 = vector.shape_cast %71 : vector<4xf32> to vector<1x4xf32>
    %c0_63 = arith.constant 0 : index
    %c0_64 = arith.constant 0 : index
    %c0_65 = arith.constant 0 : index
    %73 = vector.load %arg7[%c0_63, %c0_64, %c0_65] : memref<1x1x4xf32, #tpu.memory_space<vmem>>, vector<1x1x4xf32>
    %74 = vector.shape_cast %73 : vector<1x1x4xf32> to vector<1x4xf32>
    %75 = vector.shape_cast %72 : vector<1x4xf32> to vector<1x1x4xf32>
    tpu.vector_store %arg7[%c0_63, %c0_64, %c0_65], %75 {strides = array<i32>} : memref<1x1x4xf32, #tpu.memory_space<vmem>>, vector<1x1x4xf32>,
    return
  }
  func.func @transform_0(%arg0: i32) -> (i32, i32, i32, i32) {
    %c0_i32 = arith.constant 0 : i32
    %c0_i32_0 = arith.constant 0 : i32
    %c0_i32_1 = arith.constant 0 : i32
    %c0_i32_2 = arith.constant 0 : i32
    return %arg0, %c0_i32, %c0_i32_0, %c0_i32_1 : i32, i32, i32, i32
  }
  func.func @transform_1(%arg0: i32) -> (i32, i32) {
    %c0_i32 = arith.constant 0 : i32
    %c0_i32_0 = arith.constant 0 : i32
    %c0_i32_1 = arith.constant 0 : i32
    return %c0_i32, %c0_i32_0 : i32, i32
  }
  func.func @transform_2(%arg0: i32) -> (i32, i32) {
    %c0_i32 = arith.constant 0 : i32
    %c0_i32_0 = arith.constant 0 : i32
    %c0_i32_1 = arith.constant 0 : i32
    return %c0_i32, %c0_i32_0 : i32, i32
  }
  func.func @transform_3(%arg0: i32) -> (i32, i32) {
    %c0_i32 = arith.constant 0 : i32
    %c0_i32_0 = arith.constant 0 : i32
    %c0_i32_1 = arith.constant 0 : i32
    return %c0_i32, %c0_i32_0 : i32, i32
  }
  func.func @transform_4(%arg0: i32) -> (i32, i32, i32, i32) {
    %c0_i32 = arith.constant 0 : i32
    %c0_i32_0 = arith.constant 0 : i32
    %c0_i32_1 = arith.constant 0 : i32
    %c0_i32_2 = arith.constant 0 : i32
    return %arg0, %c0_i32, %c0_i32_0, %c0_i32_1 : i32, i32, i32, i32
  }
  func.func @transform_5(%arg0: i32) -> (i32, i32, i32) {
    %c0_i32 = arith.constant 0 : i32
    %c0_i32_0 = arith.constant 0 : i32
    %c0_i32_1 = arith.constant 0 : i32
    return %arg0, %c0_i32, %c0_i32_0 : i32, i32, i32
  }
  func.func @transform_6(%arg0: i32) -> (i32, i32, i32) {
    %c0_i32 = arith.constant 0 : i32
    %c0_i32_0 = arith.constant 0 : i32
    %c0_i32_1 = arith.constant 0 : i32
    return %arg0, %c0_i32, %c0_i32_0 : i32, i32, i32
  }
}

module attributes {stable_mosaic.version = 11 : i64} {
  func.func @_bn_residual_kernel(%arg0: i32, %arg1: memref<512x4xf32, #tpu.memory_space<vmem>>, %arg2: memref<512x4xf32, #tpu.memory_space<vmem>>, %arg3: memref<1x4xf32, #tpu.memory_space<vmem>>, %arg4: memref<1x4xf32, #tpu.memory_space<vmem>>, %arg5: memref<512x4xf32, #tpu.memory_space<vmem>>) attributes {dimension_semantics = [#tpu.dimension_semantics<parallel>], iteration_bounds = array<i64: 1>, scalar_prefetch = 0 : i64, scratch_operands = 0 : i64, tpu.core_type = #tpu.core_type<tc>, window_params = [{transform_indices = @transform_0, window_bounds = array<i64: 512, 4>}, {transform_indices = @transform_1, window_bounds = array<i64: 512, 4>}, {pipeline_mode = #tpu.pipeline_mode<synchronous>, transform_indices = @transform_2, window_bounds = array<i64: 1, 4>}, {pipeline_mode = #tpu.pipeline_mode<synchronous>, transform_indices = @transform_3, window_bounds = array<i64: 1, 4>}, {transform_indices = @transform_4, window_bounds = array<i64: 512, 4>}]} {
    %c0 = arith.constant 0 : index
    %c0_0 = arith.constant 0 : index
    %0 = vector.load %arg1[%c0, %c0_0] : memref<512x4xf32, #tpu.memory_space<vmem>>, vector<512x4xf32>
    %c0_1 = arith.constant 0 : index
    %c0_2 = arith.constant 0 : index
    %1 = vector.load %arg2[%c0_1, %c0_2] : memref<512x4xf32, #tpu.memory_space<vmem>>, vector<512x4xf32>
    %c0_3 = arith.constant 0 : index
    %c0_4 = arith.constant 0 : index
    %2 = vector.load %arg3[%c0_3, %c0_4] : memref<1x4xf32, #tpu.memory_space<vmem>>, vector<1x4xf32>
    %3 = vector.broadcast %2 : vector<1x4xf32> to vector<512x4xf32>
    %4 = arith.mulf %1, %3 : vector<512x4xf32>
    %c0_5 = arith.constant 0 : index
    %c0_6 = arith.constant 0 : index
    %5 = vector.load %arg4[%c0_5, %c0_6] : memref<1x4xf32, #tpu.memory_space<vmem>>, vector<1x4xf32>
    %6 = vector.broadcast %5 : vector<1x4xf32> to vector<512x4xf32>
    %7 = arith.addf %4, %6 : vector<512x4xf32>
    %8 = arith.addf %0, %7 : vector<512x4xf32>
    %c0_7 = arith.constant 0 : index
    %c0_8 = arith.constant 0 : index
    %9 = vector.load %arg5[%c0_7, %c0_8] : memref<512x4xf32, #tpu.memory_space<vmem>>, vector<512x4xf32>
    tpu.vector_store %arg5[%c0_7, %c0_8], %8 {strides = array<i32>} : memref<512x4xf32, #tpu.memory_space<vmem>>, vector<512x4xf32>,
    return
  }
  func.func @transform_0(%arg0: i32) -> (i32, i32) {
    %c0_i32 = arith.constant 0 : i32
    %c0_i32_0 = arith.constant 0 : i32
    return %arg0, %c0_i32 : i32, i32
  }
  func.func @transform_1(%arg0: i32) -> (i32, i32) {
    %c0_i32 = arith.constant 0 : i32
    %c0_i32_0 = arith.constant 0 : i32
    return %arg0, %c0_i32 : i32, i32
  }
  func.func @transform_2(%arg0: i32) -> (i32, i32) {
    %c0_i32 = arith.constant 0 : i32
    %c0_i32_0 = arith.constant 0 : i32
    %c0_i32_1 = arith.constant 0 : i32
    return %c0_i32, %c0_i32_0 : i32, i32
  }
  func.func @transform_3(%arg0: i32) -> (i32, i32) {
    %c0_i32 = arith.constant 0 : i32
    %c0_i32_0 = arith.constant 0 : i32
    %c0_i32_1 = arith.constant 0 : i32
    return %c0_i32, %c0_i32_0 : i32, i32
  }
  func.func @transform_4(%arg0: i32) -> (i32, i32) {
    %c0_i32 = arith.constant 0 : i32
    %c0_i32_0 = arith.constant 0 : i32
    return %arg0, %c0_i32 : i32, i32
  }
}

</mosaic_0001>

<llo_original>
// kernel: residual_block.5
$region0: #{residual_block.5}
  #allocation0 [shape = 'u32[]', space=smem, size = 0x4, offset = 0x4, fixed_abs, tag = 'smem constant byte address 0x4 - core index']
  #allocation1 [shape = 'u32[144,128]{1,0:T(1,128)}', space=vmem, size = 0x12000, scoped, tag = 'internal scratch']
  %s0 = inlined_call_operand.vmem [shape: f32[512,4], index: 0, kind: input, shape index: {}]
  %s1 = inlined_call_operand.vmem [shape: f32[512,4], index: 1, kind: input, shape index: {}]
  %s2 = inlined_call_operand.vmem [shape: f32[1,4], index: 2, kind: input, shape index: {}]
  %s3 = inlined_call_operand.vmem [shape: f32[1,4], index: 3, kind: input, shape index: {}]
  %s4 = inlined_call_operand.vmem [shape: f32[512,4], index: 4, kind: output, shape index: {}]
  %s5 = sld [smem:[#allocation0]]
  $region26: #{residual_block.5} parent=0
    _
  %s7 = ssub.s32 1, %s5
  %s8 = scalar_select 0, %s7, %s5
  // Predicated region
  $region2: #{residual_block.5} parent=0 // pred_check
    _
  $region3: #{residual_block.5} parent=0 // pred_check_branch
    %10 = sbr.rel (0) target = $region5
  $region4: #{residual_block.5} parent=0 // pred_region
    _
  $region5: #{residual_block.5} parent=0 // pred_fallthru
    _
  // Predicated region
  $region6: #{residual_block.5} parent=0 // pred_check
    _
  $region7: #{residual_block.5} parent=0 // pred_check_branch
    %12 = sbr.rel (0) target = $region9
  $region8: #{residual_block.5} parent=0 // pred_region
    _
  $region9: #{residual_block.5} parent=0 // pred_fallthru
    _
  // Predicated region
  $region10: #{residual_block.5} parent=0 // pred_check
    _
  $region11: #{residual_block.5} parent=0 // pred_check_branch
    %14 = sbr.rel (0) target = $region13
  $region12: #{residual_block.5} parent=0 // pred_region
    _
  $region13: #{residual_block.5} parent=0 // pred_fallthru
    _
  // Predicated region
  $region14: #{residual_block.5} parent=0 // pred_check
    _
  $region15: #{residual_block.5} parent=0 // pred_check_branch
    %16 = sbr.rel (0) target = $region17
  $region16: #{residual_block.5} parent=0 // pred_region
    _
  $region17: #{residual_block.5} parent=0 // pred_fallthru
    _
  %v17 = vld [vmem:[%s0] sm:$0xff]
  %v18 = vld [vmem:[%s0 + $0x8] sm:$0xff]
  %v19 = vld [vmem:[%s0 + $0x10] sm:$0xff]
  %v20 = vld [vmem:[%s0 + $0x18] sm:$0xff]
  %v21 = vld [vmem:[%s0 + $0x20] sm:$0xff]
  %v22 = vld [vmem:[%s0 + $0x28] sm:$0xff]
  %v23 = vld [vmem:[%s0 + $0x30] sm:$0xff]
  %v24 = vld [vmem:[%s0 + $0x38] sm:$0xff]
  %v25 = vld [vmem:[%s0 + $0x40] sm:$0xff]
  %v26 = vld [vmem:[%s0 + $0x48] sm:$0xff]
  %v27 = vld [vmem:[%s0 + $0x50] sm:$0xff]
  %v28 = vld [vmem:[%s0 + $0x58] sm:$0xff]
  %v29 = vld [vmem:[%s0 + $0x60] sm:$0xff]
  %v30 = vld [vmem:[%s0 + $0x68] sm:$0xff]
  %v31 = vld [vmem:[%s0 + $0x70] sm:$0xff]
  %v32 = vld [vmem:[%s0 + $0x78] sm:$0xff]
  %v33 = vld [vmem:[%s0 + $0x80] sm:$0xff]
  %v34 = vld [vmem:[%s0 + $0x88] sm:$0xff]
  %v35 = vld [vmem:[%s0 + $0x90] sm:$0xff]
  %v36 = vld [vmem:[%s0 + $0x98] sm:$0xff]
  %v37 = vld [vmem:[%s0 + $0xa0] sm:$0xff]
  %v38 = vld [vmem:[%s0 + $0xa8] sm:$0xff]
  %v39 = vld [vmem:[%s0 + $0xb0] sm:$0xff]
  %v40 = vld [vmem:[%s0 + $0xb8] sm:$0xff]
  %v41 = vld [vmem:[%s0 + $0xc0] sm:$0xff]
  %v42 = vld [vmem:[%s0 + $0xc8] sm:$0xff]
  %v43 = vld [vmem:[%s0 + $0xd0] sm:$0xff]
  %v44 = vld [vmem:[%s0 + $0xd8] sm:$0xff]
  %v45 = vld [vmem:[%s0 + $0xe0] sm:$0xff]
  %v46 = vld [vmem:[%s0 + $0xe8] sm:$0xff]
  %v47 = vld [vmem:[%s0 + $0xf0] sm:$0xff]
  %v48 = vld [vmem:[%s0 + $0xf8] sm:$0xff]
  %v49 = vld [vmem:[%s0 + $0x100] sm:$0xff]
  %v50 = vld [vmem:[%s0 + $0x108] sm:$0xff]
  %v51 = vld [vmem:[%s0 + $0x110] sm:$0xff]
  %v52 = vld [vmem:[%s0 + $0x118] sm:$0xff]
  %v53 = vld [vmem:[%s0 + $0x120] sm:$0xff]
  %v54 = vld [vmem:[%s0 + $0x128] sm:$0xff]
  %v55 = vld [vmem:[%s0 + $0x130] sm:$0xff]
  %v56 = vld [vmem:[%s0 + $0x138] sm:$0xff]
  %v57 = vld [vmem:[%s0 + $0x140] sm:$0xff]
  %v58 = vld [vmem:[%s0 + $0x148] sm:$0xff]
  %v59 = vld [vmem:[%s0 + $0x150] sm:$0xff]
  %v60 = vld [vmem:[%s0 + $0x158] sm:$0xff]
  %v61 = vld [vmem:[%s0 + $0x160] sm:$0xff]
  %v62 = vld [vmem:[%s0 + $0x168] sm:$0xff]
  %v63 = vld [vmem:[%s0 + $0x170] sm:$0xff]
  %v64 = vld [vmem:[%s0 + $0x178] sm:$0xff]
  %v65 = vld [vmem:[%s0 + $0x180] sm:$0xff]
  %v66 = vld [vmem:[%s0 + $0x188] sm:$0xff]
  %v67 = vld [vmem:[%s0 + $0x190] sm:$0xff]
  %v68 = vld [vmem:[%s0 + $0x198] sm:$0xff]
  %v69 = vld [vmem:[%s0 + $0x1a0] sm:$0xff]
  %v70 = vld [vmem:[%s0 + $0x1a8] sm:$0xff]
  %v71 = vld [vmem:[%s0 + $0x1b0] sm:$0xff]
  %v72 = vld [vmem:[%s0 + $0x1b8] sm:$0xff]
  %v73 = vld [vmem:[%s0 + $0x1c0] sm:$0xff]
  %v74 = vld [vmem:[%s0 + $0x1c8] sm:$0xff]
  %v75 = vld [vmem:[%s0 + $0x1d0] sm:$0xff]
  %v76 = vld [vmem:[%s0 + $0x1d8] sm:$0xff]
  %v77 = vld [vmem:[%s0 + $0x1e0] sm:$0xff]
  %v78 = vld [vmem:[%s0 + $0x1e8] sm:$0xff]
  %v79 = vld [vmem:[%s0 + $0x1f0] sm:$0xff]
  %v80 = vld [vmem:[%s0 + $0x1f8] sm:$0xff]
  %v81 = vld [vmem:[%s1] sm:$0xff]
  %v82 = vld [vmem:[%s1 + $0x8] sm:$0xff]
  %v83 = vld [vmem:[%s1 + $0x10] sm:$0xff]
  %v84 = vld [vmem:[%s1 + $0x18] sm:$0xff]
  %v85 = vld [vmem:[%s1 + $0x20] sm:$0xff]
  %v86 = vld [vmem:[%s1 + $0x28] sm:$0xff]
  %v87 = vld [vmem:[%s1 + $0x30] sm:$0xff]
  %v88 = vld [vmem:[%s1 + $0x38] sm:$0xff]
  %v89 = vld [vmem:[%s1 + $0x40] sm:$0xff]
  %v90 = vld [vmem:[%s1 + $0x48] sm:$0xff]
  %v91 = vld [vmem:[%s1 + $0x50] sm:$0xff]
  %v92 = vld [vmem:[%s1 + $0x58] sm:$0xff]
  %v93 = vld [vmem:[%s1 + $0x60] sm:$0xff]
  %v94 = vld [vmem:[%s1 + $0x68] sm:$0xff]
  %v95 = vld [vmem:[%s1 + $0x70] sm:$0xff]
  %v96 = vld [vmem:[%s1 + $0x78] sm:$0xff]
  %v97 = vld [vmem:[%s1 + $0x80] sm:$0xff]
  %v98 = vld [vmem:[%s1 + $0x88] sm:$0xff]
  %v99 = vld [vmem:[%s1 + $0x90] sm:$0xff]
  %v100 = vld [vmem:[%s1 + $0x98] sm:$0xff]
  %v101 = vld [vmem:[%s1 + $0xa0] sm:$0xff]
  %v102 = vld [vmem:[%s1 + $0xa8] sm:$0xff]
  %v103 = vld [vmem:[%s1 + $0xb0] sm:$0xff]
  %v104 = vld [vmem:[%s1 + $0xb8] sm:$0xff]
  %v105 = vld [vmem:[%s1 + $0xc0] sm:$0xff]
  %v106 = vld [vmem:[%s1 + $0xc8] sm:$0xff]
  %v107 = vld [vmem:[%s1 + $0xd0] sm:$0xff]
  %v108 = vld [vmem:[%s1 + $0xd8] sm:$0xff]
  %v109 = vld [vmem:[%s1 + $0xe0] sm:$0xff]
  %v110 = vld [vmem:[%s1 + $0xe8] sm:$0xff]
  %v111 = vld [vmem:[%s1 + $0xf0] sm:$0xff]
  %v112 = vld [vmem:[%s1 + $0xf8] sm:$0xff]
  %v113 = vld [vmem:[%s1 + $0x100] sm:$0xff]
  %v114 = vld [vmem:[%s1 + $0x108] sm:$0xff]
  %v115 = vld [vmem:[%s1 + $0x110] sm:$0xff]
  %v116 = vld [vmem:[%s1 + $0x118] sm:$0xff]
  %v117 = vld [vmem:[%s1 + $0x120] sm:$0xff]
  %v118 = vld [vmem:[%s1 + $0x128] sm:$0xff]
  %v119 = vld [vmem:[%s1 + $0x130] sm:$0xff]
  %v120 = vld [vmem:[%s1 + $0x138] sm:$0xff]
  %v121 = vld [vmem:[%s1 + $0x140] sm:$0xff]
  %v122 = vld [vmem:[%s1 + $0x148] sm:$0xff]
  %v123 = vld [vmem:[%s1 + $0x150] sm:$0xff]
  %v124 = vld [vmem:[%s1 + $0x158] sm:$0xff]
  %v125 = vld [vmem:[%s1 + $0x160] sm:$0xff]
  %v126 = vld [vmem:[%s1 + $0x168] sm:$0xff]
  %v127 = vld [vmem:[%s1 + $0x170] sm:$0xff]
  %v128 = vld [vmem:[%s1 + $0x178] sm:$0xff]
  %v129 = vld [vmem:[%s1 + $0x180] sm:$0xff]
  %v130 = vld [vmem:[%s1 + $0x188] sm:$0xff]
  %v131 = vld [vmem:[%s1 + $0x190] sm:$0xff]
  %v132 = vld [vmem:[%s1 + $0x198] sm:$0xff]
  %v133 = vld [vmem:[%s1 + $0x1a0] sm:$0xff]
  %v134 = vld [vmem:[%s1 + $0x1a8] sm:$0xff]
  %v135 = vld [vmem:[%s1 + $0x1b0] sm:$0xff]
  %v136 = vld [vmem:[%s1 + $0x1b8] sm:$0xff]
  %v137 = vld [vmem:[%s1 + $0x1c0] sm:$0xff]
  %v138 = vld [vmem:[%s1 + $0x1c8] sm:$0xff]
  %v139 = vld [vmem:[%s1 + $0x1d0] sm:$0xff]
  %v140 = vld [vmem:[%s1 + $0x1d8] sm:$0xff]
  %v141 = vld [vmem:[%s1 + $0x1e0] sm:$0xff]
  %v142 = vld [vmem:[%s1 + $0x1e8] sm:$0xff]
  %v143 = vld [vmem:[%s1 + $0x1f0] sm:$0xff]
  %v144 = vld [vmem:[%s1 + $0x1f8] sm:$0xff]
  %v145 = vld [vmem:[%s2] sm:$0x1]
  %v147 = vlaneseq
  %v148 = vshrl.u32 %v147, 7
  %v149 = vsub.s32 0, %v148
  %v150 = vrot.slane %v145, %v149
  %v152 = vmul.f32 %v81, %v150
  %v153 = vmul.f32 %v82, %v150
  %v154 = vmul.f32 %v83, %v150
  %v155 = vmul.f32 %v84, %v150
  %v156 = vmul.f32 %v85, %v150
  %v157 = vmul.f32 %v86, %v150
  %v158 = vmul.f32 %v87, %v150
  %v159 = vmul.f32 %v88, %v150
  %v160 = vmul.f32 %v89, %v150
  %v161 = vmul.f32 %v90, %v150
  %v162 = vmul.f32 %v91, %v150
  %v163 = vmul.f32 %v92, %v150
  %v164 = vmul.f32 %v93, %v150
  %v165 = vmul.f32 %v94, %v150
  %v166 = vmul.f32 %v95, %v150
  %v167 = vmul.f32 %v96, %v150
  %v168 = vmul.f32 %v97, %v150
  %v169 = vmul.f32 %v98, %v150
  %v170 = vmul.f32 %v99, %v150
  %v171 = vmul.f32 %v100, %v150
  %v172 = vmul.f32 %v101, %v150
  %v173 = vmul.f32 %v102, %v150
  %v174 = vmul.f32 %v103, %v150
  %v175 = vmul.f32 %v104, %v150
  %v176 = vmul.f32 %v105, %v150
  %v177 = vmul.f32 %v106, %v150
  %v178 = vmul.f32 %v107, %v150
  %v179 = vmul.f32 %v108, %v150
  %v180 = vmul.f32 %v109, %v150
  %v181 = vmul.f32 %v110, %v150
  %v182 = vmul.f32 %v111, %v150
  %v183 = vmul.f32 %v112, %v150
  %v184 = vmul.f32 %v113, %v150
  %v185 = vmul.f32 %v114, %v150
  %v186 = vmul.f32 %v115, %v150
  %v187 = vmul.f32 %v116, %v150
  %v188 = vmul.f32 %v117, %v150
  %v189 = vmul.f32 %v118, %v150
  %v190 = vmul.f32 %v119, %v150
  %v191 = vmul.f32 %v120, %v150
  %v192 = vmul.f32 %v121, %v150
  %v193 = vmul.f32 %v122, %v150
  %v194 = vmul.f32 %v123, %v150
  %v195 = vmul.f32 %v124, %v150
  %v196 = vmul.f32 %v125, %v150
  %v197 = vmul.f32 %v126, %v150
  %v198 = vmul.f32 %v127, %v150
  %v199 = vmul.f32 %v128, %v150
  %v200 = vmul.f32 %v129, %v150
  %v201 = vmul.f32 %v130, %v150
  %v202 = vmul.f32 %v131, %v150
  %v203 = vmul.f32 %v132, %v150
  %v204 = vmul.f32 %v133, %v150
  %v205 = vmul.f32 %v134, %v150
  %v206 = vmul.f32 %v135, %v150
  %v207 = vmul.f32 %v136, %v150
  %v208 = vmul.f32 %v137, %v150
  %v209 = vmul.f32 %v138, %v150
  %v210 = vmul.f32 %v139, %v150
  %v211 = vmul.f32 %v140, %v150
  %v212 = vmul.f32 %v141, %v150
  %v213 = vmul.f32 %v142, %v150
  %v214 = vmul.f32 %v143, %v150
  %v215 = vmul.f32 %v144, %v150
  %v216 = vld [vmem:[%s3] sm:$0x1]
  %v218 = vlaneseq
  %v219 = vshrl.u32 %v218, 7
  %v220 = vsub.s32 0, %v219
  %v221 = vrot.slane %v216, %v220
  %v223 = vadd.f32 %v152, %v221
  %v224 = vadd.f32 %v153, %v221
  %v225 = vadd.f32 %v154, %v221
  %v226 = vadd.f32 %v155, %v221
  %v227 = vadd.f32 %v156, %v221
  %v228 = vadd.f32 %v157, %v221
  %v229 = vadd.f32 %v158, %v221
  %v230 = vadd.f32 %v159, %v221
  %v231 = vadd.f32 %v160, %v221
  %v232 = vadd.f32 %v161, %v221
  %v233 = vadd.f32 %v162, %v221
  %v234 = vadd.f32 %v163, %v221
  %v235 = vadd.f32 %v164, %v221
  %v236 = vadd.f32 %v165, %v221
  %v237 = vadd.f32 %v166, %v221
  %v238 = vadd.f32 %v167, %v221
  %v239 = vadd.f32 %v168, %v221
  %v240 = vadd.f32 %v169, %v221
  %v241 = vadd.f32 %v170, %v221
  %v242 = vadd.f32 %v171, %v221
  %v243 = vadd.f32 %v172, %v221
  %v244 = vadd.f32 %v173, %v221
  %v245 = vadd.f32 %v174, %v221
  %v246 = vadd.f32 %v175, %v221
  %v247 = vadd.f32 %v176, %v221
  %v248 = vadd.f32 %v177, %v221
  %v249 = vadd.f32 %v178, %v221
  %v250 = vadd.f32 %v179, %v221
  %v251 = vadd.f32 %v180, %v221
  %v252 = vadd.f32 %v181, %v221
  %v253 = vadd.f32 %v182, %v221
  %v254 = vadd.f32 %v183, %v221
  %v255 = vadd.f32 %v184, %v221
  %v256 = vadd.f32 %v185, %v221
  %v257 = vadd.f32 %v186, %v221
  %v258 = vadd.f32 %v187, %v221
  %v259 = vadd.f32 %v188, %v221
  %v260 = vadd.f32 %v189, %v221
  %v261 = vadd.f32 %v190, %v221
  %v262 = vadd.f32 %v191, %v221
  %v263 = vadd.f32 %v192, %v221
  %v264 = vadd.f32 %v193, %v221
  %v265 = vadd.f32 %v194, %v221
  %v266 = vadd.f32 %v195, %v221
  %v267 = vadd.f32 %v196, %v221
  %v268 = vadd.f32 %v197, %v221
  %v269 = vadd.f32 %v198, %v221
  %v270 = vadd.f32 %v199, %v221
  %v271 = vadd.f32 %v200, %v221
  %v272 = vadd.f32 %v201, %v221
  %v273 = vadd.f32 %v202, %v221
  %v274 = vadd.f32 %v203, %v221
  %v275 = vadd.f32 %v204, %v221
  %v276 = vadd.f32 %v205, %v221
  %v277 = vadd.f32 %v206, %v221
  %v278 = vadd.f32 %v207, %v221
  %v279 = vadd.f32 %v208, %v221
  %v280 = vadd.f32 %v209, %v221
  %v281 = vadd.f32 %v210, %v221
  %v282 = vadd.f32 %v211, %v221
  %v283 = vadd.f32 %v212, %v221
  %v284 = vadd.f32 %v213, %v221
  %v285 = vadd.f32 %v214, %v221
  %v286 = vadd.f32 %v215, %v221
  %v287 = vadd.f32 %v17, %v223
  %v288 = vadd.f32 %v18, %v224
  %v289 = vadd.f32 %v19, %v225
  %v290 = vadd.f32 %v20, %v226
  %v291 = vadd.f32 %v21, %v227
  %v292 = vadd.f32 %v22, %v228
  %v293 = vadd.f32 %v23, %v229
  %v294 = vadd.f32 %v24, %v230
  %v295 = vadd.f32 %v25, %v231
  %v296 = vadd.f32 %v26, %v232
  %v297 = vadd.f32 %v27, %v233
  %v298 = vadd.f32 %v28, %v234
  %v299 = vadd.f32 %v29, %v235
  %v300 = vadd.f32 %v30, %v236
  %v301 = vadd.f32 %v31, %v237
  %v302 = vadd.f32 %v32, %v238
  %v303 = vadd.f32 %v33, %v239
  %v304 = vadd.f32 %v34, %v240
  %v305 = vadd.f32 %v35, %v241
  %v306 = vadd.f32 %v36, %v242
  %v307 = vadd.f32 %v37, %v243
  %v308 = vadd.f32 %v38, %v244
  %v309 = vadd.f32 %v39, %v245
  %v310 = vadd.f32 %v40, %v246
  %v311 = vadd.f32 %v41, %v247
  %v312 = vadd.f32 %v42, %v248
  %v313 = vadd.f32 %v43, %v249
  %v314 = vadd.f32 %v44, %v250
  %v315 = vadd.f32 %v45, %v251
  %v316 = vadd.f32 %v46, %v252
  %v317 = vadd.f32 %v47, %v253
  %v318 = vadd.f32 %v48, %v254
  %v319 = vadd.f32 %v49, %v255
  %v320 = vadd.f32 %v50, %v256
  %v321 = vadd.f32 %v51, %v257
  %v322 = vadd.f32 %v52, %v258
  %v323 = vadd.f32 %v53, %v259
  %v324 = vadd.f32 %v54, %v260
  %v325 = vadd.f32 %v55, %v261
  %v326 = vadd.f32 %v56, %v262
  %v327 = vadd.f32 %v57, %v263
  %v328 = vadd.f32 %v58, %v264
  %v329 = vadd.f32 %v59, %v265
  %v330 = vadd.f32 %v60, %v266
  %v331 = vadd.f32 %v61, %v267
  %v332 = vadd.f32 %v62, %v268
  %v333 = vadd.f32 %v63, %v269
  %v334 = vadd.f32 %v64, %v270
  %v335 = vadd.f32 %v65, %v271
  %v336 = vadd.f32 %v66, %v272
  %v337 = vadd.f32 %v67, %v273
  %v338 = vadd.f32 %v68, %v274
  %v339 = vadd.f32 %v69, %v275
  %v340 = vadd.f32 %v70, %v276
  %v341 = vadd.f32 %v71, %v277
  %v342 = vadd.f32 %v72, %v278
  %v343 = vadd.f32 %v73, %v279
  %v344 = vadd.f32 %v74, %v280
  %v345 = vadd.f32 %v75, %v281
  %v346 = vadd.f32 %v76, %v282
  %v347 = vadd.f32 %v77, %v283
  %v348 = vadd.f32 %v78, %v284
  %v349 = vadd.f32 %v79, %v285
  %v350 = vadd.f32 %v80, %v286
  %vm351 = vcmask 31744
  %352 = vst.msk [vmem:[%s4] sm:$0xff] %vm351, %v287
  %353 = vst.msk [vmem:[%s4 + $0x8] sm:$0xff] %vm351, %v288
  %354 = vst.msk [vmem:[%s4 + $0x10] sm:$0xff] %vm351, %v289
  %355 = vst.msk [vmem:[%s4 + $0x18] sm:$0xff] %vm351, %v290
  %356 = vst.msk [vmem:[%s4 + $0x20] sm:$0xff] %vm351, %v291
  %357 = vst.msk [vmem:[%s4 + $0x28] sm:$0xff] %vm351, %v292
  %358 = vst.msk [vmem:[%s4 + $0x30] sm:$0xff] %vm351, %v293
  %359 = vst.msk [vmem:[%s4 + $0x38] sm:$0xff] %vm351, %v294
  %360 = vst.msk [vmem:[%s4 + $0x40] sm:$0xff] %vm351, %v295
  %361 = vst.msk [vmem:[%s4 + $0x48] sm:$0xff] %vm351, %v296
  %362 = vst.msk [vmem:[%s4 + $0x50] sm:$0xff] %vm351, %v297
  %363 = vst.msk [vmem:[%s4 + $0x58] sm:$0xff] %vm351, %v298
  %364 = vst.msk [vmem:[%s4 + $0x60] sm:$0xff] %vm351, %v299
  %365 = vst.msk [vmem:[%s4 + $0x68] sm:$0xff] %vm351, %v300
  %366 = vst.msk [vmem:[%s4 + $0x70] sm:$0xff] %vm351, %v301
  %367 = vst.msk [vmem:[%s4 + $0x78] sm:$0xff] %vm351, %v302
  %368 = vst.msk [vmem:[%s4 + $0x80] sm:$0xff] %vm351, %v303
  %369 = vst.msk [vmem:[%s4 + $0x88] sm:$0xff] %vm351, %v304
  %370 = vst.msk [vmem:[%s4 + $0x90] sm:$0xff] %vm351, %v305
  %371 = vst.msk [vmem:[%s4 + $0x98] sm:$0xff] %vm351, %v306
  %372 = vst.msk [vmem:[%s4 + $0xa0] sm:$0xff] %vm351, %v307
  %373 = vst.msk [vmem:[%s4 + $0xa8] sm:$0xff] %vm351, %v308
  %374 = vst.msk [vmem:[%s4 + $0xb0] sm:$0xff] %vm351, %v309
  %375 = vst.msk [vmem:[%s4 + $0xb8] sm:$0xff] %vm351, %v310
  %376 = vst.msk [vmem:[%s4 + $0xc0] sm:$0xff] %vm351, %v311
  %377 = vst.msk [vmem:[%s4 + $0xc8] sm:$0xff] %vm351, %v312
  %378 = vst.msk [vmem:[%s4 + $0xd0] sm:$0xff] %vm351, %v313
  %379 = vst.msk [vmem:[%s4 + $0xd8] sm:$0xff] %vm351, %v314
  %380 = vst.msk [vmem:[%s4 + $0xe0] sm:$0xff] %vm351, %v315
  %381 = vst.msk [vmem:[%s4 + $0xe8] sm:$0xff] %vm351, %v316
  %382 = vst.msk [vmem:[%s4 + $0xf0] sm:$0xff] %vm351, %v317
  %383 = vst.msk [vmem:[%s4 + $0xf8] sm:$0xff] %vm351, %v318
  %384 = vst.msk [vmem:[%s4 + $0x100] sm:$0xff] %vm351, %v319
  %385 = vst.msk [vmem:[%s4 + $0x108] sm:$0xff] %vm351, %v320
  %386 = vst.msk [vmem:[%s4 + $0x110] sm:$0xff] %vm351, %v321
  %387 = vst.msk [vmem:[%s4 + $0x118] sm:$0xff] %vm351, %v322
  %388 = vst.msk [vmem:[%s4 + $0x120] sm:$0xff] %vm351, %v323
  %389 = vst.msk [vmem:[%s4 + $0x128] sm:$0xff] %vm351, %v324
  %390 = vst.msk [vmem:[%s4 + $0x130] sm:$0xff] %vm351, %v325
  %391 = vst.msk [vmem:[%s4 + $0x138] sm:$0xff] %vm351, %v326
  %392 = vst.msk [vmem:[%s4 + $0x140] sm:$0xff] %vm351, %v327
  %393 = vst.msk [vmem:[%s4 + $0x148] sm:$0xff] %vm351, %v328
  %394 = vst.msk [vmem:[%s4 + $0x150] sm:$0xff] %vm351, %v329
  %395 = vst.msk [vmem:[%s4 + $0x158] sm:$0xff] %vm351, %v330
  %396 = vst.msk [vmem:[%s4 + $0x160] sm:$0xff] %vm351, %v331
  %397 = vst.msk [vmem:[%s4 + $0x168] sm:$0xff] %vm351, %v332
  %398 = vst.msk [vmem:[%s4 + $0x170] sm:$0xff] %vm351, %v333
  %399 = vst.msk [vmem:[%s4 + $0x178] sm:$0xff] %vm351, %v334
  %400 = vst.msk [vmem:[%s4 + $0x180] sm:$0xff] %vm351, %v335
  %401 = vst.msk [vmem:[%s4 + $0x188] sm:$0xff] %vm351, %v336
  %402 = vst.msk [vmem:[%s4 + $0x190] sm:$0xff] %vm351, %v337
  %403 = vst.msk [vmem:[%s4 + $0x198] sm:$0xff] %vm351, %v338
  %404 = vst.msk [vmem:[%s4 + $0x1a0] sm:$0xff] %vm351, %v339
  %405 = vst.msk [vmem:[%s4 + $0x1a8] sm:$0xff] %vm351, %v340
  %406 = vst.msk [vmem:[%s4 + $0x1b0] sm:$0xff] %vm351, %v341
  %407 = vst.msk [vmem:[%s4 + $0x1b8] sm:$0xff] %vm351, %v342
  %408 = vst.msk [vmem:[%s4 + $0x1c0] sm:$0xff] %vm351, %v343
  %409 = vst.msk [vmem:[%s4 + $0x1c8] sm:$0xff] %vm351, %v344
  %410 = vst.msk [vmem:[%s4 + $0x1d0] sm:$0xff] %vm351, %v345
  %411 = vst.msk [vmem:[%s4 + $0x1d8] sm:$0xff] %vm351, %v346
  %412 = vst.msk [vmem:[%s4 + $0x1e0] sm:$0xff] %vm351, %v347
  %413 = vst.msk [vmem:[%s4 + $0x1e8] sm:$0xff] %vm351, %v348
  %414 = vst.msk [vmem:[%s4 + $0x1f0] sm:$0xff] %vm351, %v349
  %415 = vst.msk [vmem:[%s4 + $0x1f8] sm:$0xff] %vm351, %v350
  // Predicated region
  $region18: #{residual_block.5} parent=0 // pred_check
    _
  $region19: #{residual_block.5} parent=0 // pred_check_branch
    %417 = sbr.rel (0) target = $region21
  $region20: #{residual_block.5} parent=0 // pred_region
    _
  $region21: #{residual_block.5} parent=0 // pred_fallthru
    _
  // Predicated region
  $region22: #{residual_block.5} parent=0 // pred_check
    _
  $region23: #{residual_block.5} parent=0 // pred_check_branch
    %419 = sbr.rel (0) target = $region25
  $region24: #{residual_block.5} parent=0 // pred_region
    _
  $region25: #{residual_block.5} parent=0 // pred_fallthru
    _

// kernel: residual_block.3
$region0: #{residual_block.3}
  #allocation0 [shape = 'u32[]', space=smem, size = 0x4, offset = 0x4, fixed_abs, tag = 'smem constant byte address 0x4 - core index']
  #allocation1 [shape = 'u32[144,128]{1,0:T(1,128)}', space=vmem, size = 0x12000, scoped, tag = 'internal scratch']
  #allocation2 [shape = 'f32[18,18,4]{2,1,0:T(8,128)}', space=vmem, size = 0x36000, scoped, tag = 'scratch operand']
  #allocation3 [shape = 'bf16[256,36]{1,0:T(16,128)(2,1)}', space=vmem, size = 0x10000, scoped, tag = 'scratch operand']
  %s0 = inlined_call_operand.vmem [shape: f32[2,16,16,4], index: 0, kind: input, shape index: {}]
  %s1 = inlined_call_operand.vmem [shape: bf16[36,8], index: 1, kind: input, shape index: {}]
  %s2 = inlined_call_operand.vmem [shape: bf16[2,16,16,8], index: 2, kind: output, shape index: {0}]
  %s3 = inlined_call_operand.vmem [shape: f32[2,1,8], index: 3, kind: output, shape index: {1}]
  %s4 = inlined_call_operand.vmem [shape: f32[2,1,8], index: 4, kind: output, shape index: {2}]
  %5 = xla_tuple %s2, %s3, %s4
  %s6 = sld [smem:[#allocation0]]
  $region57: #{residual_block.3} parent=0
    _
  %s8 = ssub.s32 1, %s6
  %s9 = scalar_select 0, %s8, %s6
  loop: start=0, step=1, limit=4
  $region2: #{residual_block.3} parent=0 // loop_pre_header
    _
  $region3: #{residual_block.3} parent=0 // loop_header
    %s11 = sphi 0, %s15
    %p12 = scmp.ge.s32.totalorder %s11, 4
    %s21 = sphi 0, %s23
    %s24 = sphi 0, %s21
    %s25 = sphi 0, %s24
    %s41 = sphi 0, %s25
    %s45 = sphi 0, %s45
    %s47 = sphi 0, %s45
    %s48 = sphi 0, %s47
    %s62 = sphi 0, %s48
    %s68 = sphi 0, %s70
    %s71 = sphi 0, %s68
    %s72 = sphi 0, %s71
    %s88 = sphi 0, %s72
    %s94 = sphi 0, %s96
    %s97 = sphi 0, %s94
    %s98 = sphi 0, %s97
    %s114 = sphi 0, %s98
    %s120 = sphi 0, %s122
    %s123 = sphi 0, %s120
    %s124 = sphi 0, %s123
    %s140 = sphi 0, %s124
  $region4: #{residual_block.3} parent=0 // loop_header_branch
    %14 = sbr.rel (%p12) target = $region8
  $region5: #{residual_block.3} parent=0 // loop_body
    %s16 = ssub.s32 %s11, 1
    %s17 = ssub.s32 %s11, 2
    %s18 = sadd.s32 %s11, 1
    %s19 = ssub.s32 %s11, %s18
    %p20 = scmp.eq.s32.totalorder %s19, 0
    %s22 = sadd.s32 %s21, 1
    %s23 = scalar_select %p20, %s21, %s22
    %p26 = pneg %p20
    %p27 = scmp.eq.s32.totalorder %s11, 1
    %p28 = por %p26, %p27
    %p29 = scmp.ne.s32.totalorder %s21, %s24
    %p30 = scmp.eq.s32.totalorder %s11, 0
    %p31 = por %p29, %p30
    %p32 = scmp.ne.s32.totalorder %s21, %s24
    %p33 = scmp.eq.s32.totalorder %s16, 1
    %p34 = por %p32, %p33
    %p35 = scmp.ne.s32.totalorder %s24, %s25
    %p36 = scmp.eq.s32.totalorder %s16, 0
    %p37 = por %p35, %p36
    %p38 = scmp.ne.s32.totalorder %s24, %s25
    %p39 = scmp.eq.s32.totalorder %s17, 1
    %p40 = por %p38, %p39
    %p42 = scmp.ne.s32.totalorder %s25, %s41
    %p43 = scmp.eq.s32.totalorder %s17, 0
    %p44 = por %p42, %p43
    %s46 = sadd.s32 %s45, 1
    %p49 = scmp.eq.s32.totalorder %s11, 1
    %p50 = scmp.ne.s32.totalorder %s45, %s47
    %p51 = scmp.eq.s32.totalorder %s11, 0
    %p52 = por %p50, %p51
    %p53 = scmp.ne.s32.totalorder %s45, %s47
    %p54 = scmp.eq.s32.totalorder %s16, 1
    %p55 = por %p53, %p54
    %p56 = scmp.ne.s32.totalorder %s47, %s48
    %p57 = scmp.eq.s32.totalorder %s16, 0
    %p58 = por %p56, %p57
    %p59 = scmp.ne.s32.totalorder %s47, %s48
    %p60 = scmp.eq.s32.totalorder %s17, 1
    %p61 = por %p59, %p60
    %p63 = scmp.ne.s32.totalorder %s48, %s62
    %p64 = scmp.eq.s32.totalorder %s17, 0
    %p65 = por %p63, %p64
    %s66 = ssub.s32 %s11, %s18
    %p67 = scmp.eq.s32.totalorder %s66, 0
    %s69 = sadd.s32 %s68, 1
    %s70 = scalar_select %p67, %s68, %s69
    %p73 = pneg %p67
    %p74 = scmp.eq.s32.totalorder %s11, 1
    %p75 = por %p73, %p74
    %p76 = scmp.ne.s32.totalorder %s68, %s71
    %p77 = scmp.eq.s32.totalorder %s11, 0
    %p78 = por %p76, %p77
    %p79 = scmp.ne.s32.totalorder %s68, %s71
    %p80 = scmp.eq.s32.totalorder %s16, 1
    %p81 = por %p79, %p80
    %p82 = scmp.ne.s32.totalorder %s71, %s72
    %p83 = scmp.eq.s32.totalorder %s16, 0
    %p84 = por %p82, %p83
    %p85 = scmp.ne.s32.totalorder %s71, %s72
    %p86 = scmp.eq.s32.totalorder %s17, 1
    %p87 = por %p85, %p86
    %p89 = scmp.ne.s32.totalorder %s72, %s88
    %p90 = scmp.eq.s32.totalorder %s17, 0
    %p91 = por %p89, %p90
    %s92 = ssub.s32 %s11, %s18
    %p93 = scmp.eq.s32.totalorder %s92, 0
    %s95 = sadd.s32 %s94, 1
    %s96 = scalar_select %p93, %s94, %s95
    %p99 = pneg %p93
    %p100 = scmp.eq.s32.totalorder %s11, 1
    %p101 = por %p99, %p100
    %p102 = scmp.ne.s32.totalorder %s94, %s97
    %p103 = scmp.eq.s32.totalorder %s11, 0
    %p104 = por %p102, %p103
    %p105 = scmp.ne.s32.totalorder %s94, %s97
    %p106 = scmp.eq.s32.totalorder %s16, 1
    %p107 = por %p105, %p106
    %p108 = scmp.ne.s32.totalorder %s97, %s98
    %p109 = scmp.eq.s32.totalorder %s16, 0
    %p110 = por %p108, %p109
    %p111 = scmp.ne.s32.totalorder %s97, %s98
    %p112 = scmp.eq.s32.totalorder %s17, 1
    %p113 = por %p111, %p112
    %p115 = scmp.ne.s32.totalorder %s98, %s114
    %p116 = scmp.eq.s32.totalorder %s17, 0
    %p117 = por %p115, %p116
    %s118 = ssub.s32 %s11, %s18
    %p119 = scmp.eq.s32.totalorder %s118, 0
    %s121 = sadd.s32 %s120, 1
    %s122 = scalar_select %p119, %s120, %s121
    %p125 = pneg %p119
    %p126 = scmp.eq.s32.totalorder %s11, 1
    %p127 = por %p125, %p126
    %p128 = scmp.ne.s32.totalorder %s120, %s123
    %p129 = scmp.eq.s32.totalorder %s11, 0
    %p130 = por %p128, %p129
    %p131 = scmp.ne.s32.totalorder %s120, %s123
    %p132 = scmp.eq.s32.totalorder %s16, 1
    %p133 = por %p131, %p132
    %p134 = scmp.ne.s32.totalorder %s123, %s124
    %p135 = scmp.eq.s32.totalorder %s16, 0
    %p136 = por %p134, %p135
    %p137 = scmp.ne.s32.totalorder %s123, %s124
    %p138 = scmp.eq.s32.totalorder %s17, 1
    %p139 = por %p137, %p138
    %p141 = scmp.ne.s32.totalorder %s124, %s140
    %p142 = scmp.eq.s32.totalorder %s17, 0
    %p143 = por %p141, %p142
    %p144 = scmp.le.s32.totalorder 1, %s11
    %p145 = scmp.lt.s32.totalorder %s11, 3
    %p146 = pnand %p144, %p145
    %p147 = pneg %p146
    // Predicated region
    $region9: #{residual_block.3} parent=5 // pred_check
      _
    $region10: #{residual_block.3} parent=5 // pred_check_branch
      %149 = sbr.rel (%p146) target = $region12
    $region11: #{residual_block.3} parent=5 // pred_region
      %s150 = ssub.s32 %s11, 1
      // Predicated region
      $region13: #{residual_block.3} parent=11 // pred_check
        %p151 = pneg %p58
      $region14: #{residual_block.3} parent=11 // pred_check_branch
        %153 = sbr.rel (%p151) target = $region16
      $region15: #{residual_block.3} parent=11 // pred_region
        _
      $region16: #{residual_block.3} parent=11 // pred_fallthru
        _
    $region12: #{residual_block.3} parent=5 // pred_fallthru
      _
    %p154 = scmp.lt.s32.totalorder %s11, 2
    // Predicated region
    $region17: #{residual_block.3} parent=5 // pred_check
      %p155 = pneg %p154
    $region18: #{residual_block.3} parent=5 // pred_check_branch
      %157 = sbr.rel (%p155) target = $region20
    $region19: #{residual_block.3} parent=5 // pred_region
      // Predicated region
      $region21: #{residual_block.3} parent=19 // pred_check
        %p158 = pneg %p31
      $region22: #{residual_block.3} parent=19 // pred_check_branch
        %160 = sbr.rel (%p158) target = $region24
      $region23: #{residual_block.3} parent=19 // pred_region
        %p161 = scmp.lt.s32.totalorder %s11, 1
        %s162 = scalar_select %p161, %s11, 1
        %s163 = smul.addr %s162, 32
        %s164 = smul.addr %s163, 8
        %s165 = scalar_lea.vmem %s0, %s164
      $region24: #{residual_block.3} parent=19 // pred_fallthru
        _
    $region20: #{residual_block.3} parent=5 // pred_fallthru
      _
    %p166 = scmp.le.s32.totalorder 1, %s11
    %p167 = scmp.lt.s32.totalorder %s11, 3
    %p168 = pnand %p166, %p167
    %p169 = pneg %p168
    // Predicated region
    $region25: #{residual_block.3} parent=5 // pred_check
      _
    $region26: #{residual_block.3} parent=5 // pred_check_branch
      %171 = sbr.rel (%p168) target = $region28
    $region27: #{residual_block.3} parent=5 // pred_region
      %s172 = ssub.s32 %s11, 1
      %p173 = scmp.lt.s32.totalorder %s16, 1
      %s174 = scalar_select %p173, %s16, 1
      %s175 = smul.addr %s174, 32
      %s176 = smul.addr %s175, 8
      %s177 = scalar_lea.vmem %s0, %s176
      %p178 = pneg %p37
      %p179 = pneg %p34
      %p180 = pneg %p58
      %p181 = pneg %p55
      %p182 = pneg %p84
      %p183 = pneg %p81
      %p184 = scmp.lt.s32.totalorder %s16, 1
      %s185 = scalar_select %p184, %s16, 1
      %s186 = smul.addr %s185, 32
      %s187 = smul.addr %s186, 4
      %s188 = scalar_lea.vmem %s2, %s187
      %p189 = pneg %p110
      %p190 = pneg %p107
      %p191 = scmp.lt.s32.totalorder %s16, 1
      %s192 = scalar_select %p191, %s16, 1
      %s193 = scalar_lea.vmem %s3, %s192
      %p194 = pneg %p136
      %p195 = pneg %p133
      %p196 = scmp.lt.s32.totalorder %s16, 1
      %s197 = scalar_select %p196, %s16, 1
      %s198 = scalar_lea.vmem %s4, %s197
      %p199 = scmp.lt.s32.totalorder %s16, 1
      %s200 = scalar_select %p199, %s16, 1
      %s201 = smul.addr %s200, 32
      %s202 = smul.addr %s201, 8
      %s203 = scalar_lea.vmem %s0, %s202
      %p204 = scmp.lt.s32.totalorder %s16, 1
      %s205 = scalar_select %p204, %s16, 1
      %s206 = smul.addr %s205, 32
      %s207 = smul.addr %s206, 4
      %s208 = scalar_lea.vmem %s2, %s207
      %p209 = scmp.lt.s32.totalorder %s16, 1
      %s210 = scalar_select %p209, %s16, 1
      %s211 = scalar_lea.vmem %s3, %s210
      %p212 = scmp.lt.s32.totalorder %s16, 1
      %s213 = scalar_select %p212, %s16, 1
      %s214 = scalar_lea.vmem %s4, %s213
      %vm216 = vcmask 31744
      %217 = vst.msk [vmem:[#allocation2] sm:$0xff] %vm216, 0.0
      %218 = vst.msk [vmem:[#allocation2 + $0x8] sm:$0xff] %vm216, 0.0
      %vm219 = vcmask 25600
      %220 = vst.msk [vmem:[#allocation2 + $0x10] sm:$0x3] %vm219, 0.0
      %221 = vst.msk [vmem:[#allocation2 + $0x18] sm:$0xff] %vm216, 0.0
      %222 = vst.msk [vmem:[#allocation2 + $0x20] sm:$0xff] %vm216, 0.0
      %223 = vst.msk [vmem:[#allocation2 + $0x28] sm:$0x3] %vm219, 0.0
      %224 = vst.msk [vmem:[#allocation2 + $0x30] sm:$0xff] %vm216, 0.0
      %225 = vst.msk [vmem:[#allocation2 + $0x38] sm:$0xff] %vm216, 0.0
      %226 = vst.msk [vmem:[#allocation2 + $0x40] sm:$0x3] %vm219, 0.0
      %227 = vst.msk [vmem:[#allocation2 + $0x48] sm:$0xff] %vm216, 0.0
      %228 = vst.msk [vmem:[#allocation2 + $0x50] sm:$0xff] %vm216, 0.0
      %229 = vst.msk [vmem:[#allocation2 + $0x58] sm:$0x3] %vm219, 0.0
      %230 = vst.msk [vmem:[#allocation2 + $0x60] sm:$0xff] %vm216, 0.0
      %231 = vst.msk [vmem:[#allocation2 + $0x68] sm:$0xff] %vm216, 0.0
      %232 = vst.msk [vmem:[#allocation2 + $0x70] sm:$0x3] %vm219, 0.0
      %233 = vst.msk [vmem:[#allocation2 + $0x78] sm:$0xff] %vm216, 0.0
      %234 = vst.msk [vmem:[#allocation2 + $0x80] sm:$0xff] %vm216, 0.0
      %235 = vst.msk [vmem:[#allocation2 + $0x88] sm:$0x3] %vm219, 0.0
      %236 = vst.msk [vmem:[#allocation2 + $0x90] sm:$0xff] %vm216, 0.0
      %237 = vst.msk [vmem:[#allocation2 + $0x98] sm:$0xff] %vm216, 0.0
      %238 = vst.msk [vmem:[#allocation2 + $0xa0] sm:$0x3] %vm219, 0.0
      %239 = vst.msk [vmem:[#allocation2 + $0xa8] sm:$0xff] %vm216, 0.0
      %240 = vst.msk [vmem:[#allocation2 + $0xb0] sm:$0xff] %vm216, 0.0
      %241 = vst.msk [vmem:[#allocation2 + $0xb8] sm:$0x3] %vm219, 0.0
      %242 = vst.msk [vmem:[#allocation2 + $0xc0] sm:$0xff] %vm216, 0.0
      %243 = vst.msk [vmem:[#allocation2 + $0xc8] sm:$0xff] %vm216, 0.0
      %244 = vst.msk [vmem:[#allocation2 + $0xd0] sm:$0x3] %vm219, 0.0
      %245 = vst.msk [vmem:[#allocation2 + $0xd8] sm:$0xff] %vm216, 0.0
      %246 = vst.msk [vmem:[#allocation2 + $0xe0] sm:$0xff] %vm216, 0.0
      %247 = vst.msk [vmem:[#allocation2 + $0xe8] sm:$0x3] %vm219, 0.0
      %248 = vst.msk [vmem:[#allocation2 + $0xf0] sm:$0xff] %vm216, 0.0
      %249 = vst.msk [vmem:[#allocation2 + $0xf8] sm:$0xff] %vm216, 0.0
      %250 = vst.msk [vmem:[#allocation2 + $0x100] sm:$0x3] %vm219, 0.0
      %251 = vst.msk [vmem:[#allocation2 + $0x108] sm:$0xff] %vm216, 0.0
      %252 = vst.msk [vmem:[#allocation2 + $0x110] sm:$0xff] %vm216, 0.0
      %253 = vst.msk [vmem:[#allocation2 + $0x118] sm:$0x3] %vm219, 0.0
      %254 = vst.msk [vmem:[#allocation2 + $0x120] sm:$0xff] %vm216, 0.0
      %255 = vst.msk [vmem:[#allocation2 + $0x128] sm:$0xff] %vm216, 0.0
      %256 = vst.msk [vmem:[#allocation2 + $0x130] sm:$0x3] %vm219, 0.0
      %257 = vst.msk [vmem:[#allocation2 + $0x138] sm:$0xff] %vm216, 0.0
      %258 = vst.msk [vmem:[#allocation2 + $0x140] sm:$0xff] %vm216, 0.0
      %259 = vst.msk [vmem:[#allocation2 + $0x148] sm:$0x3] %vm219, 0.0
      %260 = vst.msk [vmem:[#allocation2 + $0x150] sm:$0xff] %vm216, 0.0
      %261 = vst.msk [vmem:[#allocation2 + $0x158] sm:$0xff] %vm216, 0.0
      %262 = vst.msk [vmem:[#allocation2 + $0x160] sm:$0x3] %vm219, 0.0
      %263 = vst.msk [vmem:[#allocation2 + $0x168] sm:$0xff] %vm216, 0.0
      %264 = vst.msk [vmem:[#allocation2 + $0x170] sm:$0xff] %vm216, 0.0
      %265 = vst.msk [vmem:[#allocation2 + $0x178] sm:$0x3] %vm219, 0.0
      %266 = vst.msk [vmem:[#allocation2 + $0x180] sm:$0xff] %vm216, 0.0
      %267 = vst.msk [vmem:[#allocation2 + $0x188] sm:$0xff] %vm216, 0.0
      %268 = vst.msk [vmem:[#allocation2 + $0x190] sm:$0x3] %vm219, 0.0
      %269 = vst.msk [vmem:[#allocation2 + $0x198] sm:$0xff] %vm216, 0.0
      %270 = vst.msk [vmem:[#allocation2 + $0x1a0] sm:$0xff] %vm216, 0.0
      %271 = vst.msk [vmem:[#allocation2 + $0x1a8] sm:$0x3] %vm219, 0.0
      %v272 = vld [vmem:[%s203] sm:$0xff]
      %v273 = vld [vmem:[%s203 + $0x8] sm:$0xff]
      %v274 = vld [vmem:[%s203 + $0x10] sm:$0xff]
      %v275 = vld [vmem:[%s203 + $0x18] sm:$0xff]
      %v276 = vld [vmem:[%s203 + $0x20] sm:$0xff]
      %v277 = vld [vmem:[%s203 + $0x28] sm:$0xff]
      %v278 = vld [vmem:[%s203 + $0x30] sm:$0xff]
      %v279 = vld [vmem:[%s203 + $0x38] sm:$0xff]
      %v280 = vld [vmem:[%s203 + $0x40] sm:$0xff]
      %v281 = vld [vmem:[%s203 + $0x48] sm:$0xff]
      %v282 = vld [vmem:[%s203 + $0x50] sm:$0xff]
      %v283 = vld [vmem:[%s203 + $0x58] sm:$0xff]
      %v284 = vld [vmem:[%s203 + $0x60] sm:$0xff]
      %v285 = vld [vmem:[%s203 + $0x68] sm:$0xff]
      %v286 = vld [vmem:[%s203 + $0x70] sm:$0xff]
      %v287 = vld [vmem:[%s203 + $0x78] sm:$0xff]
      %v288 = vld [vmem:[%s203 + $0x80] sm:$0xff]
      %v289 = vld [vmem:[%s203 + $0x88] sm:$0xff]
      %v290 = vld [vmem:[%s203 + $0x90] sm:$0xff]
      %v291 = vld [vmem:[%s203 + $0x98] sm:$0xff]
      %v292 = vld [vmem:[%s203 + $0xa0] sm:$0xff]
      %v293 = vld [vmem:[%s203 + $0xa8] sm:$0xff]
      %v294 = vld [vmem:[%s203 + $0xb0] sm:$0xff]
      %v295 = vld [vmem:[%s203 + $0xb8] sm:$0xff]
      %v296 = vld [vmem:[%s203 + $0xc0] sm:$0xff]
      %v297 = vld [vmem:[%s203 + $0xc8] sm:$0xff]
      %v298 = vld [vmem:[%s203 + $0xd0] sm:$0xff]
      %v299 = vld [vmem:[%s203 + $0xd8] sm:$0xff]
      %v300 = vld [vmem:[%s203 + $0xe0] sm:$0xff]
      %v301 = vld [vmem:[%s203 + $0xe8] sm:$0xff]
      %v302 = vld [vmem:[%s203 + $0xf0] sm:$0xff]
      %v303 = vld [vmem:[%s203 + $0xf8] sm:$0xff]
      %s304 = scalar_lea.vmem [#allocation2], 24
      %305 = vst.msk [vmem:[%s304 + $0x1] sm:$0xff] %vm216, %v272
      %306 = vst.msk [vmem:[%s304 + $0x9] sm:$0xff] %vm216, %v273
      %307 = vst.msk [vmem:[%s304 + $0x19] sm:$0xff] %vm216, %v274
      %308 = vst.msk [vmem:[%s304 + $0x21] sm:$0xff] %vm216, %v275
      %309 = vst.msk [vmem:[%s304 + $0x31] sm:$0xff] %vm216, %v276
      %310 = vst.msk [vmem:[%s304 + $0x39] sm:$0xff] %vm216, %v277
      %311 = vst.msk [vmem:[%s304 + $0x49] sm:$0xff] %vm216, %v278
      %312 = vst.msk [vmem:[%s304 + $0x51] sm:$0xff] %vm216, %v279
      %313 = vst.msk [vmem:[%s304 + $0x61] sm:$0xff] %vm216, %v280
      %314 = vst.msk [vmem:[%s304 + $0x69] sm:$0xff] %vm216, %v281
      %315 = vst.msk [vmem:[%s304 + $0x79] sm:$0xff] %vm216, %v282
      %316 = vst.msk [vmem:[%s304 + $0x81] sm:$0xff] %vm216, %v283
      %317 = vst.msk [vmem:[%s304 + $0x91] sm:$0xff] %vm216, %v284
      %318 = vst.msk [vmem:[%s304 + $0x99] sm:$0xff] %vm216, %v285
      %319 = vst.msk [vmem:[%s304 + $0xa9] sm:$0xff] %vm216, %v286
      %320 = vst.msk [vmem:[%s304 + $0xb1] sm:$0xff] %vm216, %v287
      %321 = vst.msk [vmem:[%s304 + $0xc1] sm:$0xff] %vm216, %v288
      %322 = vst.msk [vmem:[%s304 + $0xc9] sm:$0xff] %vm216, %v289
      %323 = vst.msk [vmem:[%s304 + $0xd9] sm:$0xff] %vm216, %v290
      %324 = vst.msk [vmem:[%s304 + $0xe1] sm:$0xff] %vm216, %v291
      %325 = vst.msk [vmem:[%s304 + $0xf1] sm:$0xff] %vm216, %v292
      %326 = vst.msk [vmem:[%s304 + $0xf9] sm:$0xff] %vm216, %v293
      %327 = vst.msk [vmem:[%s304 + $0x109] sm:$0xff] %vm216, %v294
      %328 = vst.msk [vmem:[%s304 + $0x111] sm:$0xff] %vm216, %v295
      %329 = vst.msk [vmem:[%s304 + $0x121] sm:$0xff] %vm216, %v296
      %330 = vst.msk [vmem:[%s304 + $0x129] sm:$0xff] %vm216, %v297
      %331 = vst.msk [vmem:[%s304 + $0x139] sm:$0xff] %vm216, %v298
      %332 = vst.msk [vmem:[%s304 + $0x141] sm:$0xff] %vm216, %v299
      %333 = vst.msk [vmem:[%s304 + $0x151] sm:$0xff] %vm216, %v300
      %334 = vst.msk [vmem:[%s304 + $0x159] sm:$0xff] %vm216, %v301
      %335 = vst.msk [vmem:[%s304 + $0x169] sm:$0xff] %vm216, %v302
      %336 = vst.msk [vmem:[%s304 + $0x171] sm:$0xff] %vm216, %v303
      %v337 = vld [vmem:[#allocation2] sm:$0xff]
      %v338 = vld [vmem:[#allocation2 + $0x8] sm:$0xff]
      %v339 = vld [vmem:[#allocation2 + $0x18] sm:$0xff]
      %v340 = vld [vmem:[#allocation2 + $0x20] sm:$0xff]
      %v341 = vld [vmem:[#allocation2 + $0x30] sm:$0xff]
      %v342 = vld [vmem:[#allocation2 + $0x38] sm:$0xff]
      %v343 = vld [vmem:[#allocation2 + $0x48] sm:$0xff]
      %v344 = vld [vmem:[#allocation2 + $0x50] sm:$0xff]
      %v345 = vld [vmem:[#allocation2 + $0x60] sm:$0xff]
      %v346 = vld [vmem:[#allocation2 + $0x68] sm:$0xff]
      %v347 = vld [vmem:[#allocation2 + $0x78] sm:$0xff]
      %v348 = vld [vmem:[#allocation2 + $0x80] sm:$0xff]
      %v349 = vld [vmem:[#allocation2 + $0x90] sm:$0xff]
      %v350 = vld [vmem:[#allocation2 + $0x98] sm:$0xff]
      %v351 = vld [vmem:[#allocation2 + $0xa8] sm:$0xff]
      %v352 = vld [vmem:[#allocation2 + $0xb0] sm:$0xff]
      %v353 = vld [vmem:[#allocation2 + $0xc0] sm:$0xff]
      %v354 = vld [vmem:[#allocation2 + $0xc8] sm:$0xff]
      %v355 = vld [vmem:[#allocation2 + $0xd8] sm:$0xff]
      %v356 = vld [vmem:[#allocation2 + $0xe0] sm:$0xff]
      %v357 = vld [vmem:[#allocation2 + $0xf0] sm:$0xff]
      %v358 = vld [vmem:[#allocation2 + $0xf8] sm:$0xff]
      %v359 = vld [vmem:[#allocation2 + $0x108] sm:$0xff]
      %v360 = vld [vmem:[#allocation2 + $0x110] sm:$0xff]
      %v361 = vld [vmem:[#allocation2 + $0x120] sm:$0xff]
      %v362 = vld [vmem:[#allocation2 + $0x128] sm:$0xff]
      %v363 = vld [vmem:[#allocation2 + $0x138] sm:$0xff]
      %v364 = vld [vmem:[#allocation2 + $0x140] sm:$0xff]
      %v365 = vld [vmem:[#allocation2 + $0x150] sm:$0xff]
      %v366 = vld [vmem:[#allocation2 + $0x158] sm:$0xff]
      %v367 = vld [vmem:[#allocation2 + $0x168] sm:$0xff]
      %v368 = vld [vmem:[#allocation2 + $0x170] sm:$0xff]
      %v369 = vpack.c.bf16 %v338, %v337
      %v370 = vpack.c.bf16 %v340, %v339
      %v371 = vpack.c.bf16 %v342, %v341
      %v372 = vpack.c.bf16 %v344, %v343
      %v373 = vpack.c.bf16 %v346, %v345
      %v374 = vpack.c.bf16 %v348, %v347
      %v375 = vpack.c.bf16 %v350, %v349
      %v376 = vpack.c.bf16 %v352, %v351
      %v377 = vpack.c.bf16 %v354, %v353
      %v378 = vpack.c.bf16 %v356, %v355
      %v379 = vpack.c.bf16 %v358, %v357
      %v380 = vpack.c.bf16 %v360, %v359
      %v381 = vpack.c.bf16 %v362, %v361
      %v382 = vpack.c.bf16 %v364, %v363
      %v383 = vpack.c.bf16 %v366, %v365
      %v384 = vpack.c.bf16 %v368, %v367
      %385 = vst.msk [vmem:[#allocation3] sm:$0xff] %vm216, %v369
      %386 = vst.msk [vmem:[#allocation3 + $0x8] sm:$0xff] %vm216, %v370
      %387 = vst.msk [vmem:[#allocation3 + $0x10] sm:$0xff] %vm216, %v371
      %388 = vst.msk [vmem:[#allocation3 + $0x18] sm:$0xff] %vm216, %v372
      %389 = vst.msk [vmem:[#allocation3 + $0x20] sm:$0xff] %vm216, %v373
      %390 = vst.msk [vmem:[#allocation3 + $0x28] sm:$0xff] %vm216, %v374
      %391 = vst.msk [vmem:[#allocation3 + $0x30] sm:$0xff] %vm216, %v375
      %392 = vst.msk [vmem:[#allocation3 + $0x38] sm:$0xff] %vm216, %v376
      %393 = vst.msk [vmem:[#allocation3 + $0x40] sm:$0xff] %vm216, %v377
      %394 = vst.msk [vmem:[#allocation3 + $0x48] sm:$0xff] %vm216, %v378
      %395 = vst.msk [vmem:[#allocation3 + $0x50] sm:$0xff] %vm216, %v379
      %396 = vst.msk [vmem:[#allocation3 + $0x58] sm:$0xff] %vm216, %v380
      %397 = vst.msk [vmem:[#allocation3 + $0x60] sm:$0xff] %vm216, %v381
      %398 = vst.msk [vmem:[#allocation3 + $0x68] sm:$0xff] %vm216, %v382
      %399 = vst.msk [vmem:[#allocation3 + $0x70] sm:$0xff] %vm216, %v383
      %400 = vst.msk [vmem:[#allocation3 + $0x78] sm:$0xff] %vm216, %v384
      %v401 = vld [vmem:[#allocation2 + $0x1] sm:$0xff]
      %v402 = vld [vmem:[#allocation2 + $0x9] sm:$0xff]
      %v403 = vld [vmem:[#allocation2 + $0x19] sm:$0xff]
      %v404 = vld [vmem:[#allocation2 + $0x21] sm:$0xff]
      %v405 = vld [vmem:[#allocation2 + $0x31] sm:$0xff]
      %v406 = vld [vmem:[#allocation2 + $0x39] sm:$0xff]
      %v407 = vld [vmem:[#allocation2 + $0x49] sm:$0xff]
      %v408 = vld [vmem:[#allocation2 + $0x51] sm:$0xff]
      %v409 = vld [vmem:[#allocation2 + $0x61] sm:$0xff]
      %v410 = vld [vmem:[#allocation2 + $0x69] sm:$0xff]
      %v411 = vld [vmem:[#allocation2 + $0x79] sm:$0xff]
      %v412 = vld [vmem:[#allocation2 + $0x81] sm:$0xff]
      %v413 = vld [vmem:[#allocation2 + $0x91] sm:$0xff]
      %v414 = vld [vmem:[#allocation2 + $0x99] sm:$0xff]
      %v415 = vld [vmem:[#allocation2 + $0xa9] sm:$0xff]
      %v416 = vld [vmem:[#allocation2 + $0xb1] sm:$0xff]
      %v417 = vld [vmem:[#allocation2 + $0xc1] sm:$0xff]
      %v418 = vld [vmem:[#allocation2 + $0xc9] sm:$0xff]
      %v419 = vld [vmem:[#allocation2 + $0xd9] sm:$0xff]
      %v420 = vld [vmem:[#allocation2 + $0xe1] sm:$0xff]
      %v421 = vld [vmem:[#allocation2 + $0xf1] sm:$0xff]
      %v422 = vld [vmem:[#allocation2 + $0xf9] sm:$0xff]
      %v423 = vld [vmem:[#allocation2 + $0x109] sm:$0xff]
      %v424 = vld [vmem:[#allocation2 + $0x111] sm:$0xff]
      %v425 = vld [vmem:[#allocation2 + $0x121] sm:$0xff]
      %v426 = vld [vmem:[#allocation2 + $0x129] sm:$0xff]
      %v427 = vld [vmem:[#allocation2 + $0x139] sm:$0xff]
      %v428 = vld [vmem:[#allocation2 + $0x141] sm:$0xff]
      %v429 = vld [vmem:[#allocation2 + $0x151] sm:$0xff]
      %v430 = vld [vmem:[#allocation2 + $0x159] sm:$0xff]
      %v431 = vld [vmem:[#allocation2 + $0x169] sm:$0xff]
      %v432 = vld [vmem:[#allocation2 + $0x171] sm:$0xff]
      %v433 = vpack.c.bf16 %v402, %v401
      %v434 = vpack.c.bf16 %v404, %v403
      %v435 = vpack.c.bf16 %v406, %v405
      %v436 = vpack.c.bf16 %v408, %v407
      %v437 = vpack.c.bf16 %v410, %v409
      %v438 = vpack.c.bf16 %v412, %v411
      %v439 = vpack.c.bf16 %v414, %v413
      %v440 = vpack.c.bf16 %v416, %v415
      %v441 = vpack.c.bf16 %v418, %v417
      %v442 = vpack.c.bf16 %v420, %v419
      %v443 = vpack.c.bf16 %v422, %v421
      %v444 = vpack.c.bf16 %v424, %v423
      %v445 = vpack.c.bf16 %v426, %v425
      %v446 = vpack.c.bf16 %v428, %v427
      %v447 = vpack.c.bf16 %v430, %v429
      %v448 = vpack.c.bf16 %v432, %v431
      %465 = vrot.lane.b32.xlu0 %v433, 4
      %v466 = vpop.permute.xlu0 %465
      %467 = vrot.lane.b32.xlu0 %v434, 4
      %v468 = vpop.permute.xlu0 %467
      %469 = vrot.lane.b32.xlu0 %v435, 4
      %v470 = vpop.permute.xlu0 %469
      %471 = vrot.lane.b32.xlu0 %v436, 4
      %v472 = vpop.permute.xlu0 %471
      %473 = vrot.lane.b32.xlu0 %v437, 4
      %v474 = vpop.permute.xlu0 %473
      %475 = vrot.lane.b32.xlu0 %v438, 4
      %v476 = vpop.permute.xlu0 %475
      %477 = vrot.lane.b32.xlu0 %v439, 4
      %v478 = vpop.permute.xlu0 %477
      %479 = vrot.lane.b32.xlu0 %v440, 4
      %v480 = vpop.permute.xlu0 %479
      %481 = vrot.lane.b32.xlu0 %v441, 4
      %v482 = vpop.permute.xlu0 %481
      %483 = vrot.lane.b32.xlu0 %v442, 4
      %v484 = vpop.permute.xlu0 %483
      %485 = vrot.lane.b32.xlu0 %v443, 4
      %v486 = vpop.permute.xlu0 %485
      %487 = vrot.lane.b32.xlu0 %v444, 4
      %v488 = vpop.permute.xlu0 %487
      %489 = vrot.lane.b32.xlu0 %v445, 4
      %v490 = vpop.permute.xlu0 %489
      %491 = vrot.lane.b32.xlu0 %v446, 4
      %v492 = vpop.permute.xlu0 %491
      %493 = vrot.lane.b32.xlu0 %v447, 4
      %v494 = vpop.permute.xlu0 %493
      %495 = vrot.lane.b32.xlu0 %v448, 4
      %v496 = vpop.permute.xlu0 %495
      %vm513 = vcmask 64544
      %514 = vst.msk [vmem:[#allocation3] sm:$0xff] %vm513, %v466
      %515 = vst.msk [vmem:[#allocation3 + $0x8] sm:$0xff] %vm513, %v468
      %516 = vst.msk [vmem:[#allocation3 + $0x10] sm:$0xff] %vm513, %v470
      %517 = vst.msk [vmem:[#allocation3 + $0x18] sm:$0xff] %vm513, %v472
      %518 = vst.msk [vmem:[#allocation3 + $0x20] sm:$0xff] %vm513, %v474
      %519 = vst.msk [vmem:[#allocation3 + $0x28] sm:$0xff] %vm513, %v476
      %520 = vst.msk [vmem:[#allocation3 + $0x30] sm:$0xff] %vm513, %v478
      %521 = vst.msk [vmem:[#allocation3 + $0x38] sm:$0xff] %vm513, %v480
      %522 = vst.msk [vmem:[#allocation3 + $0x40] sm:$0xff] %vm513, %v482
      %523 = vst.msk [vmem:[#allocation3 + $0x48] sm:$0xff] %vm513, %v484
      %524 = vst.msk [vmem:[#allocation3 + $0x50] sm:$0xff] %vm513, %v486
      %525 = vst.msk [vmem:[#allocation3 + $0x58] sm:$0xff] %vm513, %v488
      %526 = vst.msk [vmem:[#allocation3 + $0x60] sm:$0xff] %vm513, %v490
      %527 = vst.msk [vmem:[#allocation3 + $0x68] sm:$0xff] %vm513, %v492
      %528 = vst.msk [vmem:[#allocation3 + $0x70] sm:$0xff] %vm513, %v494
      %529 = vst.msk [vmem:[#allocation3 + $0x78] sm:$0xff] %vm513, %v496
      %v530 = vld [vmem:[#allocation2 + $0x2] sm:$0xff]
      %v531 = vld [vmem:[#allocation2 + $0xa] sm:$0xff]
      %v532 = vld [vmem:[#allocation2 + $0x1a] sm:$0xff]
      %v533 = vld [vmem:[#allocation2 + $0x22] sm:$0xff]
      %v534 = vld [vmem:[#allocation2 + $0x32] sm:$0xff]
      %v535 = vld [vmem:[#allocation2 + $0x3a] sm:$0xff]
      %v536 = vld [vmem:[#allocation2 + $0x4a] sm:$0xff]
      %v537 = vld [vmem:[#allocation2 + $0x52] sm:$0xff]
      %v538 = vld [vmem:[#allocation2 + $0x62] sm:$0xff]
      %v539 = vld [vmem:[#allocation2 + $0x6a] sm:$0xff]
      %v540 = vld [vmem:[#allocation2 + $0x7a] sm:$0xff]
      %v541 = vld [vmem:[#allocation2 + $0x82] sm:$0xff]
      %v542 = vld [vmem:[#allocation2 + $0x92] sm:$0xff]
      %v543 = vld [vmem:[#allocation2 + $0x9a] sm:$0xff]
      %v544 = vld [vmem:[#allocation2 + $0xaa] sm:$0xff]
      %v545 = vld [vmem:[#allocation2 + $0xb2] sm:$0xff]
      %v546 = vld [vmem:[#allocation2 + $0xc2] sm:$0xff]
      %v547 = vld [vmem:[#allocation2 + $0xca] sm:$0xff]
      %v548 = vld [vmem:[#allocation2 + $0xda] sm:$0xff]
      %v549 = vld [vmem:[#allocation2 + $0xe2] sm:$0xff]
      %v550 = vld [vmem:[#allocation2 + $0xf2] sm:$0xff]
      %v551 = vld [vmem:[#allocation2 + $0xfa] sm:$0xff]
      %v552 = vld [vmem:[#allocation2 + $0x10a] sm:$0xff]
      %v553 = vld [vmem:[#allocation2 + $0x112] sm:$0xff]
      %v554 = vld [vmem:[#allocation2 + $0x122] sm:$0xff]
      %v555 = vld [vmem:[#allocation2 + $0x12a] sm:$0xff]
      %v556 = vld [vmem:[#allocation2 + $0x13a] sm:$0xff]
      %v557 = vld [vmem:[#allocation2 + $0x142] sm:$0xff]
      %v558 = vld [vmem:[#allocation2 + $0x152] sm:$0xff]
      %v559 = vld [vmem:[#allocation2 + $0x15a] sm:$0xff]
      %v560 = vld [vmem:[#allocation2 + $0x16a] sm:$0xff]
      %v561 = vld [vmem:[#allocation2 + $0x172] sm:$0xff]
      %v562 = vpack.c.bf16 %v531, %v530
      %v563 = vpack.c.bf16 %v533, %v532
      %v564 = vpack.c.bf16 %v535, %v534
      %v565 = vpack.c.bf16 %v537, %v536
      %v566 = vpack.c.bf16 %v539, %v538
      %v567 = vpack.c.bf16 %v541, %v540
      %v568 = vpack.c.bf16 %v543, %v542
      %v569 = vpack.c.bf16 %v545, %v544
      %v570 = vpack.c.bf16 %v547, %v546
      %v571 = vpack.c.bf16 %v549, %v548
      %v572 = vpack.c.bf16 %v551, %v550
      %v573 = vpack.c.bf16 %v553, %v552
      %v574 = vpack.c.bf16 %v555, %v554
      %v575 = vpack.c.bf16 %v557, %v556
      %v576 = vpack.c.bf16 %v559, %v558
      %v577 = vpack.c.bf16 %v561, %v560
      %594 = vrot.lane.b32.xlu0 %v562, 8
      %v595 = vpop.permute.xlu0 %594
      %596 = vrot.lane.b32.xlu0 %v563, 8
      %v597 = vpop.permute.xlu0 %596
      %598 = vrot.lane.b32.xlu0 %v564, 8
      %v599 = vpop.permute.xlu0 %598
      %600 = vrot.lane.b32.xlu0 %v565, 8
      %v601 = vpop.permute.xlu0 %600
      %602 = vrot.lane.b32.xlu0 %v566, 8
      %v603 = vpop.permute.xlu0 %602
      %604 = vrot.lane.b32.xlu0 %v567, 8
      %v605 = vpop.permute.xlu0 %604
      %606 = vrot.lane.b32.xlu0 %v568, 8
      %v607 = vpop.permute.xlu0 %606
      %608 = vrot.lane.b32.xlu0 %v569, 8
      %v609 = vpop.permute.xlu0 %608
      %610 = vrot.lane.b32.xlu0 %v570, 8
      %v611 = vpop.permute.xlu0 %610
      %612 = vrot.lane.b32.xlu0 %v571, 8
      %v613 = vpop.permute.xlu0 %612
      %614 = vrot.lane.b32.xlu0 %v572, 8
      %v615 = vpop.permute.xlu0 %614
      %616 = vrot.lane.b32.xlu0 %v573, 8
      %v617 = vpop.permute.xlu0 %616
      %618 = vrot.lane.b32.xlu0 %v574, 8
      %v619 = vpop.permute.xlu0 %618
      %620 = vrot.lane.b32.xlu0 %v575, 8
      %v621 = vpop.permute.xlu0 %620
      %622 = vrot.lane.b32.xlu0 %v576, 8
      %v623 = vpop.permute.xlu0 %622
      %624 = vrot.lane.b32.xlu0 %v577, 8
      %v625 = vpop.permute.xlu0 %624
      %vm642 = vcmask 97344
      %643 = vst.msk [vmem:[#allocation3] sm:$0xff] %vm642, %v595
      %644 = vst.msk [vmem:[#allocation3 + $0x8] sm:$0xff] %vm642, %v597
      %645 = vst.msk [vmem:[#allocation3 + $0x10] sm:$0xff] %vm642, %v599
      %646 = vst.msk [vmem:[#allocation3 + $0x18] sm:$0xff] %vm642, %v601
      %647 = vst.msk [vmem:[#allocation3 + $0x20] sm:$0xff] %vm642, %v603
      %648 = vst.msk [vmem:[#allocation3 + $0x28] sm:$0xff] %vm642, %v605
      %649 = vst.msk [vmem:[#allocation3 + $0x30] sm:$0xff] %vm642, %v607
      %650 = vst.msk [vmem:[#allocation3 + $0x38] sm:$0xff] %vm642, %v609
      %651 = vst.msk [vmem:[#allocation3 + $0x40] sm:$0xff] %vm642, %v611
      %652 = vst.msk [vmem:[#allocation3 + $0x48] sm:$0xff] %vm642, %v613
      %653 = vst.msk [vmem:[#allocation3 + $0x50] sm:$0xff] %vm642, %v615
      %654 = vst.msk [vmem:[#allocation3 + $0x58] sm:$0xff] %vm642, %v617
      %655 = vst.msk [vmem:[#allocation3 + $0x60] sm:$0xff] %vm642, %v619
      %656 = vst.msk [vmem:[#allocation3 + $0x68] sm:$0xff] %vm642, %v621
      %657 = vst.msk [vmem:[#allocation3 + $0x70] sm:$0xff] %vm642, %v623
      %658 = vst.msk [vmem:[#allocation3 + $0x78] sm:$0xff] %vm642, %v625
      %v659 = vld [vmem:[%s304] sm:$0xff]
      %v660 = vld [vmem:[%s304 + $0x8] sm:$0xff]
      %v661 = vld [vmem:[%s304 + $0x18] sm:$0xff]
      %v662 = vld [vmem:[%s304 + $0x20] sm:$0xff]
      %v663 = vld [vmem:[%s304 + $0x30] sm:$0xff]
      %v664 = vld [vmem:[%s304 + $0x38] sm:$0xff]
      %v665 = vld [vmem:[%s304 + $0x48] sm:$0xff]
      %v666 = vld [vmem:[%s304 + $0x50] sm:$0xff]
      %v667 = vld [vmem:[%s304 + $0x60] sm:$0xff]
      %v668 = vld [vmem:[%s304 + $0x68] sm:$0xff]
      %v669 = vld [vmem:[%s304 + $0x78] sm:$0xff]
      %v670 = vld [vmem:[%s304 + $0x80] sm:$0xff]
      %v671 = vld [vmem:[%s304 + $0x90] sm:$0xff]
      %v672 = vld [vmem:[%s304 + $0x98] sm:$0xff]
      %v673 = vld [vmem:[%s304 + $0xa8] sm:$0xff]
      %v674 = vld [vmem:[%s304 + $0xb0] sm:$0xff]
      %v675 = vld [vmem:[%s304 + $0xc0] sm:$0xff]
      %v676 = vld [vmem:[%s304 + $0xc8] sm:$0xff]
      %v677 = vld [vmem:[%s304 + $0xd8] sm:$0xff]
      %v678 = vld [vmem:[%s304 + $0xe0] sm:$0xff]
      %v679 = vld [vmem:[%s304 + $0xf0] sm:$0xff]
      %v680 = vld [vmem:[%s304 + $0xf8] sm:$0xff]
      %v681 = vld [vmem:[%s304 + $0x108] sm:$0xff]
      %v682 = vld [vmem:[%s304 + $0x110] sm:$0xff]
      %v683 = vld [vmem:[%s304 + $0x120] sm:$0xff]
      %v684 = vld [vmem:[%s304 + $0x128] sm:$0xff]
      %v685 = vld [vmem:[%s304 + $0x138] sm:$0xff]
      %v686 = vld [vmem:[%s304 + $0x140] sm:$0xff]
      %v687 = vld [vmem:[%s304 + $0x150] sm:$0xff]
      %v688 = vld [vmem:[%s304 + $0x158] sm:$0xff]
      %v689 = vld [vmem:[%s304 + $0x168] sm:$0xff]
      %v690 = vld [vmem:[%s304 + $0x170] sm:$0xff]
      %v691 = vpack.c.bf16 %v660, %v659
      %v692 = vpack.c.bf16 %v662, %v661
      %v693 = vpack.c.bf16 %v664, %v663
      %v694 = vpack.c.bf16 %v666, %v665
      %v695 = vpack.c.bf16 %v668, %v667
      %v696 = vpack.c.bf16 %v670, %v669
      %v697 = vpack.c.bf16 %v672, %v671
      %v698 = vpack.c.bf16 %v674, %v673
      %v699 = vpack.c.bf16 %v676, %v675
      %v700 = vpack.c.bf16 %v678, %v677
      %v701 = vpack.c.bf16 %v680, %v679
      %v702 = vpack.c.bf16 %v682, %v681
      %v703 = vpack.c.bf16 %v684, %v683
      %v704 = vpack.c.bf16 %v686, %v685
      %v705 = vpack.c.bf16 %v688, %v687
      %v706 = vpack.c.bf16 %v690, %v689
      %723 = vrot.lane.b32.xlu0 %v691, 12
      %v724 = vpop.permute.xlu0 %723
      %725 = vrot.lane.b32.xlu0 %v692, 12
      %v726 = vpop.permute.xlu0 %725
      %727 = vrot.lane.b32.xlu0 %v693, 12
      %v728 = vpop.permute.xlu0 %727
      %729 = vrot.lane.b32.xlu0 %v694, 12
      %v730 = vpop.permute.xlu0 %729
      %731 = vrot.lane.b32.xlu0 %v695, 12
      %v732 = vpop.permute.xlu0 %731
      %733 = vrot.lane.b32.xlu0 %v696, 12
      %v734 = vpop.permute.xlu0 %733
      %735 = vrot.lane.b32.xlu0 %v697, 12
      %v736 = vpop.permute.xlu0 %735
      %737 = vrot.lane.b32.xlu0 %v698, 12
      %v738 = vpop.permute.xlu0 %737
      %739 = vrot.lane.b32.xlu0 %v699, 12
      %v740 = vpop.permute.xlu0 %739
      %741 = vrot.lane.b32.xlu0 %v700, 12
      %v742 = vpop.permute.xlu0 %741
      %743 = vrot.lane.b32.xlu0 %v701, 12
      %v744 = vpop.permute.xlu0 %743
      %745 = vrot.lane.b32.xlu0 %v702, 12
      %v746 = vpop.permute.xlu0 %745
      %747 = vrot.lane.b32.xlu0 %v703, 12
      %v748 = vpop.permute.xlu0 %747
      %749 = vrot.lane.b32.xlu0 %v704, 12
      %v750 = vpop.permute.xlu0 %749
      %751 = vrot.lane.b32.xlu0 %v705, 12
      %v752 = vpop.permute.xlu0 %751
      %753 = vrot.lane.b32.xlu0 %v706, 12
      %v754 = vpop.permute.xlu0 %753
      %vm771 = vcmask 130144
      %772 = vst.msk [vmem:[#allocation3] sm:$0xff] %vm771, %v724
      %773 = vst.msk [vmem:[#allocation3 + $0x8] sm:$0xff] %vm771, %v726
      %774 = vst.msk [vmem:[#allocation3 + $0x10] sm:$0xff] %vm771, %v728
      %775 = vst.msk [vmem:[#allocation3 + $0x18] sm:$0xff] %vm771, %v730
      %776 = vst.msk [vmem:[#allocation3 + $0x20] sm:$0xff] %vm771, %v732
      %777 = vst.msk [vmem:[#allocation3 + $0x28] sm:$0xff] %vm771, %v734
      %778 = vst.msk [vmem:[#allocation3 + $0x30] sm:$0xff] %vm771, %v736
      %779 = vst.msk [vmem:[#allocation3 + $0x38] sm:$0xff] %vm771, %v738
      %780 = vst.msk [vmem:[#allocation3 + $0x40] sm:$0xff] %vm771, %v740
      %781 = vst.msk [vmem:[#allocation3 + $0x48] sm:$0xff] %vm771, %v742
      %782 = vst.msk [vmem:[#allocation3 + $0x50] sm:$0xff] %vm771, %v744
      %783 = vst.msk [vmem:[#allocation3 + $0x58] sm:$0xff] %vm771, %v746
      %784 = vst.msk [vmem:[#allocation3 + $0x60] sm:$0xff] %vm771, %v748
      %785 = vst.msk [vmem:[#allocation3 + $0x68] sm:$0xff] %vm771, %v750
      %786 = vst.msk [vmem:[#allocation3 + $0x70] sm:$0xff] %vm771, %v752
      %787 = vst.msk [vmem:[#allocation3 + $0x78] sm:$0xff] %vm771, %v754
      %v788 = vld [vmem:[%s304 + $0x1] sm:$0xff]
      %v789 = vld [vmem:[%s304 + $0x9] sm:$0xff]
      %v790 = vld [vmem:[%s304 + $0x19] sm:$0xff]
      %v791 = vld [vmem:[%s304 + $0x21] sm:$0xff]
      %v792 = vld [vmem:[%s304 + $0x31] sm:$0xff]
      %v793 = vld [vmem:[%s304 + $0x39] sm:$0xff]
      %v794 = vld [vmem:[%s304 + $0x49] sm:$0xff]
      %v795 = vld [vmem:[%s304 + $0x51] sm:$0xff]
      %v796 = vld [vmem:[%s304 + $0x61] sm:$0xff]
      %v797 = vld [vmem:[%s304 + $0x69] sm:$0xff]
      %v798 = vld [vmem:[%s304 + $0x79] sm:$0xff]
      %v799 = vld [vmem:[%s304 + $0x81] sm:$0xff]
      %v800 = vld [vmem:[%s304 + $0x91] sm:$0xff]
      %v801 = vld [vmem:[%s304 + $0x99] sm:$0xff]
      %v802 = vld [vmem:[%s304 + $0xa9] sm:$0xff]
      %v803 = vld [vmem:[%s304 + $0xb1] sm:$0xff]
      %v804 = vld [vmem:[%s304 + $0xc1] sm:$0xff]
      %v805 = vld [vmem:[%s304 + $0xc9] sm:$0xff]
      %v806 = vld [vmem:[%s304 + $0xd9] sm:$0xff]
      %v807 = vld [vmem:[%s304 + $0xe1] sm:$0xff]
      %v808 = vld [vmem:[%s304 + $0xf1] sm:$0xff]
      %v809 = vld [vmem:[%s304 + $0xf9] sm:$0xff]
      %v810 = vld [vmem:[%s304 + $0x109] sm:$0xff]
      %v811 = vld [vmem:[%s304 + $0x111] sm:$0xff]
      %v812 = vld [vmem:[%s304 + $0x121] sm:$0xff]
      %v813 = vld [vmem:[%s304 + $0x129] sm:$0xff]
      %v814 = vld [vmem:[%s304 + $0x139] sm:$0xff]
      %v815 = vld [vmem:[%s304 + $0x141] sm:$0xff]
      %v816 = vld [vmem:[%s304 + $0x151] sm:$0xff]
      %v817 = vld [vmem:[%s304 + $0x159] sm:$0xff]
      %v818 = vld [vmem:[%s304 + $0x169] sm:$0xff]
      %v819 = vld [vmem:[%s304 + $0x171] sm:$0xff]
      %v820 = vpack.c.bf16 %v789, %v788
      %v821 = vpack.c.bf16 %v791, %v790
      %v822 = vpack.c.bf16 %v793, %v792
      %v823 = vpack.c.bf16 %v795, %v794
      %v824 = vpack.c.bf16 %v797, %v796
      %v825 = vpack.c.bf16 %v799, %v798
      %v826 = vpack.c.bf16 %v801, %v800
      %v827 = vpack.c.bf16 %v803, %v802
      %v828 = vpack.c.bf16 %v805, %v804
      %v829 = vpack.c.bf16 %v807, %v806
      %v830 = vpack.c.bf16 %v809, %v808
      %v831 = vpack.c.bf16 %v811, %v810
      %v832 = vpack.c.bf16 %v813, %v812
      %v833 = vpack.c.bf16 %v815, %v814
      %v834 = vpack.c.bf16 %v817, %v816
      %v835 = vpack.c.bf16 %v819, %v818
      %852 = vrot.lane.b32.xlu0 %v820, 16
      %v853 = vpop.permute.xlu0 %852
      %854 = vrot.lane.b32.xlu0 %v821, 16
      %v855 = vpop.permute.xlu0 %854
      %856 = vrot.lane.b32.xlu0 %v822, 16
      %v857 = vpop.permute.xlu0 %856
      %858 = vrot.lane.b32.xlu0 %v823, 16
      %v859 = vpop.permute.xlu0 %858
      %860 = vrot.lane.b32.xlu0 %v824, 16
      %v861 = vpop.permute.xlu0 %860
      %862 = vrot.lane.b32.xlu0 %v825, 16
      %v863 = vpop.permute.xlu0 %862
      %864 = vrot.lane.b32.xlu0 %v826, 16
      %v865 = vpop.permute.xlu0 %864
      %866 = vrot.lane.b32.xlu0 %v827, 16
      %v867 = vpop.permute.xlu0 %866
      %868 = vrot.lane.b32.xlu0 %v828, 16
      %v869 = vpop.permute.xlu0 %868
      %870 = vrot.lane.b32.xlu0 %v829, 16
      %v871 = vpop.permute.xlu0 %870
      %872 = vrot.lane.b32.xlu0 %v830, 16
      %v873 = vpop.permute.xlu0 %872
      %874 = vrot.lane.b32.xlu0 %v831, 16
      %v875 = vpop.permute.xlu0 %874
      %876 = vrot.lane.b32.xlu0 %v832, 16
      %v877 = vpop.permute.xlu0 %876
      %878 = vrot.lane.b32.xlu0 %v833, 16
      %v879 = vpop.permute.xlu0 %878
      %880 = vrot.lane.b32.xlu0 %v834, 16
      %v881 = vpop.permute.xlu0 %880
      %882 = vrot.lane.b32.xlu0 %v835, 16
      %v883 = vpop.permute.xlu0 %882
      %vm900 = vcmask 162944
      %901 = vst.msk [vmem:[#allocation3] sm:$0xff] %vm900, %v853
      %902 = vst.msk [vmem:[#allocation3 + $0x8] sm:$0xff] %vm900, %v855
      %903 = vst.msk [vmem:[#allocation3 + $0x10] sm:$0xff] %vm900, %v857
      %904 = vst.msk [vmem:[#allocation3 + $0x18] sm:$0xff] %vm900, %v859
      %905 = vst.msk [vmem:[#allocation3 + $0x20] sm:$0xff] %vm900, %v861
      %906 = vst.msk [vmem:[#allocation3 + $0x28] sm:$0xff] %vm900, %v863
      %907 = vst.msk [vmem:[#allocation3 + $0x30] sm:$0xff] %vm900, %v865
      %908 = vst.msk [vmem:[#allocation3 + $0x38] sm:$0xff] %vm900, %v867
      %909 = vst.msk [vmem:[#allocation3 + $0x40] sm:$0xff] %vm900, %v869
      %910 = vst.msk [vmem:[#allocation3 + $0x48] sm:$0xff] %vm900, %v871
      %911 = vst.msk [vmem:[#allocation3 + $0x50] sm:$0xff] %vm900, %v873
      %912 = vst.msk [vmem:[#allocation3 + $0x58] sm:$0xff] %vm900, %v875
      %913 = vst.msk [vmem:[#allocation3 + $0x60] sm:$0xff] %vm900, %v877
      %914 = vst.msk [vmem:[#allocation3 + $0x68] sm:$0xff] %vm900, %v879
      %915 = vst.msk [vmem:[#allocation3 + $0x70] sm:$0xff] %vm900, %v881
      %916 = vst.msk [vmem:[#allocation3 + $0x78] sm:$0xff] %vm900, %v883
      %v917 = vld [vmem:[%s304 + $0x2] sm:$0xff]
      %v918 = vld [vmem:[%s304 + $0xa] sm:$0xff]
      %v919 = vld [vmem:[%s304 + $0x1a] sm:$0xff]
      %v920 = vld [vmem:[%s304 + $0x22] sm:$0xff]
      %v921 = vld [vmem:[%s304 + $0x32] sm:$0xff]
      %v922 = vld [vmem:[%s304 + $0x3a] sm:$0xff]
      %v923 = vld [vmem:[%s304 + $0x4a] sm:$0xff]
      %v924 = vld [vmem:[%s304 + $0x52] sm:$0xff]
      %v925 = vld [vmem:[%s304 + $0x62] sm:$0xff]
      %v926 = vld [vmem:[%s304 + $0x6a] sm:$0xff]
      %v927 = vld [vmem:[%s304 + $0x7a] sm:$0xff]
      %v928 = vld [vmem:[%s304 + $0x82] sm:$0xff]
      %v929 = vld [vmem:[%s304 + $0x92] sm:$0xff]
      %v930 = vld [vmem:[%s304 + $0x9a] sm:$0xff]
      %v931 = vld [vmem:[%s304 + $0xaa] sm:$0xff]
      %v932 = vld [vmem:[%s304 + $0xb2] sm:$0xff]
      %v933 = vld [vmem:[%s304 + $0xc2] sm:$0xff]
      %v934 = vld [vmem:[%s304 + $0xca] sm:$0xff]
      %v935 = vld [vmem:[%s304 + $0xda] sm:$0xff]
      %v936 = vld [vmem:[%s304 + $0xe2] sm:$0xff]
      %v937 = vld [vmem:[%s304 + $0xf2] sm:$0xff]
      %v938 = vld [vmem:[%s304 + $0xfa] sm:$0xff]
      %v939 = vld [vmem:[%s304 + $0x10a] sm:$0xff]
      %v940 = vld [vmem:[%s304 + $0x112] sm:$0xff]
      %v941 = vld [vmem:[%s304 + $0x122] sm:$0xff]
      %v942 = vld [vmem:[%s304 + $0x12a] sm:$0xff]
      %v943 = vld [vmem:[%s304 + $0x13a] sm:$0xff]
      %v944 = vld [vmem:[%s304 + $0x142] sm:$0xff]
      %v945 = vld [vmem:[%s304 + $0x152] sm:$0xff]
      %v946 = vld [vmem:[%s304 + $0x15a] sm:$0xff]
      %v947 = vld [vmem:[%s304 + $0x16a] sm:$0xff]
      %v948 = vld [vmem:[%s304 + $0x172] sm:$0xff]
      %v949 = vpack.c.bf16 %v918, %v917
      %v950 = vpack.c.bf16 %v920, %v919
      %v951 = vpack.c.bf16 %v922, %v921
      %v952 = vpack.c.bf16 %v924, %v923
      %v953 = vpack.c.bf16 %v926, %v925
      %v954 = vpack.c.bf16 %v928, %v927
      %v955 = vpack.c.bf16 %v930, %v929
      %v956 = vpack.c.bf16 %v932, %v931
      %v957 = vpack.c.bf16 %v934, %v933
      %v958 = vpack.c.bf16 %v936, %v935
      %v959 = vpack.c.bf16 %v938, %v937
      %v960 = vpack.c.bf16 %v940, %v939
      %v961 = vpack.c.bf16 %v942, %v941
      %v962 = vpack.c.bf16 %v944, %v943
      %v963 = vpack.c.bf16 %v946, %v945
      %v964 = vpack.c.bf16 %v948, %v947
      %981 = vrot.lane.b32.xlu0 %v949, 20
      %v982 = vpop.permute.xlu0 %981
      %983 = vrot.lane.b32.xlu0 %v950, 20
      %v984 = vpop.permute.xlu0 %983
      %985 = vrot.lane.b32.xlu0 %v951, 20
      %v986 = vpop.permute.xlu0 %985
      %987 = vrot.lane.b32.xlu0 %v952, 20
      %v988 = vpop.permute.xlu0 %987
      %989 = vrot.lane.b32.xlu0 %v953, 20
      %v990 = vpop.permute.xlu0 %989
      %991 = vrot.lane.b32.xlu0 %v954, 20
      %v992 = vpop.permute.xlu0 %991
      %993 = vrot.lane.b32.xlu0 %v955, 20
      %v994 = vpop.permute.xlu0 %993
      %995 = vrot.lane.b32.xlu0 %v956, 20
      %v996 = vpop.permute.xlu0 %995
      %997 = vrot.lane.b32.xlu0 %v957, 20
      %v998 = vpop.permute.xlu0 %997
      %999 = vrot.lane.b32.xlu0 %v958, 20
      %v1000 = vpop.permute.xlu0 %999
      %1001 = vrot.lane.b32.xlu0 %v959, 20
      %v1002 = vpop.permute.xlu0 %1001
      %1003 = vrot.lane.b32.xlu0 %v960, 20
      %v1004 = vpop.permute.xlu0 %1003
      %1005 = vrot.lane.b32.xlu0 %v961, 20
      %v1006 = vpop.permute.xlu0 %1005
      %1007 = vrot.lane.b32.xlu0 %v962, 20
      %v1008 = vpop.permute.xlu0 %1007
      %1009 = vrot.lane.b32.xlu0 %v963, 20
      %v1010 = vpop.permute.xlu0 %1009
      %1011 = vrot.lane.b32.xlu0 %v964, 20
      %v1012 = vpop.permute.xlu0 %1011
      %vm1029 = vcmask 195744
      %1030 = vst.msk [vmem:[#allocation3] sm:$0xff] %vm1029, %v982
      %1031 = vst.msk [vmem:[#allocation3 + $0x8] sm:$0xff] %vm1029, %v984
      %1032 = vst.msk [vmem:[#allocation3 + $0x10] sm:$0xff] %vm1029, %v986
      %1033 = vst.msk [vmem:[#allocation3 + $0x18] sm:$0xff] %vm1029, %v988
      %1034 = vst.msk [vmem:[#allocation3 + $0x20] sm:$0xff] %vm1029, %v990
      %1035 = vst.msk [vmem:[#allocation3 + $0x28] sm:$0xff] %vm1029, %v992
      %1036 = vst.msk [vmem:[#allocation3 + $0x30] sm:$0xff] %vm1029, %v994
      %1037 = vst.msk [vmem:[#allocation3 + $0x38] sm:$0xff] %vm1029, %v996
      %1038 = vst.msk [vmem:[#allocation3 + $0x40] sm:$0xff] %vm1029, %v998
      %1039 = vst.msk [vmem:[#allocation3 + $0x48] sm:$0xff] %vm1029, %v1000
      %1040 = vst.msk [vmem:[#allocation3 + $0x50] sm:$0xff] %vm1029, %v1002
      %1041 = vst.msk [vmem:[#allocation3 + $0x58] sm:$0xff] %vm1029, %v1004
      %1042 = vst.msk [vmem:[#allocation3 + $0x60] sm:$0xff] %vm1029, %v1006
      %1043 = vst.msk [vmem:[#allocation3 + $0x68] sm:$0xff] %vm1029, %v1008
      %1044 = vst.msk [vmem:[#allocation3 + $0x70] sm:$0xff] %vm1029, %v1010
      %1045 = vst.msk [vmem:[#allocation3 + $0x78] sm:$0xff] %vm1029, %v1012
      %s1046 = scalar_lea.vmem [#allocation2], 48
      %v1047 = vld [vmem:[%s1046] sm:$0xff]
      %v1048 = vld [vmem:[%s1046 + $0x8] sm:$0xff]
      %v1049 = vld [vmem:[%s1046 + $0x18] sm:$0xff]
      %v1050 = vld [vmem:[%s1046 + $0x20] sm:$0xff]
      %v1051 = vld [vmem:[%s1046 + $0x30] sm:$0xff]
      %v1052 = vld [vmem:[%s1046 + $0x38] sm:$0xff]
      %v1053 = vld [vmem:[%s1046 + $0x48] sm:$0xff]
      %v1054 = vld [vmem:[%s1046 + $0x50] sm:$0xff]
      %v1055 = vld [vmem:[%s1046 + $0x60] sm:$0xff]
      %v1056 = vld [vmem:[%s1046 + $0x68] sm:$0xff]
      %v1057 = vld [vmem:[%s1046 + $0x78] sm:$0xff]
      %v1058 = vld [vmem:[%s1046 + $0x80] sm:$0xff]
      %v1059 = vld [vmem:[%s1046 + $0x90] sm:$0xff]
      %v1060 = vld [vmem:[%s1046 + $0x98] sm:$0xff]
      %v1061 = vld [vmem:[%s1046 + $0xa8] sm:$0xff]
      %v1062 = vld [vmem:[%s1046 + $0xb0] sm:$0xff]
      %v1063 = vld [vmem:[%s1046 + $0xc0] sm:$0xff]
      %v1064 = vld [vmem:[%s1046 + $0xc8] sm:$0xff]
      %v1065 = vld [vmem:[%s1046 + $0xd8] sm:$0xff]
      %v1066 = vld [vmem:[%s1046 + $0xe0] sm:$0xff]
      %v1067 = vld [vmem:[%s1046 + $0xf0] sm:$0xff]
      %v1068 = vld [vmem:[%s1046 + $0xf8] sm:$0xff]
      %v1069 = vld [vmem:[%s1046 + $0x108] sm:$0xff]
      %v1070 = vld [vmem:[%s1046 + $0x110] sm:$0xff]
      %v1071 = vld [vmem:[%s1046 + $0x120] sm:$0xff]
      %v1072 = vld [vmem:[%s1046 + $0x128] sm:$0xff]
      %v1073 = vld [vmem:[%s1046 + $0x138] sm:$0xff]
      %v1074 = vld [vmem:[%s1046 + $0x140] sm:$0xff]
      %v1075 = vld [vmem:[%s1046 + $0x150] sm:$0xff]
      %v1076 = vld [vmem:[%s1046 + $0x158] sm:$0xff]
      %v1077 = vld [vmem:[%s1046 + $0x168] sm:$0xff]
      %v1078 = vld [vmem:[%s1046 + $0x170] sm:$0xff]
      %v1079 = vpack.c.bf16 %v1048, %v1047
      %v1080 = vpack.c.bf16 %v1050, %v1049
      %v1081 = vpack.c.bf16 %v1052, %v1051
      %v1082 = vpack.c.bf16 %v1054, %v1053
      %v1083 = vpack.c.bf16 %v1056, %v1055
      %v1084 = vpack.c.bf16 %v1058, %v1057
      %v1085 = vpack.c.bf16 %v1060, %v1059
      %v1086 = vpack.c.bf16 %v1062, %v1061
      %v1087 = vpack.c.bf16 %v1064, %v1063
      %v1088 = vpack.c.bf16 %v1066, %v1065
      %v1089 = vpack.c.bf16 %v1068, %v1067
      %v1090 = vpack.c.bf16 %v1070, %v1069
      %v1091 = vpack.c.bf16 %v1072, %v1071
      %v1092 = vpack.c.bf16 %v1074, %v1073
      %v1093 = vpack.c.bf16 %v1076, %v1075
      %v1094 = vpack.c.bf16 %v1078, %v1077
      %1111 = vrot.lane.b32.xlu0 %v1079, 24
      %v1112 = vpop.permute.xlu0 %1111
      %1113 = vrot.lane.b32.xlu0 %v1080, 24
      %v1114 = vpop.permute.xlu0 %1113
      %1115 = vrot.lane.b32.xlu0 %v1081, 24
      %v1116 = vpop.permute.xlu0 %1115
      %1117 = vrot.lane.b32.xlu0 %v1082, 24
      %v1118 = vpop.permute.xlu0 %1117
      %1119 = vrot.lane.b32.xlu0 %v1083, 24
      %v1120 = vpop.permute.xlu0 %1119
      %1121 = vrot.lane.b32.xlu0 %v1084, 24
      %v1122 = vpop.permute.xlu0 %1121
      %1123 = vrot.lane.b32.xlu0 %v1085, 24
      %v1124 = vpop.permute.xlu0 %1123
      %1125 = vrot.lane.b32.xlu0 %v1086, 24
      %v1126 = vpop.permute.xlu0 %1125
      %1127 = vrot.lane.b32.xlu0 %v1087, 24
      %v1128 = vpop.permute.xlu0 %1127
      %1129 = vrot.lane.b32.xlu0 %v1088, 24
      %v1130 = vpop.permute.xlu0 %1129
      %1131 = vrot.lane.b32.xlu0 %v1089, 24
      %v1132 = vpop.permute.xlu0 %1131
      %1133 = vrot.lane.b32.xlu0 %v1090, 24
      %v1134 = vpop.permute.xlu0 %1133
      %1135 = vrot.lane.b32.xlu0 %v1091, 24
      %v1136 = vpop.permute.xlu0 %1135
      %1137 = vrot.lane.b32.xlu0 %v1092, 24
      %v1138 = vpop.permute.xlu0 %1137
      %1139 = vrot.lane.b32.xlu0 %v1093, 24
      %v1140 = vpop.permute.xlu0 %1139
      %1141 = vrot.lane.b32.xlu0 %v1094, 24
      %v1142 = vpop.permute.xlu0 %1141
      %vm1159 = vcmask 228544
      %1160 = vst.msk [vmem:[#allocation3] sm:$0xff] %vm1159, %v1112
      %1161 = vst.msk [vmem:[#allocation3 + $0x8] sm:$0xff] %vm1159, %v1114
      %1162 = vst.msk [vmem:[#allocation3 + $0x10] sm:$0xff] %vm1159, %v1116
      %1163 = vst.msk [vmem:[#allocation3 + $0x18] sm:$0xff] %vm1159, %v1118
      %1164 = vst.msk [vmem:[#allocation3 + $0x20] sm:$0xff] %vm1159, %v1120
      %1165 = vst.msk [vmem:[#allocation3 + $0x28] sm:$0xff] %vm1159, %v1122
      %1166 = vst.msk [vmem:[#allocation3 + $0x30] sm:$0xff] %vm1159, %v1124
      %1167 = vst.msk [vmem:[#allocation3 + $0x38] sm:$0xff] %vm1159, %v1126
      %1168 = vst.msk [vmem:[#allocation3 + $0x40] sm:$0xff] %vm1159, %v1128
      %1169 = vst.msk [vmem:[#allocation3 + $0x48] sm:$0xff] %vm1159, %v1130
      %1170 = vst.msk [vmem:[#allocation3 + $0x50] sm:$0xff] %vm1159, %v1132
      %1171 = vst.msk [vmem:[#allocation3 + $0x58] sm:$0xff] %vm1159, %v1134
      %1172 = vst.msk [vmem:[#allocation3 + $0x60] sm:$0xff] %vm1159, %v1136
      %1173 = vst.msk [vmem:[#allocation3 + $0x68] sm:$0xff] %vm1159, %v1138
      %1174 = vst.msk [vmem:[#allocation3 + $0x70] sm:$0xff] %vm1159, %v1140
      %1175 = vst.msk [vmem:[#allocation3 + $0x78] sm:$0xff] %vm1159, %v1142
      %v1176 = vld [vmem:[%s1046 + $0x1] sm:$0xff]
      %v1177 = vld [vmem:[%s1046 + $0x9] sm:$0xff]
      %v1178 = vld [vmem:[%s1046 + $0x19] sm:$0xff]
      %v1179 = vld [vmem:[%s1046 + $0x21] sm:$0xff]
      %v1180 = vld [vmem:[%s1046 + $0x31] sm:$0xff]
      %v1181 = vld [vmem:[%s1046 + $0x39] sm:$0xff]
      %v1182 = vld [vmem:[%s1046 + $0x49] sm:$0xff]
      %v1183 = vld [vmem:[%s1046 + $0x51] sm:$0xff]
      %v1184 = vld [vmem:[%s1046 + $0x61] sm:$0xff]
      %v1185 = vld [vmem:[%s1046 + $0x69] sm:$0xff]
      %v1186 = vld [vmem:[%s1046 + $0x79] sm:$0xff]
      %v1187 = vld [vmem:[%s1046 + $0x81] sm:$0xff]
      %v1188 = vld [vmem:[%s1046 + $0x91] sm:$0xff]
      %v1189 = vld [vmem:[%s1046 + $0x99] sm:$0xff]
      %v1190 = vld [vmem:[%s1046 + $0xa9] sm:$0xff]
      %v1191 = vld [vmem:[%s1046 + $0xb1] sm:$0xff]
      %v1192 = vld [vmem:[%s1046 + $0xc1] sm:$0xff]
      %v1193 = vld [vmem:[%s1046 + $0xc9] sm:$0xff]
      %v1194 = vld [vmem:[%s1046 + $0xd9] sm:$0xff]
      %v1195 = vld [vmem:[%s1046 + $0xe1] sm:$0xff]
      %v1196 = vld [vmem:[%s1046 + $0xf1] sm:$0xff]
      %v1197 = vld [vmem:[%s1046 + $0xf9] sm:$0xff]
      %v1198 = vld [vmem:[%s1046 + $0x109] sm:$0xff]
      %v1199 = vld [vmem:[%s1046 + $0x111] sm:$0xff]
      %v1200 = vld [vmem:[%s1046 + $0x121] sm:$0xff]
      %v1201 = vld [vmem:[%s1046 + $0x129] sm:$0xff]
      %v1202 = vld [vmem:[%s1046 + $0x139] sm:$0xff]
      %v1203 = vld [vmem:[%s1046 + $0x141] sm:$0xff]
      %v1204 = vld [vmem:[%s1046 + $0x151] sm:$0xff]
      %v1205 = vld [vmem:[%s1046 + $0x159] sm:$0xff]
      %v1206 = vld [vmem:[%s1046 + $0x169] sm:$0xff]
      %v1207 = vld [vmem:[%s1046 + $0x171] sm:$0xff]
      %v1208 = vpack.c.bf16 %v1177, %v1176
      %v1209 = vpack.c.bf16 %v1179, %v1178
      %v1210 = vpack.c.bf16 %v1181, %v1180
      %v1211 = vpack.c.bf16 %v1183, %v1182
      %v1212 = vpack.c.bf16 %v1185, %v1184
      %v1213 = vpack.c.bf16 %v1187, %v1186
      %v1214 = vpack.c.bf16 %v1189, %v1188
      %v1215 = vpack.c.bf16 %v1191, %v1190
      %v1216 = vpack.c.bf16 %v1193, %v1192
      %v1217 = vpack.c.bf16 %v1195, %v1194
      %v1218 = vpack.c.bf16 %v1197, %v1196
      %v1219 = vpack.c.bf16 %v1199, %v1198
      %v1220 = vpack.c.bf16 %v1201, %v1200
      %v1221 = vpack.c.bf16 %v1203, %v1202
      %v1222 = vpack.c.bf16 %v1205, %v1204
      %v1223 = vpack.c.bf16 %v1207, %v1206
      %1240 = vrot.lane.b32.xlu0 %v1208, 28
      %v1241 = vpop.permute.xlu0 %1240
      %1242 = vrot.lane.b32.xlu0 %v1209, 28
      %v1243 = vpop.permute.xlu0 %1242
      %1244 = vrot.lane.b32.xlu0 %v1210, 28
      %v1245 = vpop.permute.xlu0 %1244
      %1246 = vrot.lane.b32.xlu0 %v1211, 28
      %v1247 = vpop.permute.xlu0 %1246
      %1248 = vrot.lane.b32.xlu0 %v1212, 28
      %v1249 = vpop.permute.xlu0 %1248
      %1250 = vrot.lane.b32.xlu0 %v1213, 28
      %v1251 = vpop.permute.xlu0 %1250
      %1252 = vrot.lane.b32.xlu0 %v1214, 28
      %v1253 = vpop.permute.xlu0 %1252
      %1254 = vrot.lane.b32.xlu0 %v1215, 28
      %v1255 = vpop.permute.xlu0 %1254
      %1256 = vrot.lane.b32.xlu0 %v1216, 28
      %v1257 = vpop.permute.xlu0 %1256
      %1258 = vrot.lane.b32.xlu0 %v1217, 28
      %v1259 = vpop.permute.xlu0 %1258
      %1260 = vrot.lane.b32.xlu0 %v1218, 28
      %v1261 = vpop.permute.xlu0 %1260
      %1262 = vrot.lane.b32.xlu0 %v1219, 28
      %v1263 = vpop.permute.xlu0 %1262
      %1264 = vrot.lane.b32.xlu0 %v1220, 28
      %v1265 = vpop.permute.xlu0 %1264
      %1266 = vrot.lane.b32.xlu0 %v1221, 28
      %v1267 = vpop.permute.xlu0 %1266
      %1268 = vrot.lane.b32.xlu0 %v1222, 28
      %v1269 = vpop.permute.xlu0 %1268
      %1270 = vrot.lane.b32.xlu0 %v1223, 28
      %v1271 = vpop.permute.xlu0 %1270
      %vm1288 = vcmask 261344
      %1289 = vst.msk [vmem:[#allocation3] sm:$0xff] %vm1288, %v1241
      %1290 = vst.msk [vmem:[#allocation3 + $0x8] sm:$0xff] %vm1288, %v1243
      %1291 = vst.msk [vmem:[#allocation3 + $0x10] sm:$0xff] %vm1288, %v1245
      %1292 = vst.msk [vmem:[#allocation3 + $0x18] sm:$0xff] %vm1288, %v1247
      %1293 = vst.msk [vmem:[#allocation3 + $0x20] sm:$0xff] %vm1288, %v1249
      %1294 = vst.msk [vmem:[#allocation3 + $0x28] sm:$0xff] %vm1288, %v1251
      %1295 = vst.msk [vmem:[#allocation3 + $0x30] sm:$0xff] %vm1288, %v1253
      %1296 = vst.msk [vmem:[#allocation3 + $0x38] sm:$0xff] %vm1288, %v1255
      %1297 = vst.msk [vmem:[#allocation3 + $0x40] sm:$0xff] %vm1288, %v1257
      %1298 = vst.msk [vmem:[#allocation3 + $0x48] sm:$0xff] %vm1288, %v1259
      %1299 = vst.msk [vmem:[#allocation3 + $0x50] sm:$0xff] %vm1288, %v1261
      %1300 = vst.msk [vmem:[#allocation3 + $0x58] sm:$0xff] %vm1288, %v1263
      %1301 = vst.msk [vmem:[#allocation3 + $0x60] sm:$0xff] %vm1288, %v1265
      %1302 = vst.msk [vmem:[#allocation3 + $0x68] sm:$0xff] %vm1288, %v1267
      %1303 = vst.msk [vmem:[#allocation3 + $0x70] sm:$0xff] %vm1288, %v1269
      %1304 = vst.msk [vmem:[#allocation3 + $0x78] sm:$0xff] %vm1288, %v1271
      %v1305 = vld [vmem:[%s1046 + $0x2] sm:$0xff]
      %v1306 = vld [vmem:[%s1046 + $0xa] sm:$0xff]
      %v1307 = vld [vmem:[%s1046 + $0x1a] sm:$0xff]
      %v1308 = vld [vmem:[%s1046 + $0x22] sm:$0xff]
      %v1309 = vld [vmem:[%s1046 + $0x32] sm:$0xff]
      %v1310 = vld [vmem:[%s1046 + $0x3a] sm:$0xff]
      %v1311 = vld [vmem:[%s1046 + $0x4a] sm:$0xff]
      %v1312 = vld [vmem:[%s1046 + $0x52] sm:$0xff]
      %v1313 = vld [vmem:[%s1046 + $0x62] sm:$0xff]
      %v1314 = vld [vmem:[%s1046 + $0x6a] sm:$0xff]
      %v1315 = vld [vmem:[%s1046 + $0x7a] sm:$0xff]
      %v1316 = vld [vmem:[%s1046 + $0x82] sm:$0xff]
      %v1317 = vld [vmem:[%s1046 + $0x92] sm:$0xff]
      %v1318 = vld [vmem:[%s1046 + $0x9a] sm:$0xff]
      %v1319 = vld [vmem:[%s1046 + $0xaa] sm:$0xff]
      %v1320 = vld [vmem:[%s1046 + $0xb2] sm:$0xff]
      %v1321 = vld [vmem:[%s1046 + $0xc2] sm:$0xff]
      %v1322 = vld [vmem:[%s1046 + $0xca] sm:$0xff]
      %v1323 = vld [vmem:[%s1046 + $0xda] sm:$0xff]
      %v1324 = vld [vmem:[%s1046 + $0xe2] sm:$0xff]
      %v1325 = vld [vmem:[%s1046 + $0xf2] sm:$0xff]
      %v1326 = vld [vmem:[%s1046 + $0xfa] sm:$0xff]
      %v1327 = vld [vmem:[%s1046 + $0x10a] sm:$0xff]
      %v1328 = vld [vmem:[%s1046 + $0x112] sm:$0xff]
      %v1329 = vld [vmem:[%s1046 + $0x122] sm:$0xff]
      %v1330 = vld [vmem:[%s1046 + $0x12a] sm:$0xff]
      %v1331 = vld [vmem:[%s1046 + $0x13a] sm:$0xff]
      %v1332 = vld [vmem:[%s1046 + $0x142] sm:$0xff]
      %v1333 = vld [vmem:[%s1046 + $0x152] sm:$0xff]
      %v1334 = vld [vmem:[%s1046 + $0x15a] sm:$0xff]
      %v1335 = vld [vmem:[%s1046 + $0x16a] sm:$0xff]
      %v1336 = vld [vmem:[%s1046 + $0x172] sm:$0xff]
      %v1337 = vpack.c.bf16 %v1306, %v1305
      %v1338 = vpack.c.bf16 %v1308, %v1307
      %v1339 = vpack.c.bf16 %v1310, %v1309
      %v1340 = vpack.c.bf16 %v1312, %v1311
      %v1341 = vpack.c.bf16 %v1314, %v1313
      %v1342 = vpack.c.bf16 %v1316, %v1315
      %v1343 = vpack.c.bf16 %v1318, %v1317
      %v1344 = vpack.c.bf16 %v1320, %v1319
      %v1345 = vpack.c.bf16 %v1322, %v1321
      %v1346 = vpack.c.bf16 %v1324, %v1323
      %v1347 = vpack.c.bf16 %v1326, %v1325
      %v1348 = vpack.c.bf16 %v1328, %v1327
      %v1349 = vpack.c.bf16 %v1330, %v1329
      %v1350 = vpack.c.bf16 %v1332, %v1331
      %v1351 = vpack.c.bf16 %v1334, %v1333
      %v1352 = vpack.c.bf16 %v1336, %v1335
      %1369 = vrot.lane.b32.xlu0 %v1337, 32
      %v1370 = vpop.permute.xlu0 %1369
      %1371 = vrot.lane.b32.xlu0 %v1338, 32
      %v1372 = vpop.permute.xlu0 %1371
      %1373 = vrot.lane.b32.xlu0 %v1339, 32
      %v1374 = vpop.permute.xlu0 %1373
      %1375 = vrot.lane.b32.xlu0 %v1340, 32
      %v1376 = vpop.permute.xlu0 %1375
      %1377 = vrot.lane.b32.xlu0 %v1341, 32
      %v1378 = vpop.permute.xlu0 %1377
      %1379 = vrot.lane.b32.xlu0 %v1342, 32
      %v1380 = vpop.permute.xlu0 %1379
      %1381 = vrot.lane.b32.xlu0 %v1343, 32
      %v1382 = vpop.permute.xlu0 %1381
      %1383 = vrot.lane.b32.xlu0 %v1344, 32
      %v1384 = vpop.permute.xlu0 %1383
      %1385 = vrot.lane.b32.xlu0 %v1345, 32
      %v1386 = vpop.permute.xlu0 %1385
      %1387 = vrot.lane.b32.xlu0 %v1346, 32
      %v1388 = vpop.permute.xlu0 %1387
      %1389 = vrot.lane.b32.xlu0 %v1347, 32
      %v1390 = vpop.permute.xlu0 %1389
      %1391 = vrot.lane.b32.xlu0 %v1348, 32
      %v1392 = vpop.permute.xlu0 %1391
      %1393 = vrot.lane.b32.xlu0 %v1349, 32
      %v1394 = vpop.permute.xlu0 %1393
      %1395 = vrot.lane.b32.xlu0 %v1350, 32
      %v1396 = vpop.permute.xlu0 %1395
      %1397 = vrot.lane.b32.xlu0 %v1351, 32
      %v1398 = vpop.permute.xlu0 %1397
      %1399 = vrot.lane.b32.xlu0 %v1352, 32
      %v1400 = vpop.permute.xlu0 %1399
      %vm1417 = vcmask 294144
      %1418 = vst.msk [vmem:[#allocation3] sm:$0xff] %vm1417, %v1370
      %1419 = vst.msk [vmem:[#allocation3 + $0x8] sm:$0xff] %vm1417, %v1372
      %1420 = vst.msk [vmem:[#allocation3 + $0x10] sm:$0xff] %vm1417, %v1374
      %1421 = vst.msk [vmem:[#allocation3 + $0x18] sm:$0xff] %vm1417, %v1376
      %1422 = vst.msk [vmem:[#allocation3 + $0x20] sm:$0xff] %vm1417, %v1378
      %1423 = vst.msk [vmem:[#allocation3 + $0x28] sm:$0xff] %vm1417, %v1380
      %1424 = vst.msk [vmem:[#allocation3 + $0x30] sm:$0xff] %vm1417, %v1382
      %1425 = vst.msk [vmem:[#allocation3 + $0x38] sm:$0xff] %vm1417, %v1384
      %1426 = vst.msk [vmem:[#allocation3 + $0x40] sm:$0xff] %vm1417, %v1386
      %1427 = vst.msk [vmem:[#allocation3 + $0x48] sm:$0xff] %vm1417, %v1388
      %1428 = vst.msk [vmem:[#allocation3 + $0x50] sm:$0xff] %vm1417, %v1390
      %1429 = vst.msk [vmem:[#allocation3 + $0x58] sm:$0xff] %vm1417, %v1392
      %1430 = vst.msk [vmem:[#allocation3 + $0x60] sm:$0xff] %vm1417, %v1394
      %1431 = vst.msk [vmem:[#allocation3 + $0x68] sm:$0xff] %vm1417, %v1396
      %1432 = vst.msk [vmem:[#allocation3 + $0x70] sm:$0xff] %vm1417, %v1398
      %1433 = vst.msk [vmem:[#allocation3 + $0x78] sm:$0xff] %vm1417, %v1400
      %v1434 = vld [vmem:[#allocation3] sm:$0xff]
      %v1435 = vld [vmem:[#allocation3 + $0x8] sm:$0xff]
      %v1436 = vld [vmem:[#allocation3 + $0x10] sm:$0xff]
      %v1437 = vld [vmem:[#allocation3 + $0x18] sm:$0xff]
      %v1438 = vld [vmem:[#allocation3 + $0x20] sm:$0xff]
      %v1439 = vld [vmem:[#allocation3 + $0x28] sm:$0xff]
      %v1440 = vld [vmem:[#allocation3 + $0x30] sm:$0xff]
      %v1441 = vld [vmem:[#allocation3 + $0x38] sm:$0xff]
      %v1442 = vld [vmem:[#allocation3 + $0x40] sm:$0xff]
      %v1443 = vld [vmem:[#allocation3 + $0x48] sm:$0xff]
      %v1444 = vld [vmem:[#allocation3 + $0x50] sm:$0xff]
      %v1445 = vld [vmem:[#allocation3 + $0x58] sm:$0xff]
      %v1446 = vld [vmem:[#allocation3 + $0x60] sm:$0xff]
      %v1447 = vld [vmem:[#allocation3 + $0x68] sm:$0xff]
      %v1448 = vld [vmem:[#allocation3 + $0x70] sm:$0xff]
      %v1449 = vld [vmem:[#allocation3 + $0x78] sm:$0xff]
      %v1450 = vld [vmem:[%s1] sm:$0xf]
      %v1451 = vld [vmem:[%s1 + $0x4] sm:$0xf]
      %v1452 = vld [vmem:[%s1 + $0x8] sm:$0xf]
      %v1453 = vld [vmem:[%s1 + $0xc] sm:$0xf]
      %v1454 = vld [vmem:[%s1 + $0x10] sm:$0x3]
      %v1460 = vunpack.c.l.b16 %v1450
      %v1461 = vunpack.c.l.b16 %v1451
      %v1462 = vunpack.c.l.b16 %v1452
      %v1463 = vunpack.c.l.b16 %v1453
      %v1464 = vunpack.c.l.b16 %v1454
      %v1465 = vpack.c.b16 %v1461, %v1460
      %v1466 = vpack.c.b16 %v1463, %v1462
      %v1467 = vpack.c.b16 %v1464, %v1464
      %vm1470 = vcmask 293888
      %v1472 = vsel %vm1470, %v1434, 0
      %v1475 = vsel %vm1470, %v1435, 0
      %v1478 = vsel %vm1470, %v1436, 0
      %v1481 = vsel %vm1470, %v1437, 0
      %v1484 = vsel %vm1470, %v1438, 0
      %v1487 = vsel %vm1470, %v1439, 0
      %v1490 = vsel %vm1470, %v1440, 0
      %v1493 = vsel %vm1470, %v1441, 0
      %v1496 = vsel %vm1470, %v1442, 0
      %v1499 = vsel %vm1470, %v1443, 0
      %v1502 = vsel %vm1470, %v1444, 0
      %v1505 = vsel %vm1470, %v1445, 0
      %v1508 = vsel %vm1470, %v1446, 0
      %v1511 = vsel %vm1470, %v1447, 0
      %v1514 = vsel %vm1470, %v1448, 0
      %v1517 = vsel %vm1470, %v1449, 0
      %vm1519 = vcmask 1041408
      %v1521 = vsel %vm1519, %v1467, 0
      %1523 = vmatprep.subr.bf16.mxu0 0
      %1524 = vmatpush1.bf16.msra.mxu0 %v1465
      %1525 = vmatprep.subr.bf16.mxu0 0
      %1526 = vmatpush1.bf16.msra.mxu0 %v1466
      %1527 = vmatprep.subr.bf16.mxu0 0
      %1528 = vmatpush1.bf16.msra.mxu0 %v1521
      %1529 = vmatprep.subr.bf16.mxu0 0
      %1530 = vmatpush1.bf16.msra.mxu0 0
      %1531 = vmatprep.subr.bf16.mxu0 0
      %1532 = vmatpush1.bf16.msra.mxu0 0
      %1533 = vmatprep.subr.bf16.mxu0 0
      %1534 = vmatpush1.bf16.msra.mxu0 0
      %1535 = vmatprep.subr.bf16.mxu0 0
      %1536 = vmatpush1.bf16.msra.mxu0 0
      %1537 = vmatprep.subr.bf16.mxu0 0
      %1538 = vmatpush1.bf16.msra.mxu0 0
      %1539 = vmatprep.subr.bf16.mxu0 0
      %1540 = vmatpush1.bf16.msra.mxu0 0
      %1541 = vmatprep.subr.bf16.mxu0 0
      %1542 = vmatpush1.bf16.msra.mxu0 0
      %1543 = vmatprep.subr.bf16.mxu0 0
      %1544 = vmatpush1.bf16.msra.mxu0 0
      %1545 = vmatprep.subr.bf16.mxu0 0
      %1546 = vmatpush1.bf16.msra.mxu0 0
      %1547 = vmatprep.subr.bf16.mxu0 0
      %1548 = vmatpush1.bf16.msra.mxu0 0
      %1549 = vmatprep.subr.bf16.mxu0 0
      %1550 = vmatpush1.bf16.msra.mxu0 0
      %1551 = vmatprep.subr.bf16.mxu0 0
      %1552 = vmatpush1.bf16.msra.mxu0 0
      %1553 = vmatprep.subr.bf16.mxu0 0
      %1554 = vmatpush1.bf16.msra.mxu0 0
      %1555 = vmatprep.mubr.bf16.mxu0 0
      %1556 = vmatmul.mubr.bf16.gmra.mrb[0].mxu0 %v1472
      %v1557 = vpop.f32.mrb[0].mxu0
      %v1558 = vadd.f32 0.0, %v1557
      %v1559 = vpop.f32.mrb[0].mxu0
      %v1560 = vpop.f32.mrb[0].mxu0
      %v1561 = vadd.f32 0.0, %v1560
      %v1562 = vpop.f32.mrb[0].mxu0
      %1563 = vmatprep.mubr.bf16.mxu0 0
      %1564 = vmatmul.mubr.bf16.gmra.mrb[0].mxu0 %v1475
      %v1565 = vpop.f32.mrb[0].mxu0
      %v1566 = vadd.f32 0.0, %v1565
      %v1567 = vpop.f32.mrb[0].mxu0
      %v1568 = vpop.f32.mrb[0].mxu0
      %v1569 = vadd.f32 0.0, %v1568
      %v1570 = vpop.f32.mrb[0].mxu0
      %1571 = vmatprep.mubr.bf16.mxu0 0
      %1572 = vmatmul.mubr.bf16.gmra.mrb[0].mxu0 %v1478
      %v1573 = vpop.f32.mrb[0].mxu0
      %v1574 = vadd.f32 0.0, %v1573
      %v1575 = vpop.f32.mrb[0].mxu0
      %v1576 = vpop.f32.mrb[0].mxu0
      %v1577 = vadd.f32 0.0, %v1576
      %v1578 = vpop.f32.mrb[0].mxu0
      %1579 = vmatprep.mubr.bf16.mxu0 0
      %1580 = vmatmul.mubr.bf16.gmra.mrb[0].mxu0 %v1481
      %v1581 = vpop.f32.mrb[0].mxu0
      %v1582 = vadd.f32 0.0, %v1581
      %v1583 = vpop.f32.mrb[0].mxu0
      %v1584 = vpop.f32.mrb[0].mxu0
      %v1585 = vadd.f32 0.0, %v1584
      %v1586 = vpop.f32.mrb[0].mxu0
      %1587 = vmatprep.mubr.bf16.mxu0 0
      %1588 = vmatmul.mubr.bf16.gmra.mrb[0].mxu0 %v1484
      %v1589 = vpop.f32.mrb[0].mxu0
      %v1590 = vadd.f32 0.0, %v1589
      %v1591 = vpop.f32.mrb[0].mxu0
      %v1592 = vpop.f32.mrb[0].mxu0
      %v1593 = vadd.f32 0.0, %v1592
      %v1594 = vpop.f32.mrb[0].mxu0
      %1595 = vmatprep.mubr.bf16.mxu0 0
      %1596 = vmatmul.mubr.bf16.gmra.mrb[0].mxu0 %v1487
      %v1597 = vpop.f32.mrb[0].mxu0
      %v1598 = vadd.f32 0.0, %v1597
      %v1599 = vpop.f32.mrb[0].mxu0
      %v1600 = vpop.f32.mrb[0].mxu0
      %v1601 = vadd.f32 0.0, %v1600
      %v1602 = vpop.f32.mrb[0].mxu0
      %1603 = vmatprep.mubr.bf16.mxu0 0
      %1604 = vmatmul.mubr.bf16.gmra.mrb[0].mxu0 %v1490
      %v1605 = vpop.f32.mrb[0].mxu0
      %v1606 = vadd.f32 0.0, %v1605
      %v1607 = vpop.f32.mrb[0].mxu0
      %v1608 = vpop.f32.mrb[0].mxu0
      %v1609 = vadd.f32 0.0, %v1608
      %v1610 = vpop.f32.mrb[0].mxu0
      %1611 = vmatprep.mubr.bf16.mxu0 0
      %1612 = vmatmul.mubr.bf16.gmra.mrb[0].mxu0 %v1493
      %v1613 = vpop.f32.mrb[0].mxu0
      %v1614 = vadd.f32 0.0, %v1613
      %v1615 = vpop.f32.mrb[0].mxu0
      %v1616 = vpop.f32.mrb[0].mxu0
      %v1617 = vadd.f32 0.0, %v1616
      %v1618 = vpop.f32.mrb[0].mxu0
      %1619 = vmatprep.mubr.bf16.mxu0 0
      %1620 = vmatmul.mubr.bf16.gmra.mrb[0].mxu0 %v1496
      %v1621 = vpop.f32.mrb[0].mxu0
      %v1622 = vadd.f32 0.0, %v1621
      %v1623 = vpop.f32.mrb[0].mxu0
      %v1624 = vpop.f32.mrb[0].mxu0
      %v1625 = vadd.f32 0.0, %v1624
      %v1626 = vpop.f32.mrb[0].mxu0
      %1627 = vmatprep.mubr.bf16.mxu0 0
      %1628 = vmatmul.mubr.bf16.gmra.mrb[0].mxu0 %v1499
      %v1629 = vpop.f32.mrb[0].mxu0
      %v1630 = vadd.f32 0.0, %v1629
      %v1631 = vpop.f32.mrb[0].mxu0
      %v1632 = vpop.f32.mrb[0].mxu0
      %v1633 = vadd.f32 0.0, %v1632
      %v1634 = vpop.f32.mrb[0].mxu0
      %1635 = vmatprep.mubr.bf16.mxu0 0
      %1636 = vmatmul.mubr.bf16.gmra.mrb[0].mxu0 %v1502
      %v1637 = vpop.f32.mrb[0].mxu0
      %v1638 = vadd.f32 0.0, %v1637
      %v1639 = vpop.f32.mrb[0].mxu0
      %v1640 = vpop.f32.mrb[0].mxu0
      %v1641 = vadd.f32 0.0, %v1640
      %v1642 = vpop.f32.mrb[0].mxu0
      %1643 = vmatprep.mubr.bf16.mxu0 0
      %1644 = vmatmul.mubr.bf16.gmra.mrb[0].mxu0 %v1505
      %v1645 = vpop.f32.mrb[0].mxu0
      %v1646 = vadd.f32 0.0, %v1645
      %v1647 = vpop.f32.mrb[0].mxu0
      %v1648 = vpop.f32.mrb[0].mxu0
      %v1649 = vadd.f32 0.0, %v1648
      %v1650 = vpop.f32.mrb[0].mxu0
      %1651 = vmatprep.mubr.bf16.mxu0 0
      %1652 = vmatmul.mubr.bf16.gmra.mrb[0].mxu0 %v1508
      %v1653 = vpop.f32.mrb[0].mxu0
      %v1654 = vadd.f32 0.0, %v1653
      %v1655 = vpop.f32.mrb[0].mxu0
      %v1656 = vpop.f32.mrb[0].mxu0
      %v1657 = vadd.f32 0.0, %v1656
      %v1658 = vpop.f32.mrb[0].mxu0
      %1659 = vmatprep.mubr.bf16.mxu0 0
      %1660 = vmatmul.mubr.bf16.gmra.mrb[0].mxu0 %v1511
      %v1661 = vpop.f32.mrb[0].mxu0
      %v1662 = vadd.f32 0.0, %v1661
      %v1663 = vpop.f32.mrb[0].mxu0
      %v1664 = vpop.f32.mrb[0].mxu0
      %v1665 = vadd.f32 0.0, %v1664
      %v1666 = vpop.f32.mrb[0].mxu0
      %1667 = vmatprep.mubr.bf16.mxu0 0
      %1668 = vmatmul.mubr.bf16.gmra.mrb[0].mxu0 %v1514
      %v1669 = vpop.f32.mrb[0].mxu0
      %v1670 = vadd.f32 0.0, %v1669
      %v1671 = vpop.f32.mrb[0].mxu0
      %v1672 = vpop.f32.mrb[0].mxu0
      %v1673 = vadd.f32 0.0, %v1672
      %v1674 = vpop.f32.mrb[0].mxu0
      %1675 = vmatprep.mubr.bf16.mxu0 0
      %1676 = vmatmul.mubr.bf16.gmra.mrb[0].mxu0 %v1517
      %v1677 = vpop.f32.mrb[0].mxu0
      %v1678 = vadd.f32 0.0, %v1677
      %v1679 = vpop.f32.mrb[0].mxu0
      %v1680 = vpop.f32.mrb[0].mxu0
      %v1681 = vadd.f32 0.0, %v1680
      %v1682 = vpop.f32.mrb[0].mxu0
      %1683 = vdwg.mxu0
      %v1684 = vpack.c.bf16 %v1561, %v1558
      %v1685 = vpack.c.bf16 %v1569, %v1566
      %v1686 = vpack.c.bf16 %v1577, %v1574
      %v1687 = vpack.c.bf16 %v1585, %v1582
      %v1688 = vpack.c.bf16 %v1593, %v1590
      %v1689 = vpack.c.bf16 %v1601, %v1598
      %v1690 = vpack.c.bf16 %v1609, %v1606
      %v1691 = vpack.c.bf16 %v1617, %v1614
      %v1692 = vpack.c.bf16 %v1625, %v1622
      %v1693 = vpack.c.bf16 %v1633, %v1630
      %v1694 = vpack.c.bf16 %v1641, %v1638
      %v1695 = vpack.c.bf16 %v1649, %v1646
      %v1696 = vpack.c.bf16 %v1657, %v1654
      %v1697 = vpack.c.bf16 %v1665, %v1662
      %v1698 = vpack.c.bf16 %v1673, %v1670
      %v1699 = vpack.c.bf16 %v1681, %v1678
      %v1716 = vunpack.c.l.b16 %v1684
      %v1717 = vunpack.c.h.b16 %v1684
      %v1718 = vunpack.c.l.b16 %v1685
      %v1719 = vunpack.c.h.b16 %v1685
      %v1720 = vunpack.c.l.b16 %v1686
      %v1721 = vunpack.c.h.b16 %v1686
      %v1722 = vunpack.c.l.b16 %v1687
      %v1723 = vunpack.c.h.b16 %v1687
      %v1724 = vunpack.c.l.b16 %v1688
      %v1725 = vunpack.c.h.b16 %v1688
      %v1726 = vunpack.c.l.b16 %v1689
      %v1727 = vunpack.c.h.b16 %v1689
      %v1728 = vunpack.c.l.b16 %v1690
      %v1729 = vunpack.c.h.b16 %v1690
      %v1730 = vunpack.c.l.b16 %v1691
      %v1731 = vunpack.c.h.b16 %v1691
      %v1732 = vunpack.c.l.b16 %v1692
      %v1733 = vunpack.c.h.b16 %v1692
      %v1734 = vunpack.c.l.b16 %v1693
      %v1735 = vunpack.c.h.b16 %v1693
      %v1736 = vunpack.c.l.b16 %v1694
      %v1737 = vunpack.c.h.b16 %v1694
      %v1738 = vunpack.c.l.b16 %v1695
      %v1739 = vunpack.c.h.b16 %v1695
      %v1740 = vunpack.c.l.b16 %v1696
      %v1741 = vunpack.c.h.b16 %v1696
      %v1742 = vunpack.c.l.b16 %v1697
      %v1743 = vunpack.c.h.b16 %v1697
      %v1744 = vunpack.c.l.b16 %v1698
      %v1745 = vunpack.c.h.b16 %v1698
      %v1746 = vunpack.c.l.b16 %v1699
      %v1747 = vunpack.c.h.b16 %v1699
      %v1748 = vpack.c.b16 %v1716, %v1716
      %v1749 = vpack.c.b16 %v1717, %v1717
      %v1750 = vpack.c.b16 %v1718, %v1718
      %v1751 = vpack.c.b16 %v1719, %v1719
      %v1752 = vpack.c.b16 %v1720, %v1720
      %v1753 = vpack.c.b16 %v1721, %v1721
      %v1754 = vpack.c.b16 %v1722, %v1722
      %v1755 = vpack.c.b16 %v1723, %v1723
      %v1756 = vpack.c.b16 %v1724, %v1724
      %v1757 = vpack.c.b16 %v1725, %v1725
      %v1758 = vpack.c.b16 %v1726, %v1726
      %v1759 = vpack.c.b16 %v1727, %v1727
      %v1760 = vpack.c.b16 %v1728, %v1728
      %v1761 = vpack.c.b16 %v1729, %v1729
      %v1762 = vpack.c.b16 %v1730, %v1730
      %v1763 = vpack.c.b16 %v1731, %v1731
      %v1764 = vpack.c.b16 %v1732, %v1732
      %v1765 = vpack.c.b16 %v1733, %v1733
      %v1766 = vpack.c.b16 %v1734, %v1734
      %v1767 = vpack.c.b16 %v1735, %v1735
      %v1768 = vpack.c.b16 %v1736, %v1736
      %v1769 = vpack.c.b16 %v1737, %v1737
      %v1770 = vpack.c.b16 %v1738, %v1738
      %v1771 = vpack.c.b16 %v1739, %v1739
      %v1772 = vpack.c.b16 %v1740, %v1740
      %v1773 = vpack.c.b16 %v1741, %v1741
      %v1774 = vpack.c.b16 %v1742, %v1742
      %v1775 = vpack.c.b16 %v1743, %v1743
      %v1776 = vpack.c.b16 %v1744, %v1744
      %v1777 = vpack.c.b16 %v1745, %v1745
      %v1778 = vpack.c.b16 %v1746, %v1746
      %v1779 = vpack.c.b16 %v1747, %v1747
      %vm1812 = vcmask 60416
      %1813 = vst.msk [vmem:[%s208] sm:$0xf] %vm1812, %v1748
      %1814 = vst.msk [vmem:[%s208 + $0x4] sm:$0xf] %vm1812, %v1749
      %1815 = vst.msk [vmem:[%s208 + $0x8] sm:$0xf] %vm1812, %v1750
      %1816 = vst.msk [vmem:[%s208 + $0xc] sm:$0xf] %vm1812, %v1751
      %1817 = vst.msk [vmem:[%s208 + $0x10] sm:$0xf] %vm1812, %v1752
      %1818 = vst.msk [vmem:[%s208 + $0x14] sm:$0xf] %vm1812, %v1753
      %1819 = vst.msk [vmem:[%s208 + $0x18] sm:$0xf] %vm1812, %v1754
      %1820 = vst.msk [vmem:[%s208 + $0x1c] sm:$0xf] %vm1812, %v1755
      %1821 = vst.msk [vmem:[%s208 + $0x20] sm:$0xf] %vm1812, %v1756
      %1822 = vst.msk [vmem:[%s208 + $0x24] sm:$0xf] %vm1812, %v1757
      %1823 = vst.msk [vmem:[%s208 + $0x28] sm:$0xf] %vm1812, %v1758
      %1824 = vst.msk [vmem:[%s208 + $0x2c] sm:$0xf] %vm1812, %v1759
      %1825 = vst.msk [vmem:[%s208 + $0x30] sm:$0xf] %vm1812, %v1760
      %1826 = vst.msk [vmem:[%s208 + $0x34] sm:$0xf] %vm1812, %v1761
      %1827 = vst.msk [vmem:[%s208 + $0x38] sm:$0xf] %vm1812, %v1762
      %1828 = vst.msk [vmem:[%s208 + $0x3c] sm:$0xf] %vm1812, %v1763
      %1829 = vst.msk [vmem:[%s208 + $0x40] sm:$0xf] %vm1812, %v1764
      %1830 = vst.msk [vmem:[%s208 + $0x44] sm:$0xf] %vm1812, %v1765
      %1831 = vst.msk [vmem:[%s208 + $0x48] sm:$0xf] %vm1812, %v1766
      %1832 = vst.msk [vmem:[%s208 + $0x4c] sm:$0xf] %vm1812, %v1767
      %1833 = vst.msk [vmem:[%s208 + $0x50] sm:$0xf] %vm1812, %v1768
      %1834 = vst.msk [vmem:[%s208 + $0x54] sm:$0xf] %vm1812, %v1769
      %1835 = vst.msk [vmem:[%s208 + $0x58] sm:$0xf] %vm1812, %v1770
      %1836 = vst.msk [vmem:[%s208 + $0x5c] sm:$0xf] %vm1812, %v1771
      %1837 = vst.msk [vmem:[%s208 + $0x60] sm:$0xf] %vm1812, %v1772
      %1838 = vst.msk [vmem:[%s208 + $0x64] sm:$0xf] %vm1812, %v1773
      %1839 = vst.msk [vmem:[%s208 + $0x68] sm:$0xf] %vm1812, %v1774
      %1840 = vst.msk [vmem:[%s208 + $0x6c] sm:$0xf] %vm1812, %v1775
      %1841 = vst.msk [vmem:[%s208 + $0x70] sm:$0xf] %vm1812, %v1776
      %1842 = vst.msk [vmem:[%s208 + $0x74] sm:$0xf] %vm1812, %v1777
      %1843 = vst.msk [vmem:[%s208 + $0x78] sm:$0xf] %vm1812, %v1778
      %1844 = vst.msk [vmem:[%s208 + $0x7c] sm:$0xf] %vm1812, %v1779
      %vm1845 = vcmask 64512
      %v1846 = vsel %vm1845, %v1558, 0.0
      %v1847 = vsel %vm1845, %v1561, 0.0
      %v1848 = vadd.f32 %v1846, %v1847
      %v1849 = vsel %vm1845, %v1566, 0.0
      %v1850 = vadd.f32 %v1848, %v1849
      %v1851 = vsel %vm1845, %v1569, 0.0
      %v1852 = vadd.f32 %v1850, %v1851
      %v1853 = vsel %vm1845, %v1574, 0.0
      %v1854 = vadd.f32 %v1852, %v1853
      %v1855 = vsel %vm1845, %v1577, 0.0
      %v1856 = vadd.f32 %v1854, %v1855
      %v1857 = vsel %vm1845, %v1582, 0.0
      %v1858 = vadd.f32 %v1856, %v1857
      %v1859 = vsel %vm1845, %v1585, 0.0
      %v1860 = vadd.f32 %v1858, %v1859
      %v1861 = vsel %vm1845, %v1590, 0.0
      %v1862 = vadd.f32 %v1860, %v1861
      %v1863 = vsel %vm1845, %v1593, 0.0
      %v1864 = vadd.f32 %v1862, %v1863
      %v1865 = vsel %vm1845, %v1598, 0.0
      %v1866 = vadd.f32 %v1864, %v1865
      %v1867 = vsel %vm1845, %v1601, 0.0
      %v1868 = vadd.f32 %v1866, %v1867
      %v1869 = vsel %vm1845, %v1606, 0.0
      %v1870 = vadd.f32 %v1868, %v1869
      %v1871 = vsel %vm1845, %v1609, 0.0
      %v1872 = vadd.f32 %v1870, %v1871
      %v1873 = vsel %vm1845, %v1614, 0.0
      %v1874 = vadd.f32 %v1872, %v1873
      %v1875 = vsel %vm1845, %v1617, 0.0
      %v1876 = vadd.f32 %v1874, %v1875
      %v1877 = vsel %vm1845, %v1622, 0.0
      %v1878 = vadd.f32 %v1876, %v1877
      %v1879 = vsel %vm1845, %v1625, 0.0
      %v1880 = vadd.f32 %v1878, %v1879
      %v1881 = vsel %vm1845, %v1630, 0.0
      %v1882 = vadd.f32 %v1880, %v1881
      %v1883 = vsel %vm1845, %v1633, 0.0
      %v1884 = vadd.f32 %v1882, %v1883
      %v1885 = vsel %vm1845, %v1638, 0.0
      %v1886 = vadd.f32 %v1884, %v1885
      %v1887 = vsel %vm1845, %v1641, 0.0
      %v1888 = vadd.f32 %v1886, %v1887
      %v1889 = vsel %vm1845, %v1646, 0.0
      %v1890 = vadd.f32 %v1888, %v1889
      %v1891 = vsel %vm1845, %v1649, 0.0
      %v1892 = vadd.f32 %v1890, %v1891
      %v1893 = vsel %vm1845, %v1654, 0.0
      %v1894 = vadd.f32 %v1892, %v1893
      %v1895 = vsel %vm1845, %v1657, 0.0
      %v1896 = vadd.f32 %v1894, %v1895
      %v1897 = vsel %vm1845, %v1662, 0.0
      %v1898 = vadd.f32 %v1896, %v1897
      %v1899 = vsel %vm1845, %v1665, 0.0
      %v1900 = vadd.f32 %v1898, %v1899
      %v1901 = vsel %vm1845, %v1670, 0.0
      %v1902 = vadd.f32 %v1900, %v1901
      %v1903 = vsel %vm1845, %v1673, 0.0
      %v1904 = vadd.f32 %v1902, %v1903
      %v1905 = vsel %vm1845, %v1678, 0.0
      %v1906 = vadd.f32 %v1904, %v1905
      %v1907 = vsel %vm1845, %v1681, 0.0
      %v1908 = vadd.f32 %v1906, %v1907
      %v1909 = vrot.slane %v1908, 4
      %v1910 = vadd.f32 %v1908, %v1909
      %v1911 = vrot.slane %v1910, 2
      %v1912 = vadd.f32 %v1910, %v1911
      %v1913 = vrot.slane %v1912, 1
      %v1914 = vadd.f32 %v1912, %v1913
      %vm1915 = vcmask 57344
      %1916 = vst.msk [vmem:[%s211] sm:$0x1] %vm1915, %v1914
      %v1917 = vmul.f32 %v1558, %v1558
      %v1918 = vmul.f32 %v1561, %v1561
      %v1919 = vmul.f32 %v1566, %v1566
      %v1920 = vmul.f32 %v1569, %v1569
      %v1921 = vmul.f32 %v1574, %v1574
      %v1922 = vmul.f32 %v1577, %v1577
      %v1923 = vmul.f32 %v1582, %v1582
      %v1924 = vmul.f32 %v1585, %v1585
      %v1925 = vmul.f32 %v1590, %v1590
      %v1926 = vmul.f32 %v1593, %v1593
      %v1927 = vmul.f32 %v1598, %v1598
      %v1928 = vmul.f32 %v1601, %v1601
      %v1929 = vmul.f32 %v1606, %v1606
      %v1930 = vmul.f32 %v1609, %v1609
      %v1931 = vmul.f32 %v1614, %v1614
      %v1932 = vmul.f32 %v1617, %v1617
      %v1933 = vmul.f32 %v1622, %v1622
      %v1934 = vmul.f32 %v1625, %v1625
      %v1935 = vmul.f32 %v1630, %v1630
      %v1936 = vmul.f32 %v1633, %v1633
      %v1937 = vmul.f32 %v1638, %v1638
      %v1938 = vmul.f32 %v1641, %v1641
      %v1939 = vmul.f32 %v1646, %v1646
      %v1940 = vmul.f32 %v1649, %v1649
      %v1941 = vmul.f32 %v1654, %v1654
      %v1942 = vmul.f32 %v1657, %v1657
      %v1943 = vmul.f32 %v1662, %v1662
      %v1944 = vmul.f32 %v1665, %v1665
      %v1945 = vmul.f32 %v1670, %v1670
      %v1946 = vmul.f32 %v1673, %v1673
      %v1947 = vmul.f32 %v1678, %v1678
      %v1948 = vmul.f32 %v1681, %v1681
      %v1949 = vsel %vm1845, %v1917, 0.0
      %v1950 = vsel %vm1845, %v1918, 0.0
      %v1951 = vadd.f32 %v1949, %v1950
      %v1952 = vsel %vm1845, %v1919, 0.0
      %v1953 = vadd.f32 %v1951, %v1952
      %v1954 = vsel %vm1845, %v1920, 0.0
      %v1955 = vadd.f32 %v1953, %v1954
      %v1956 = vsel %vm1845, %v1921, 0.0
      %v1957 = vadd.f32 %v1955, %v1956
      %v1958 = vsel %vm1845, %v1922, 0.0
      %v1959 = vadd.f32 %v1957, %v1958
      %v1960 = vsel %vm1845, %v1923, 0.0
      %v1961 = vadd.f32 %v1959, %v1960
      %v1962 = vsel %vm1845, %v1924, 0.0
      %v1963 = vadd.f32 %v1961, %v1962
      %v1964 = vsel %vm1845, %v1925, 0.0
      %v1965 = vadd.f32 %v1963, %v1964
      %v1966 = vsel %vm1845, %v1926, 0.0
      %v1967 = vadd.f32 %v1965, %v1966
      %v1968 = vsel %vm1845, %v1927, 0.0
      %v1969 = vadd.f32 %v1967, %v1968
      %v1970 = vsel %vm1845, %v1928, 0.0
      %v1971 = vadd.f32 %v1969, %v1970
      %v1972 = vsel %vm1845, %v1929, 0.0
      %v1973 = vadd.f32 %v1971, %v1972
      %v1974 = vsel %vm1845, %v1930, 0.0
      %v1975 = vadd.f32 %v1973, %v1974
      %v1976 = vsel %vm1845, %v1931, 0.0
      %v1977 = vadd.f32 %v1975, %v1976
      %v1978 = vsel %vm1845, %v1932, 0.0
      %v1979 = vadd.f32 %v1977, %v1978
      %v1980 = vsel %vm1845, %v1933, 0.0
      %v1981 = vadd.f32 %v1979, %v1980
      %v1982 = vsel %vm1845, %v1934, 0.0
      %v1983 = vadd.f32 %v1981, %v1982
      %v1984 = vsel %vm1845, %v1935, 0.0
      %v1985 = vadd.f32 %v1983, %v1984
      %v1986 = vsel %vm1845, %v1936, 0.0
      %v1987 = vadd.f32 %v1985, %v1986
      %v1988 = vsel %vm1845, %v1937, 0.0
      %v1989 = vadd.f32 %v1987, %v1988
      %v1990 = vsel %vm1845, %v1938, 0.0
      %v1991 = vadd.f32 %v1989, %v1990
      %v1992 = vsel %vm1845, %v1939, 0.0
      %v1993 = vadd.f32 %v1991, %v1992
      %v1994 = vsel %vm1845, %v1940, 0.0
      %v1995 = vadd.f32 %v1993, %v1994
      %v1996 = vsel %vm1845, %v1941, 0.0
      %v1997 = vadd.f32 %v1995, %v1996
      %v1998 = vsel %vm1845, %v1942, 0.0
      %v1999 = vadd.f32 %v1997, %v1998
      %v2000 = vsel %vm1845, %v1943, 0.0
      %v2001 = vadd.f32 %v1999, %v2000
      %v2002 = vsel %vm1845, %v1944, 0.0
      %v2003 = vadd.f32 %v2001, %v2002
      %v2004 = vsel %vm1845, %v1945, 0.0
      %v2005 = vadd.f32 %v2003, %v2004
      %v2006 = vsel %vm1845, %v1946, 0.0
      %v2007 = vadd.f32 %v2005, %v2006
      %v2008 = vsel %vm1845, %v1947, 0.0
      %v2009 = vadd.f32 %v2007, %v2008
      %v2010 = vsel %vm1845, %v1948, 0.0
      %v2011 = vadd.f32 %v2009, %v2010
      %v2012 = vrot.slane %v2011, 4
      %v2013 = vadd.f32 %v2011, %v2012
      %v2014 = vrot.slane %v2013, 2
      %v2015 = vadd.f32 %v2013, %v2014
      %v2016 = vrot.slane %v2015, 1
      %v2017 = vadd.f32 %v2015, %v2016
      %2018 = vst.msk [vmem:[%s214] sm:$0x1] %vm1915, %v2017
      %p2019 = scmp.lt.s32.totalorder %s16, 1
      %s2020 = scalar_select %p2019, %s16, 1
      %s2021 = smul.addr %s2020, 32
      %s2022 = smul.addr %s2021, 4
      %s2023 = scalar_lea.vmem %s2, %s2022
      %p2024 = scmp.lt.s32.totalorder %s16, 1
      %s2025 = scalar_select %p2024, %s16, 1
      %s2026 = scalar_lea.vmem %s3, %s2025
      %p2027 = scmp.lt.s32.totalorder %s16, 1
      %s2028 = scalar_select %p2027, %s16, 1
      %s2029 = scalar_lea.vmem %s4, %s2028
      // Predicated region
      $region29: #{residual_block.3} parent=27 // pred_check
        %p2030 = pneg %p81
      $region30: #{residual_block.3} parent=27 // pred_check_branch
        %2032 = sbr.rel (%p2030) target = $region32
      $region31: #{residual_block.3} parent=27 // pred_region
        _
      $region32: #{residual_block.3} parent=27 // pred_fallthru
        _
      // Predicated region
      $region33: #{residual_block.3} parent=27 // pred_check
        %p2033 = pneg %p107
      $region34: #{residual_block.3} parent=27 // pred_check_branch
        %2035 = sbr.rel (%p2033) target = $region36
      $region35: #{residual_block.3} parent=27 // pred_region
        _
      $region36: #{residual_block.3} parent=27 // pred_fallthru
        _
      // Predicated region
      $region37: #{residual_block.3} parent=27 // pred_check
        %p2036 = pneg %p133
      $region38: #{residual_block.3} parent=27 // pred_check_branch
        %2038 = sbr.rel (%p2036) target = $region40
      $region39: #{residual_block.3} parent=27 // pred_region
        _
      $region40: #{residual_block.3} parent=27 // pred_fallthru
        _
    $region28: #{residual_block.3} parent=5 // pred_fallthru
      _
    %p2039 = scmp.le.s32.totalorder 2, %s11
    // Predicated region
    $region41: #{residual_block.3} parent=5 // pred_check
      %p2040 = pneg %p2039
    $region42: #{residual_block.3} parent=5 // pred_check_branch
      %2042 = sbr.rel (%p2040) target = $region44
    $region43: #{residual_block.3} parent=5 // pred_region
      %s2043 = ssub.s32 %s11, 2
      // Predicated region
      $region45: #{residual_block.3} parent=43 // pred_check
        %p2044 = pneg %p87
      $region46: #{residual_block.3} parent=43 // pred_check_branch
        %2046 = sbr.rel (%p2044) target = $region48
      $region47: #{residual_block.3} parent=43 // pred_region
        %p2047 = scmp.lt.s32.totalorder %s17, 1
        %s2048 = scalar_select %p2047, %s17, 1
        %s2049 = smul.addr %s2048, 32
        %s2050 = smul.addr %s2049, 4
        %s2051 = scalar_lea.vmem %s2, %s2050
      $region48: #{residual_block.3} parent=43 // pred_fallthru
        _
      // Predicated region
      $region49: #{residual_block.3} parent=43 // pred_check
        %p2052 = pneg %p113
      $region50: #{residual_block.3} parent=43 // pred_check_branch
        %2054 = sbr.rel (%p2052) target = $region52
      $region51: #{residual_block.3} parent=43 // pred_region
        %p2055 = scmp.lt.s32.totalorder %s17, 1
        %s2056 = scalar_select %p2055, %s17, 1
        %s2057 = scalar_lea.vmem %s3, %s2056
      $region52: #{residual_block.3} parent=43 // pred_fallthru
        _
      // Predicated region
      $region53: #{residual_block.3} parent=43 // pred_check
        %p2058 = pneg %p139
      $region54: #{residual_block.3} parent=43 // pred_check_branch
        %2060 = sbr.rel (%p2058) target = $region56
      $region55: #{residual_block.3} parent=43 // pred_region
        %p2061 = scmp.lt.s32.totalorder %s17, 1
        %s2062 = scalar_select %p2061, %s17, 1
        %s2063 = scalar_lea.vmem %s4, %s2062
      $region56: #{residual_block.3} parent=43 // pred_fallthru
        _
    $region44: #{residual_block.3} parent=5 // pred_fallthru
      _
  $region6: #{residual_block.3} parent=0 // loop_footer
    %s15 = sadd.s32 1, %s11
  $region7: #{residual_block.3} parent=0 // loop_footer_branch
    %10 = sbr.rel target = $region3
  $region8: #{residual_block.3} parent=0 // loop_exit
    _

// kernel: residual_block.4
$region0: #{residual_block.4}
  #allocation0 [shape = 'u32[]', space=smem, size = 0x4, offset = 0x4, fixed_abs, tag = 'smem constant byte address 0x4 - core index']
  #allocation1 [shape = 'u32[144,128]{1,0:T(1,128)}', space=vmem, size = 0x12000, scoped, tag = 'internal scratch']
  #allocation2 [shape = 'f32[18,18,4]{2,1,0:T(8,128)}', space=vmem, size = 0x36000, scoped, tag = 'scratch operand']
  #allocation3 [shape = 'bf16[256,36]{1,0:T(16,128)(2,1)}', space=vmem, size = 0x10000, scoped, tag = 'scratch operand']
  %s0 = inlined_call_operand.vmem [shape: bf16[2,16,16,8], index: 0, kind: input, shape index: {}]
  %s1 = inlined_call_operand.vmem [shape: f32[1,8], index: 1, kind: input, shape index: {}]
  %s2 = inlined_call_operand.vmem [shape: f32[1,8], index: 2, kind: input, shape index: {}]
  %s3 = inlined_call_operand.vmem [shape: bf16[36,4], index: 3, kind: input, shape index: {}]
  %s4 = inlined_call_operand.vmem [shape: f32[2,16,16,4], index: 4, kind: output, shape index: {0}]
  %s5 = inlined_call_operand.vmem [shape: f32[2,1,4], index: 5, kind: output, shape index: {1}]
  %s6 = inlined_call_operand.vmem [shape: f32[2,1,4], index: 6, kind: output, shape index: {2}]
  %7 = xla_tuple %s4, %s5, %s6
  %s8 = sld [smem:[#allocation0]]
  $region65: #{residual_block.4} parent=0
    _
  %s10 = ssub.s32 1, %s8
  %s11 = scalar_select 0, %s10, %s8
  loop: start=0, step=1, limit=4
  $region2: #{residual_block.4} parent=0 // loop_pre_header
    _
  $region3: #{residual_block.4} parent=0 // loop_header
    %s13 = sphi 0, %s17
    %p14 = scmp.ge.s32.totalorder %s13, 4
    %s23 = sphi 0, %s25
    %s26 = sphi 0, %s23
    %s27 = sphi 0, %s26
    %s43 = sphi 0, %s27
    %s47 = sphi 0, %s47
    %s49 = sphi 0, %s47
    %s50 = sphi 0, %s49
    %s64 = sphi 0, %s50
    %s68 = sphi 0, %s68
    %s70 = sphi 0, %s68
    %s71 = sphi 0, %s70
    %s85 = sphi 0, %s71
    %s89 = sphi 0, %s89
    %s91 = sphi 0, %s89
    %s92 = sphi 0, %s91
    %s106 = sphi 0, %s92
    %s112 = sphi 0, %s114
    %s115 = sphi 0, %s112
    %s116 = sphi 0, %s115
    %s132 = sphi 0, %s116
    %s138 = sphi 0, %s140
    %s141 = sphi 0, %s138
    %s142 = sphi 0, %s141
    %s158 = sphi 0, %s142
    %s164 = sphi 0, %s166
    %s167 = sphi 0, %s164
    %s168 = sphi 0, %s167
    %s184 = sphi 0, %s168
  $region4: #{residual_block.4} parent=0 // loop_header_branch
    %16 = sbr.rel (%p14) target = $region8
  $region5: #{residual_block.4} parent=0 // loop_body
    %s18 = ssub.s32 %s13, 1
    %s19 = ssub.s32 %s13, 2
    %s20 = sadd.s32 %s13, 1
    %s21 = ssub.s32 %s13, %s20
    %p22 = scmp.eq.s32.totalorder %s21, 0
    %s24 = sadd.s32 %s23, 1
    %s25 = scalar_select %p22, %s23, %s24
    %p28 = pneg %p22
    %p29 = scmp.eq.s32.totalorder %s13, 1
    %p30 = por %p28, %p29
    %p31 = scmp.ne.s32.totalorder %s23, %s26
    %p32 = scmp.eq.s32.totalorder %s13, 0
    %p33 = por %p31, %p32
    %p34 = scmp.ne.s32.totalorder %s23, %s26
    %p35 = scmp.eq.s32.totalorder %s18, 1
    %p36 = por %p34, %p35
    %p37 = scmp.ne.s32.totalorder %s26, %s27
    %p38 = scmp.eq.s32.totalorder %s18, 0
    %p39 = por %p37, %p38
    %p40 = scmp.ne.s32.totalorder %s26, %s27
    %p41 = scmp.eq.s32.totalorder %s19, 1
    %p42 = por %p40, %p41
    %p44 = scmp.ne.s32.totalorder %s27, %s43
    %p45 = scmp.eq.s32.totalorder %s19, 0
    %p46 = por %p44, %p45
    %s48 = sadd.s32 %s47, 1
    %p51 = scmp.eq.s32.totalorder %s13, 1
    %p52 = scmp.ne.s32.totalorder %s47, %s49
    %p53 = scmp.eq.s32.totalorder %s13, 0
    %p54 = por %p52, %p53
    %p55 = scmp.ne.s32.totalorder %s47, %s49
    %p56 = scmp.eq.s32.totalorder %s18, 1
    %p57 = por %p55, %p56
    %p58 = scmp.ne.s32.totalorder %s49, %s50
    %p59 = scmp.eq.s32.totalorder %s18, 0
    %p60 = por %p58, %p59
    %p61 = scmp.ne.s32.totalorder %s49, %s50
    %p62 = scmp.eq.s32.totalorder %s19, 1
    %p63 = por %p61, %p62
    %p65 = scmp.ne.s32.totalorder %s50, %s64
    %p66 = scmp.eq.s32.totalorder %s19, 0
    %p67 = por %p65, %p66
    %s69 = sadd.s32 %s68, 1
    %p72 = scmp.eq.s32.totalorder %s13, 1
    %p73 = scmp.ne.s32.totalorder %s68, %s70
    %p74 = scmp.eq.s32.totalorder %s13, 0
    %p75 = por %p73, %p74
    %p76 = scmp.ne.s32.totalorder %s68, %s70
    %p77 = scmp.eq.s32.totalorder %s18, 1
    %p78 = por %p76, %p77
    %p79 = scmp.ne.s32.totalorder %s70, %s71
    %p80 = scmp.eq.s32.totalorder %s18, 0
    %p81 = por %p79, %p80
    %p82 = scmp.ne.s32.totalorder %s70, %s71
    %p83 = scmp.eq.s32.totalorder %s19, 1
    %p84 = por %p82, %p83
    %p86 = scmp.ne.s32.totalorder %s71, %s85
    %p87 = scmp.eq.s32.totalorder %s19, 0
    %p88 = por %p86, %p87
    %s90 = sadd.s32 %s89, 1
    %p93 = scmp.eq.s32.totalorder %s13, 1
    %p94 = scmp.ne.s32.totalorder %s89, %s91
    %p95 = scmp.eq.s32.totalorder %s13, 0
    %p96 = por %p94, %p95
    %p97 = scmp.ne.s32.totalorder %s89, %s91
    %p98 = scmp.eq.s32.totalorder %s18, 1
    %p99 = por %p97, %p98
    %p100 = scmp.ne.s32.totalorder %s91, %s92
    %p101 = scmp.eq.s32.totalorder %s18, 0
    %p102 = por %p100, %p101
    %p103 = scmp.ne.s32.totalorder %s91, %s92
    %p104 = scmp.eq.s32.totalorder %s19, 1
    %p105 = por %p103, %p104
    %p107 = scmp.ne.s32.totalorder %s92, %s106
    %p108 = scmp.eq.s32.totalorder %s19, 0
    %p109 = por %p107, %p108
    %s110 = ssub.s32 %s13, %s20
    %p111 = scmp.eq.s32.totalorder %s110, 0
    %s113 = sadd.s32 %s112, 1
    %s114 = scalar_select %p111, %s112, %s113
    %p117 = pneg %p111
    %p118 = scmp.eq.s32.totalorder %s13, 1
    %p119 = por %p117, %p118
    %p120 = scmp.ne.s32.totalorder %s112, %s115
    %p121 = scmp.eq.s32.totalorder %s13, 0
    %p122 = por %p120, %p121
    %p123 = scmp.ne.s32.totalorder %s112, %s115
    %p124 = scmp.eq.s32.totalorder %s18, 1
    %p125 = por %p123, %p124
    %p126 = scmp.ne.s32.totalorder %s115, %s116
    %p127 = scmp.eq.s32.totalorder %s18, 0
    %p128 = por %p126, %p127
    %p129 = scmp.ne.s32.totalorder %s115, %s116
    %p130 = scmp.eq.s32.totalorder %s19, 1
    %p131 = por %p129, %p130
    %p133 = scmp.ne.s32.totalorder %s116, %s132
    %p134 = scmp.eq.s32.totalorder %s19, 0
    %p135 = por %p133, %p134
    %s136 = ssub.s32 %s13, %s20
    %p137 = scmp.eq.s32.totalorder %s136, 0
    %s139 = sadd.s32 %s138, 1
    %s140 = scalar_select %p137, %s138, %s139
    %p143 = pneg %p137
    %p144 = scmp.eq.s32.totalorder %s13, 1
    %p145 = por %p143, %p144
    %p146 = scmp.ne.s32.totalorder %s138, %s141
    %p147 = scmp.eq.s32.totalorder %s13, 0
    %p148 = por %p146, %p147
    %p149 = scmp.ne.s32.totalorder %s138, %s141
    %p150 = scmp.eq.s32.totalorder %s18, 1
    %p151 = por %p149, %p150
    %p152 = scmp.ne.s32.totalorder %s141, %s142
    %p153 = scmp.eq.s32.totalorder %s18, 0
    %p154 = por %p152, %p153
    %p155 = scmp.ne.s32.totalorder %s141, %s142
    %p156 = scmp.eq.s32.totalorder %s19, 1
    %p157 = por %p155, %p156
    %p159 = scmp.ne.s32.totalorder %s142, %s158
    %p160 = scmp.eq.s32.totalorder %s19, 0
    %p161 = por %p159, %p160
    %s162 = ssub.s32 %s13, %s20
    %p163 = scmp.eq.s32.totalorder %s162, 0
    %s165 = sadd.s32 %s164, 1
    %s166 = scalar_select %p163, %s164, %s165
    %p169 = pneg %p163
    %p170 = scmp.eq.s32.totalorder %s13, 1
    %p171 = por %p169, %p170
    %p172 = scmp.ne.s32.totalorder %s164, %s167
    %p173 = scmp.eq.s32.totalorder %s13, 0
    %p174 = por %p172, %p173
    %p175 = scmp.ne.s32.totalorder %s164, %s167
    %p176 = scmp.eq.s32.totalorder %s18, 1
    %p177 = por %p175, %p176
    %p178 = scmp.ne.s32.totalorder %s167, %s168
    %p179 = scmp.eq.s32.totalorder %s18, 0
    %p180 = por %p178, %p179
    %p181 = scmp.ne.s32.totalorder %s167, %s168
    %p182 = scmp.eq.s32.totalorder %s19, 1
    %p183 = por %p181, %p182
    %p185 = scmp.ne.s32.totalorder %s168, %s184
    %p186 = scmp.eq.s32.totalorder %s19, 0
    %p187 = por %p185, %p186
    %p188 = scmp.le.s32.totalorder 1, %s13
    %p189 = scmp.lt.s32.totalorder %s13, 3
    %p190 = pnand %p188, %p189
    %p191 = pneg %p190
    // Predicated region
    $region9: #{residual_block.4} parent=5 // pred_check
      _
    $region10: #{residual_block.4} parent=5 // pred_check_branch
      %193 = sbr.rel (%p190) target = $region12
    $region11: #{residual_block.4} parent=5 // pred_region
      %s194 = ssub.s32 %s13, 1
      // Predicated region
      $region13: #{residual_block.4} parent=11 // pred_check
        %p195 = pneg %p60
      $region14: #{residual_block.4} parent=11 // pred_check_branch
        %197 = sbr.rel (%p195) target = $region16
      $region15: #{residual_block.4} parent=11 // pred_region
        _
      $region16: #{residual_block.4} parent=11 // pred_fallthru
        _
      // Predicated region
      $region17: #{residual_block.4} parent=11 // pred_check
        %p198 = pneg %p81
      $region18: #{residual_block.4} parent=11 // pred_check_branch
        %200 = sbr.rel (%p198) target = $region20
      $region19: #{residual_block.4} parent=11 // pred_region
        _
      $region20: #{residual_block.4} parent=11 // pred_fallthru
        _
      // Predicated region
      $region21: #{residual_block.4} parent=11 // pred_check
        %p201 = pneg %p102
      $region22: #{residual_block.4} parent=11 // pred_check_branch
        %203 = sbr.rel (%p201) target = $region24
      $region23: #{residual_block.4} parent=11 // pred_region
        _
      $region24: #{residual_block.4} parent=11 // pred_fallthru
        _
    $region12: #{residual_block.4} parent=5 // pred_fallthru
      _
    %p204 = scmp.lt.s32.totalorder %s13, 2
    // Predicated region
    $region25: #{residual_block.4} parent=5 // pred_check
      %p205 = pneg %p204
    $region26: #{residual_block.4} parent=5 // pred_check_branch
      %207 = sbr.rel (%p205) target = $region28
    $region27: #{residual_block.4} parent=5 // pred_region
      // Predicated region
      $region29: #{residual_block.4} parent=27 // pred_check
        %p208 = pneg %p33
      $region30: #{residual_block.4} parent=27 // pred_check_branch
        %210 = sbr.rel (%p208) target = $region32
      $region31: #{residual_block.4} parent=27 // pred_region
        %p211 = scmp.lt.s32.totalorder %s13, 1
        %s212 = scalar_select %p211, %s13, 1
        %s213 = smul.addr %s212, 32
        %s214 = smul.addr %s213, 4
        %s215 = scalar_lea.vmem %s0, %s214
      $region32: #{residual_block.4} parent=27 // pred_fallthru
        _
    $region28: #{residual_block.4} parent=5 // pred_fallthru
      _
    %p216 = scmp.le.s32.totalorder 1, %s13
    %p217 = scmp.lt.s32.totalorder %s13, 3
    %p218 = pnand %p216, %p217
    %p219 = pneg %p218
    // Predicated region
    $region33: #{residual_block.4} parent=5 // pred_check
      _
    $region34: #{residual_block.4} parent=5 // pred_check_branch
      %221 = sbr.rel (%p218) target = $region36
    $region35: #{residual_block.4} parent=5 // pred_region
      %s222 = ssub.s32 %s13, 1
      %p223 = scmp.lt.s32.totalorder %s18, 1
      %s224 = scalar_select %p223, %s18, 1
      %s225 = smul.addr %s224, 32
      %s226 = smul.addr %s225, 4
      %s227 = scalar_lea.vmem %s0, %s226
      %p228 = pneg %p39
      %p229 = pneg %p36
      %p230 = pneg %p60
      %p231 = pneg %p57
      %p232 = pneg %p81
      %p233 = pneg %p78
      %p234 = pneg %p102
      %p235 = pneg %p99
      %p236 = pneg %p128
      %p237 = pneg %p125
      %p238 = scmp.lt.s32.totalorder %s18, 1
      %s239 = scalar_select %p238, %s18, 1
      %s240 = smul.addr %s239, 32
      %s241 = smul.addr %s240, 8
      %s242 = scalar_lea.vmem %s4, %s241
      %p243 = pneg %p154
      %p244 = pneg %p151
      %p245 = scmp.lt.s32.totalorder %s18, 1
      %s246 = scalar_select %p245, %s18, 1
      %s247 = scalar_lea.vmem %s5, %s246
      %p248 = pneg %p180
      %p249 = pneg %p177
      %p250 = scmp.lt.s32.totalorder %s18, 1
      %s251 = scalar_select %p250, %s18, 1
      %s252 = scalar_lea.vmem %s6, %s251
      %p253 = scmp.lt.s32.totalorder %s18, 1
      %s254 = scalar_select %p253, %s18, 1
      %s255 = smul.addr %s254, 32
      %s256 = smul.addr %s255, 4
      %s257 = scalar_lea.vmem %s0, %s256
      %p258 = scmp.lt.s32.totalorder %s18, 1
      %s259 = scalar_select %p258, %s18, 1
      %s260 = smul.addr %s259, 32
      %s261 = smul.addr %s260, 8
      %s262 = scalar_lea.vmem %s4, %s261
      %p263 = scmp.lt.s32.totalorder %s18, 1
      %s264 = scalar_select %p263, %s18, 1
      %s265 = scalar_lea.vmem %s5, %s264
      %p266 = scmp.lt.s32.totalorder %s18, 1
      %s267 = scalar_select %p266, %s18, 1
      %s268 = scalar_lea.vmem %s6, %s267
      %v270 = vld [vmem:[%s257] sm:$0xf]
      %v271 = vld [vmem:[%s257 + $0x4] sm:$0xf]
      %v272 = vld [vmem:[%s257 + $0x8] sm:$0xf]
      %v273 = vld [vmem:[%s257 + $0xc] sm:$0xf]
      %v274 = vld [vmem:[%s257 + $0x10] sm:$0xf]
      %v275 = vld [vmem:[%s257 + $0x14] sm:$0xf]
      %v276 = vld [vmem:[%s257 + $0x18] sm:$0xf]
      %v277 = vld [vmem:[%s257 + $0x1c] sm:$0xf]
      %v278 = vld [vmem:[%s257 + $0x20] sm:$0xf]
      %v279 = vld [vmem:[%s257 + $0x24] sm:$0xf]
      %v280 = vld [vmem:[%s257 + $0x28] sm:$0xf]
      %v281 = vld [vmem:[%s257 + $0x2c] sm:$0xf]
      %v282 = vld [vmem:[%s257 + $0x30] sm:$0xf]
      %v283 = vld [vmem:[%s257 + $0x34] sm:$0xf]
      %v284 = vld [vmem:[%s257 + $0x38] sm:$0xf]
      %v285 = vld [vmem:[%s257 + $0x3c] sm:$0xf]
      %v286 = vld [vmem:[%s257 + $0x40] sm:$0xf]
      %v287 = vld [vmem:[%s257 + $0x44] sm:$0xf]
      %v288 = vld [vmem:[%s257 + $0x48] sm:$0xf]
      %v289 = vld [vmem:[%s257 + $0x4c] sm:$0xf]
      %v290 = vld [vmem:[%s257 + $0x50] sm:$0xf]
      %v291 = vld [vmem:[%s257 + $0x54] sm:$0xf]
      %v292 = vld [vmem:[%s257 + $0x58] sm:$0xf]
      %v293 = vld [vmem:[%s257 + $0x5c] sm:$0xf]
      %v294 = vld [vmem:[%s257 + $0x60] sm:$0xf]
      %v295 = vld [vmem:[%s257 + $0x64] sm:$0xf]
      %v296 = vld [vmem:[%s257 + $0x68] sm:$0xf]
      %v297 = vld [vmem:[%s257 + $0x6c] sm:$0xf]
      %v298 = vld [vmem:[%s257 + $0x70] sm:$0xf]
      %v299 = vld [vmem:[%s257 + $0x74] sm:$0xf]
      %v300 = vld [vmem:[%s257 + $0x78] sm:$0xf]
      %v301 = vld [vmem:[%s257 + $0x7c] sm:$0xf]
      %v302 = vunpack.c.l.bf16 %v270
      %v303 = vunpack.c.l.bf16 %v271
      %v304 = vunpack.c.l.bf16 %v272
      %v305 = vunpack.c.l.bf16 %v273
      %v306 = vunpack.c.l.bf16 %v274
      %v307 = vunpack.c.l.bf16 %v275
      %v308 = vunpack.c.l.bf16 %v276
      %v309 = vunpack.c.l.bf16 %v277
      %v310 = vunpack.c.l.bf16 %v278
      %v311 = vunpack.c.l.bf16 %v279
      %v312 = vunpack.c.l.bf16 %v280
      %v313 = vunpack.c.l.bf16 %v281
      %v314 = vunpack.c.l.bf16 %v282
      %v315 = vunpack.c.l.bf16 %v283
      %v316 = vunpack.c.l.bf16 %v284
      %v317 = vunpack.c.l.bf16 %v285
      %v318 = vunpack.c.l.bf16 %v286
      %v319 = vunpack.c.l.bf16 %v287
      %v320 = vunpack.c.l.bf16 %v288
      %v321 = vunpack.c.l.bf16 %v289
      %v322 = vunpack.c.l.bf16 %v290
      %v323 = vunpack.c.l.bf16 %v291
      %v324 = vunpack.c.l.bf16 %v292
      %v325 = vunpack.c.l.bf16 %v293
      %v326 = vunpack.c.l.bf16 %v294
      %v327 = vunpack.c.l.bf16 %v295
      %v328 = vunpack.c.l.bf16 %v296
      %v329 = vunpack.c.l.bf16 %v297
      %v330 = vunpack.c.l.bf16 %v298
      %v331 = vunpack.c.l.bf16 %v299
      %v332 = vunpack.c.l.bf16 %v300
      %v333 = vunpack.c.l.bf16 %v301
      %v334 = vld [vmem:[%s1] sm:$0x1]
      %v336 = vlaneseq
      %v337 = vshrl.u32 %v336, 7
      %v338 = vsub.s32 0, %v337
      %v339 = vrot.slane %v334, %v338
      %v341 = vmul.f32 %v302, %v339
      %v342 = vmul.f32 %v303, %v339
      %v343 = vmul.f32 %v304, %v339
      %v344 = vmul.f32 %v305, %v339
      %v345 = vmul.f32 %v306, %v339
      %v346 = vmul.f32 %v307, %v339
      %v347 = vmul.f32 %v308, %v339
      %v348 = vmul.f32 %v309, %v339
      %v349 = vmul.f32 %v310, %v339
      %v350 = vmul.f32 %v311, %v339
      %v351 = vmul.f32 %v312, %v339
      %v352 = vmul.f32 %v313, %v339
      %v353 = vmul.f32 %v314, %v339
      %v354 = vmul.f32 %v315, %v339
      %v355 = vmul.f32 %v316, %v339
      %v356 = vmul.f32 %v317, %v339
      %v357 = vmul.f32 %v318, %v339
      %v358 = vmul.f32 %v319, %v339
      %v359 = vmul.f32 %v320, %v339
      %v360 = vmul.f32 %v321, %v339
      %v361 = vmul.f32 %v322, %v339
      %v362 = vmul.f32 %v323, %v339
      %v363 = vmul.f32 %v324, %v339
      %v364 = vmul.f32 %v325, %v339
      %v365 = vmul.f32 %v326, %v339
      %v366 = vmul.f32 %v327, %v339
      %v367 = vmul.f32 %v328, %v339
      %v368 = vmul.f32 %v329, %v339
      %v369 = vmul.f32 %v330, %v339
      %v370 = vmul.f32 %v331, %v339
      %v371 = vmul.f32 %v332, %v339
      %v372 = vmul.f32 %v333, %v339
      %v373 = vld [vmem:[%s2] sm:$0x1]
      %v375 = vlaneseq
      %v376 = vshrl.u32 %v375, 7
      %v377 = vsub.s32 0, %v376
      %v378 = vrot.slane %v373, %v377
      %v380 = vadd.f32 %v341, %v378
      %v381 = vadd.f32 %v342, %v378
      %v382 = vadd.f32 %v343, %v378
      %v383 = vadd.f32 %v344, %v378
      %v384 = vadd.f32 %v345, %v378
      %v385 = vadd.f32 %v346, %v378
      %v386 = vadd.f32 %v347, %v378
      %v387 = vadd.f32 %v348, %v378
      %v388 = vadd.f32 %v349, %v378
      %v389 = vadd.f32 %v350, %v378
      %v390 = vadd.f32 %v351, %v378
      %v391 = vadd.f32 %v352, %v378
      %v392 = vadd.f32 %v353, %v378
      %v393 = vadd.f32 %v354, %v378
      %v394 = vadd.f32 %v355, %v378
      %v395 = vadd.f32 %v356, %v378
      %v396 = vadd.f32 %v357, %v378
      %v397 = vadd.f32 %v358, %v378
      %v398 = vadd.f32 %v359, %v378
      %v399 = vadd.f32 %v360, %v378
      %v400 = vadd.f32 %v361, %v378
      %v401 = vadd.f32 %v362, %v378
      %v402 = vadd.f32 %v363, %v378
      %v403 = vadd.f32 %v364, %v378
      %v404 = vadd.f32 %v365, %v378
      %v405 = vadd.f32 %v366, %v378
      %v406 = vadd.f32 %v367, %v378
      %v407 = vadd.f32 %v368, %v378
      %v408 = vadd.f32 %v369, %v378
      %v409 = vadd.f32 %v370, %v378
      %v410 = vadd.f32 %v371, %v378
      %v411 = vadd.f32 %v372, %v378
      %v412 = vxor.u32 %v380, 2147483648
      %v413 = vxor.u32 %v381, 2147483648
      %v414 = vxor.u32 %v382, 2147483648
      %v415 = vxor.u32 %v383, 2147483648
      %v416 = vxor.u32 %v384, 2147483648
      %v417 = vxor.u32 %v385, 2147483648
      %v418 = vxor.u32 %v386, 2147483648
      %v419 = vxor.u32 %v387, 2147483648
      %v420 = vxor.u32 %v388, 2147483648
      %v421 = vxor.u32 %v389, 2147483648
      %v422 = vxor.u32 %v390, 2147483648
      %v423 = vxor.u32 %v391, 2147483648
      %v424 = vxor.u32 %v392, 2147483648
      %v425 = vxor.u32 %v393, 2147483648
      %v426 = vxor.u32 %v394, 2147483648
      %v427 = vxor.u32 %v395, 2147483648
      %v428 = vxor.u32 %v396, 2147483648
      %v429 = vxor.u32 %v397, 2147483648
      %v430 = vxor.u32 %v398, 2147483648
      %v431 = vxor.u32 %v399, 2147483648
      %v432 = vxor.u32 %v400, 2147483648
      %v433 = vxor.u32 %v401, 2147483648
      %v434 = vxor.u32 %v402, 2147483648
      %v435 = vxor.u32 %v403, 2147483648
      %v436 = vxor.u32 %v404, 2147483648
      %v437 = vxor.u32 %v405, 2147483648
      %v438 = vxor.u32 %v406, 2147483648
      %v439 = vxor.u32 %v407, 2147483648
      %v440 = vxor.u32 %v408, 2147483648
      %v441 = vxor.u32 %v409, 2147483648
      %v442 = vxor.u32 %v410, 2147483648
      %v443 = vxor.u32 %v411, 2147483648
      %v444 = vmul.f32 %v412, 1.442695
      %v445 = vpow.pop %v444
      %v446 = vmul.f32 %v413, 1.442695
      %v447 = vpow.pop %v446
      %v448 = vmul.f32 %v414, 1.442695
      %v449 = vpow.pop %v448
      %v450 = vmul.f32 %v415, 1.442695
      %v451 = vpow.pop %v450
      %v452 = vmul.f32 %v416, 1.442695
      %v453 = vpow.pop %v452
      %v454 = vmul.f32 %v417, 1.442695
      %v455 = vpow.pop %v454
      %v456 = vmul.f32 %v418, 1.442695
      %v457 = vpow.pop %v456
      %v458 = vmul.f32 %v419, 1.442695
      %v459 = vpow.pop %v458
      %v460 = vmul.f32 %v420, 1.442695
      %v461 = vpow.pop %v460
      %v462 = vmul.f32 %v421, 1.442695
      %v463 = vpow.pop %v462
      %v464 = vmul.f32 %v422, 1.442695
      %v465 = vpow.pop %v464
      %v466 = vmul.f32 %v423, 1.442695
      %v467 = vpow.pop %v466
      %v468 = vmul.f32 %v424, 1.442695
      %v469 = vpow.pop %v468
      %v470 = vmul.f32 %v425, 1.442695
      %v471 = vpow.pop %v470
      %v472 = vmul.f32 %v426, 1.442695
      %v473 = vpow.pop %v472
      %v474 = vmul.f32 %v427, 1.442695
      %v475 = vpow.pop %v474
      %v476 = vmul.f32 %v428, 1.442695
      %v477 = vpow.pop %v476
      %v478 = vmul.f32 %v429, 1.442695
      %v479 = vpow.pop %v478
      %v480 = vmul.f32 %v430, 1.442695
      %v481 = vpow.pop %v480
      %v482 = vmul.f32 %v431, 1.442695
      %v483 = vpow.pop %v482
      %v484 = vmul.f32 %v432, 1.442695
      %v485 = vpow.pop %v484
      %v486 = vmul.f32 %v433, 1.442695
      %v487 = vpow.pop %v486
      %v488 = vmul.f32 %v434, 1.442695
      %v489 = vpow.pop %v488
      %v490 = vmul.f32 %v435, 1.442695
      %v491 = vpow.pop %v490
      %v492 = vmul.f32 %v436, 1.442695
      %v493 = vpow.pop %v492
      %v494 = vmul.f32 %v437, 1.442695
      %v495 = vpow.pop %v494
      %v496 = vmul.f32 %v438, 1.442695
      %v497 = vpow.pop %v496
      %v498 = vmul.f32 %v439, 1.442695
      %v499 = vpow.pop %v498
      %v500 = vmul.f32 %v440, 1.442695
      %v501 = vpow.pop %v500
      %v502 = vmul.f32 %v441, 1.442695
      %v503 = vpow.pop %v502
      %v504 = vmul.f32 %v442, 1.442695
      %v505 = vpow.pop %v504
      %v506 = vmul.f32 %v443, 1.442695
      %v507 = vpow.pop %v506
      %v508 = vadd.f32 %v445, 1.0
      %v509 = vadd.f32 %v447, 1.0
      %v510 = vadd.f32 %v449, 1.0
      %v511 = vadd.f32 %v451, 1.0
      %v512 = vadd.f32 %v453, 1.0
      %v513 = vadd.f32 %v455, 1.0
      %v514 = vadd.f32 %v457, 1.0
      %v515 = vadd.f32 %v459, 1.0
      %v516 = vadd.f32 %v461, 1.0
      %v517 = vadd.f32 %v463, 1.0
      %v518 = vadd.f32 %v465, 1.0
      %v519 = vadd.f32 %v467, 1.0
      %v520 = vadd.f32 %v469, 1.0
      %v521 = vadd.f32 %v471, 1.0
      %v522 = vadd.f32 %v473, 1.0
      %v523 = vadd.f32 %v475, 1.0
      %v524 = vadd.f32 %v477, 1.0
      %v525 = vadd.f32 %v479, 1.0
      %v526 = vadd.f32 %v481, 1.0
      %v527 = vadd.f32 %v483, 1.0
      %v528 = vadd.f32 %v485, 1.0
      %v529 = vadd.f32 %v487, 1.0
      %v530 = vadd.f32 %v489, 1.0
      %v531 = vadd.f32 %v491, 1.0
      %v532 = vadd.f32 %v493, 1.0
      %v533 = vadd.f32 %v495, 1.0
      %v534 = vadd.f32 %v497, 1.0
      %v535 = vadd.f32 %v499, 1.0
      %v536 = vadd.f32 %v501, 1.0
      %v537 = vadd.f32 %v503, 1.0
      %v538 = vadd.f32 %v505, 1.0
      %v539 = vadd.f32 %v507, 1.0
      %v540 = vrcp.pop %v508
      %v541 = vmul.f32 1.0, %v540
      %v542 = vrcp.pop %v509
      %v543 = vmul.f32 1.0, %v542
      %v544 = vrcp.pop %v510
      %v545 = vmul.f32 1.0, %v544
      %v546 = vrcp.pop %v511
      %v547 = vmul.f32 1.0, %v546
      %v548 = vrcp.pop %v512
      %v549 = vmul.f32 1.0, %v548
      %v550 = vrcp.pop %v513
      %v551 = vmul.f32 1.0, %v550
      %v552 = vrcp.pop %v514
      %v553 = vmul.f32 1.0, %v552
      %v554 = vrcp.pop %v515
      %v555 = vmul.f32 1.0, %v554
      %v556 = vrcp.pop %v516
      %v557 = vmul.f32 1.0, %v556
      %v558 = vrcp.pop %v517
      %v559 = vmul.f32 1.0, %v558
      %v560 = vrcp.pop %v518
      %v561 = vmul.f32 1.0, %v560
      %v562 = vrcp.pop %v519
      %v563 = vmul.f32 1.0, %v562
      %v564 = vrcp.pop %v520
      %v565 = vmul.f32 1.0, %v564
      %v566 = vrcp.pop %v521
      %v567 = vmul.f32 1.0, %v566
      %v568 = vrcp.pop %v522
      %v569 = vmul.f32 1.0, %v568
      %v570 = vrcp.pop %v523
      %v571 = vmul.f32 1.0, %v570
      %v572 = vrcp.pop %v524
      %v573 = vmul.f32 1.0, %v572
      %v574 = vrcp.pop %v525
      %v575 = vmul.f32 1.0, %v574
      %v576 = vrcp.pop %v526
      %v577 = vmul.f32 1.0, %v576
      %v578 = vrcp.pop %v527
      %v579 = vmul.f32 1.0, %v578
      %v580 = vrcp.pop %v528
      %v581 = vmul.f32 1.0, %v580
      %v582 = vrcp.pop %v529
      %v583 = vmul.f32 1.0, %v582
      %v584 = vrcp.pop %v530
      %v585 = vmul.f32 1.0, %v584
      %v586 = vrcp.pop %v531
      %v587 = vmul.f32 1.0, %v586
      %v588 = vrcp.pop %v532
      %v589 = vmul.f32 1.0, %v588
      %v590 = vrcp.pop %v533
      %v591 = vmul.f32 1.0, %v590
      %v592 = vrcp.pop %v534
      %v593 = vmul.f32 1.0, %v592
      %v594 = vrcp.pop %v535
      %v595 = vmul.f32 1.0, %v594
      %v596 = vrcp.pop %v536
      %v597 = vmul.f32 1.0, %v596
      %v598 = vrcp.pop %v537
      %v599 = vmul.f32 1.0, %v598
      %v600 = vrcp.pop %v538
      %v601 = vmul.f32 1.0, %v600
      %v602 = vrcp.pop %v539
      %v603 = vmul.f32 1.0, %v602
      %636 = vrot.lane.b32.xlu0 %v541, 124
      %v637 = vpop.permute.xlu0 %636
      %638 = vrot.lane.b32.xlu0 %v543, 124
      %v639 = vpop.permute.xlu0 %638
      %640 = vrot.lane.b32.xlu0 %v545, 124
      %v641 = vpop.permute.xlu0 %640
      %642 = vrot.lane.b32.xlu0 %v547, 124
      %v643 = vpop.permute.xlu0 %642
      %644 = vrot.lane.b32.xlu0 %v549, 124
      %v645 = vpop.permute.xlu0 %644
      %646 = vrot.lane.b32.xlu0 %v551, 124
      %v647 = vpop.permute.xlu0 %646
      %648 = vrot.lane.b32.xlu0 %v553, 124
      %v649 = vpop.permute.xlu0 %648
      %650 = vrot.lane.b32.xlu0 %v555, 124
      %v651 = vpop.permute.xlu0 %650
      %652 = vrot.lane.b32.xlu0 %v557, 124
      %v653 = vpop.permute.xlu0 %652
      %654 = vrot.lane.b32.xlu0 %v559, 124
      %v655 = vpop.permute.xlu0 %654
      %656 = vrot.lane.b32.xlu0 %v561, 124
      %v657 = vpop.permute.xlu0 %656
      %658 = vrot.lane.b32.xlu0 %v563, 124
      %v659 = vpop.permute.xlu0 %658
      %660 = vrot.lane.b32.xlu0 %v565, 124
      %v661 = vpop.permute.xlu0 %660
      %662 = vrot.lane.b32.xlu0 %v567, 124
      %v663 = vpop.permute.xlu0 %662
      %664 = vrot.lane.b32.xlu0 %v569, 124
      %v665 = vpop.permute.xlu0 %664
      %666 = vrot.lane.b32.xlu0 %v571, 124
      %v667 = vpop.permute.xlu0 %666
      %668 = vrot.lane.b32.xlu0 %v573, 124
      %v669 = vpop.permute.xlu0 %668
      %670 = vrot.lane.b32.xlu0 %v575, 124
      %v671 = vpop.permute.xlu0 %670
      %672 = vrot.lane.b32.xlu0 %v577, 124
      %v673 = vpop.permute.xlu0 %672
      %674 = vrot.lane.b32.xlu0 %v579, 124
      %v675 = vpop.permute.xlu0 %674
      %676 = vrot.lane.b32.xlu0 %v581, 124
      %v677 = vpop.permute.xlu0 %676
      %678 = vrot.lane.b32.xlu0 %v583, 124
      %v679 = vpop.permute.xlu0 %678
      %680 = vrot.lane.b32.xlu0 %v585, 124
      %v681 = vpop.permute.xlu0 %680
      %682 = vrot.lane.b32.xlu0 %v587, 124
      %v683 = vpop.permute.xlu0 %682
      %684 = vrot.lane.b32.xlu0 %v589, 124
      %v685 = vpop.permute.xlu0 %684
      %686 = vrot.lane.b32.xlu0 %v591, 124
      %v687 = vpop.permute.xlu0 %686
      %688 = vrot.lane.b32.xlu0 %v593, 124
      %v689 = vpop.permute.xlu0 %688
      %690 = vrot.lane.b32.xlu0 %v595, 124
      %v691 = vpop.permute.xlu0 %690
      %692 = vrot.lane.b32.xlu0 %v597, 124
      %v693 = vpop.permute.xlu0 %692
      %694 = vrot.lane.b32.xlu0 %v599, 124
      %v695 = vpop.permute.xlu0 %694
      %696 = vrot.lane.b32.xlu0 %v601, 124
      %v697 = vpop.permute.xlu0 %696
      %698 = vrot.lane.b32.xlu0 %v603, 124
      %v699 = vpop.permute.xlu0 %698
      %v732 = vmul.f32 %v380, %v637
      %v733 = vmul.f32 %v381, %v639
      %v734 = vmul.f32 %v382, %v641
      %v735 = vmul.f32 %v383, %v643
      %v736 = vmul.f32 %v384, %v645
      %v737 = vmul.f32 %v385, %v647
      %v738 = vmul.f32 %v386, %v649
      %v739 = vmul.f32 %v387, %v651
      %v740 = vmul.f32 %v388, %v653
      %v741 = vmul.f32 %v389, %v655
      %v742 = vmul.f32 %v390, %v657
      %v743 = vmul.f32 %v391, %v659
      %v744 = vmul.f32 %v392, %v661
      %v745 = vmul.f32 %v393, %v663
      %v746 = vmul.f32 %v394, %v665
      %v747 = vmul.f32 %v395, %v667
      %v748 = vmul.f32 %v396, %v669
      %v749 = vmul.f32 %v397, %v671
      %v750 = vmul.f32 %v398, %v673
      %v751 = vmul.f32 %v399, %v675
      %v752 = vmul.f32 %v400, %v677
      %v753 = vmul.f32 %v401, %v679
      %v754 = vmul.f32 %v402, %v681
      %v755 = vmul.f32 %v403, %v683
      %v756 = vmul.f32 %v404, %v685
      %v757 = vmul.f32 %v405, %v687
      %v758 = vmul.f32 %v406, %v689
      %v759 = vmul.f32 %v407, %v691
      %v760 = vmul.f32 %v408, %v693
      %v761 = vmul.f32 %v409, %v695
      %v762 = vmul.f32 %v410, %v697
      %v763 = vmul.f32 %v411, %v699
      %vm764 = vcmask 31744
      %765 = vst.msk [vmem:[#allocation2] sm:$0xff] %vm764, 0.0
      %766 = vst.msk [vmem:[#allocation2 + $0x8] sm:$0xff] %vm764, 0.0
      %vm767 = vcmask 25600
      %768 = vst.msk [vmem:[#allocation2 + $0x10] sm:$0x3] %vm767, 0.0
      %769 = vst.msk [vmem:[#allocation2 + $0x18] sm:$0xff] %vm764, 0.0
      %770 = vst.msk [vmem:[#allocation2 + $0x20] sm:$0xff] %vm764, 0.0
      %771 = vst.msk [vmem:[#allocation2 + $0x28] sm:$0x3] %vm767, 0.0
      %772 = vst.msk [vmem:[#allocation2 + $0x30] sm:$0xff] %vm764, 0.0
      %773 = vst.msk [vmem:[#allocation2 + $0x38] sm:$0xff] %vm764, 0.0
      %774 = vst.msk [vmem:[#allocation2 + $0x40] sm:$0x3] %vm767, 0.0
      %775 = vst.msk [vmem:[#allocation2 + $0x48] sm:$0xff] %vm764, 0.0
      %776 = vst.msk [vmem:[#allocation2 + $0x50] sm:$0xff] %vm764, 0.0
      %777 = vst.msk [vmem:[#allocation2 + $0x58] sm:$0x3] %vm767, 0.0
      %778 = vst.msk [vmem:[#allocation2 + $0x60] sm:$0xff] %vm764, 0.0
      %779 = vst.msk [vmem:[#allocation2 + $0x68] sm:$0xff] %vm764, 0.0
      %780 = vst.msk [vmem:[#allocation2 + $0x70] sm:$0x3] %vm767, 0.0
      %781 = vst.msk [vmem:[#allocation2 + $0x78] sm:$0xff] %vm764, 0.0
      %782 = vst.msk [vmem:[#allocation2 + $0x80] sm:$0xff] %vm764, 0.0
      %783 = vst.msk [vmem:[#allocation2 + $0x88] sm:$0x3] %vm767, 0.0
      %784 = vst.msk [vmem:[#allocation2 + $0x90] sm:$0xff] %vm764, 0.0
      %785 = vst.msk [vmem:[#allocation2 + $0x98] sm:$0xff] %vm764, 0.0
      %786 = vst.msk [vmem:[#allocation2 + $0xa0] sm:$0x3] %vm767, 0.0
      %787 = vst.msk [vmem:[#allocation2 + $0xa8] sm:$0xff] %vm764, 0.0
      %788 = vst.msk [vmem:[#allocation2 + $0xb0] sm:$0xff] %vm764, 0.0
      %789 = vst.msk [vmem:[#allocation2 + $0xb8] sm:$0x3] %vm767, 0.0
      %790 = vst.msk [vmem:[#allocation2 + $0xc0] sm:$0xff] %vm764, 0.0
      %791 = vst.msk [vmem:[#allocation2 + $0xc8] sm:$0xff] %vm764, 0.0
      %792 = vst.msk [vmem:[#allocation2 + $0xd0] sm:$0x3] %vm767, 0.0
      %793 = vst.msk [vmem:[#allocation2 + $0xd8] sm:$0xff] %vm764, 0.0
      %794 = vst.msk [vmem:[#allocation2 + $0xe0] sm:$0xff] %vm764, 0.0
      %795 = vst.msk [vmem:[#allocation2 + $0xe8] sm:$0x3] %vm767, 0.0
      %796 = vst.msk [vmem:[#allocation2 + $0xf0] sm:$0xff] %vm764, 0.0
      %797 = vst.msk [vmem:[#allocation2 + $0xf8] sm:$0xff] %vm764, 0.0
      %798 = vst.msk [vmem:[#allocation2 + $0x100] sm:$0x3] %vm767, 0.0
      %799 = vst.msk [vmem:[#allocation2 + $0x108] sm:$0xff] %vm764, 0.0
      %800 = vst.msk [vmem:[#allocation2 + $0x110] sm:$0xff] %vm764, 0.0
      %801 = vst.msk [vmem:[#allocation2 + $0x118] sm:$0x3] %vm767, 0.0
      %802 = vst.msk [vmem:[#allocation2 + $0x120] sm:$0xff] %vm764, 0.0
      %803 = vst.msk [vmem:[#allocation2 + $0x128] sm:$0xff] %vm764, 0.0
      %804 = vst.msk [vmem:[#allocation2 + $0x130] sm:$0x3] %vm767, 0.0
      %805 = vst.msk [vmem:[#allocation2 + $0x138] sm:$0xff] %vm764, 0.0
      %806 = vst.msk [vmem:[#allocation2 + $0x140] sm:$0xff] %vm764, 0.0
      %807 = vst.msk [vmem:[#allocation2 + $0x148] sm:$0x3] %vm767, 0.0
      %808 = vst.msk [vmem:[#allocation2 + $0x150] sm:$0xff] %vm764, 0.0
      %809 = vst.msk [vmem:[#allocation2 + $0x158] sm:$0xff] %vm764, 0.0
      %810 = vst.msk [vmem:[#allocation2 + $0x160] sm:$0x3] %vm767, 0.0
      %811 = vst.msk [vmem:[#allocation2 + $0x168] sm:$0xff] %vm764, 0.0
      %812 = vst.msk [vmem:[#allocation2 + $0x170] sm:$0xff] %vm764, 0.0
      %813 = vst.msk [vmem:[#allocation2 + $0x178] sm:$0x3] %vm767, 0.0
      %814 = vst.msk [vmem:[#allocation2 + $0x180] sm:$0xff] %vm764, 0.0
      %815 = vst.msk [vmem:[#allocation2 + $0x188] sm:$0xff] %vm764, 0.0
      %816 = vst.msk [vmem:[#allocation2 + $0x190] sm:$0x3] %vm767, 0.0
      %817 = vst.msk [vmem:[#allocation2 + $0x198] sm:$0xff] %vm764, 0.0
      %818 = vst.msk [vmem:[#allocation2 + $0x1a0] sm:$0xff] %vm764, 0.0
      %819 = vst.msk [vmem:[#allocation2 + $0x1a8] sm:$0x3] %vm767, 0.0
      %s820 = scalar_lea.vmem [#allocation2], 24
      %821 = vst.msk [vmem:[%s820 + $0x1] sm:$0xff] %vm764, %v732
      %822 = vst.msk [vmem:[%s820 + $0x9] sm:$0xff] %vm764, %v733
      %823 = vst.msk [vmem:[%s820 + $0x19] sm:$0xff] %vm764, %v734
      %824 = vst.msk [vmem:[%s820 + $0x21] sm:$0xff] %vm764, %v735
      %825 = vst.msk [vmem:[%s820 + $0x31] sm:$0xff] %vm764, %v736
      %826 = vst.msk [vmem:[%s820 + $0x39] sm:$0xff] %vm764, %v737
      %827 = vst.msk [vmem:[%s820 + $0x49] sm:$0xff] %vm764, %v738
      %828 = vst.msk [vmem:[%s820 + $0x51] sm:$0xff] %vm764, %v739
      %829 = vst.msk [vmem:[%s820 + $0x61] sm:$0xff] %vm764, %v740
      %830 = vst.msk [vmem:[%s820 + $0x69] sm:$0xff] %vm764, %v741
      %831 = vst.msk [vmem:[%s820 + $0x79] sm:$0xff] %vm764, %v742
      %832 = vst.msk [vmem:[%s820 + $0x81] sm:$0xff] %vm764, %v743
      %833 = vst.msk [vmem:[%s820 + $0x91] sm:$0xff] %vm764, %v744
      %834 = vst.msk [vmem:[%s820 + $0x99] sm:$0xff] %vm764, %v745
      %835 = vst.msk [vmem:[%s820 + $0xa9] sm:$0xff] %vm764, %v746
      %836 = vst.msk [vmem:[%s820 + $0xb1] sm:$0xff] %vm764, %v747
      %837 = vst.msk [vmem:[%s820 + $0xc1] sm:$0xff] %vm764, %v748
      %838 = vst.msk [vmem:[%s820 + $0xc9] sm:$0xff] %vm764, %v749
      %839 = vst.msk [vmem:[%s820 + $0xd9] sm:$0xff] %vm764, %v750
      %840 = vst.msk [vmem:[%s820 + $0xe1] sm:$0xff] %vm764, %v751
      %841 = vst.msk [vmem:[%s820 + $0xf1] sm:$0xff] %vm764, %v752
      %842 = vst.msk [vmem:[%s820 + $0xf9] sm:$0xff] %vm764, %v753
      %843 = vst.msk [vmem:[%s820 + $0x109] sm:$0xff] %vm764, %v754
      %844 = vst.msk [vmem:[%s820 + $0x111] sm:$0xff] %vm764, %v755
      %845 = vst.msk [vmem:[%s820 + $0x121] sm:$0xff] %vm764, %v756
      %846 = vst.msk [vmem:[%s820 + $0x129] sm:$0xff] %vm764, %v757
      %847 = vst.msk [vmem:[%s820 + $0x139] sm:$0xff] %vm764, %v758
      %848 = vst.msk [vmem:[%s820 + $0x141] sm:$0xff] %vm764, %v759
      %849 = vst.msk [vmem:[%s820 + $0x151] sm:$0xff] %vm764, %v760
      %850 = vst.msk [vmem:[%s820 + $0x159] sm:$0xff] %vm764, %v761
      %851 = vst.msk [vmem:[%s820 + $0x169] sm:$0xff] %vm764, %v762
      %852 = vst.msk [vmem:[%s820 + $0x171] sm:$0xff] %vm764, %v763
      %v853 = vld [vmem:[#allocation2] sm:$0xff]
      %v854 = vld [vmem:[#allocation2 + $0x8] sm:$0xff]
      %v855 = vld [vmem:[#allocation2 + $0x18] sm:$0xff]
      %v856 = vld [vmem:[#allocation2 + $0x20] sm:$0xff]
      %v857 = vld [vmem:[#allocation2 + $0x30] sm:$0xff]
      %v858 = vld [vmem:[#allocation2 + $0x38] sm:$0xff]
      %v859 = vld [vmem:[#allocation2 + $0x48] sm:$0xff]
      %v860 = vld [vmem:[#allocation2 + $0x50] sm:$0xff]
      %v861 = vld [vmem:[#allocation2 + $0x60] sm:$0xff]
      %v862 = vld [vmem:[#allocation2 + $0x68] sm:$0xff]
      %v863 = vld [vmem:[#allocation2 + $0x78] sm:$0xff]
      %v864 = vld [vmem:[#allocation2 + $0x80] sm:$0xff]
      %v865 = vld [vmem:[#allocation2 + $0x90] sm:$0xff]
      %v866 = vld [vmem:[#allocation2 + $0x98] sm:$0xff]
      %v867 = vld [vmem:[#allocation2 + $0xa8] sm:$0xff]
      %v868 = vld [vmem:[#allocation2 + $0xb0] sm:$0xff]
      %v869 = vld [vmem:[#allocation2 + $0xc0] sm:$0xff]
      %v870 = vld [vmem:[#allocation2 + $0xc8] sm:$0xff]
      %v871 = vld [vmem:[#allocation2 + $0xd8] sm:$0xff]
      %v872 = vld [vmem:[#allocation2 + $0xe0] sm:$0xff]
      %v873 = vld [vmem:[#allocation2 + $0xf0] sm:$0xff]
      %v874 = vld [vmem:[#allocation2 + $0xf8] sm:$0xff]
      %v875 = vld [vmem:[#allocation2 + $0x108] sm:$0xff]
      %v876 = vld [vmem:[#allocation2 + $0x110] sm:$0xff]
      %v877 = vld [vmem:[#allocation2 + $0x120] sm:$0xff]
      %v878 = vld [vmem:[#allocation2 + $0x128] sm:$0xff]
      %v879 = vld [vmem:[#allocation2 + $0x138] sm:$0xff]
      %v880 = vld [vmem:[#allocation2 + $0x140] sm:$0xff]
      %v881 = vld [vmem:[#allocation2 + $0x150] sm:$0xff]
      %v882 = vld [vmem:[#allocation2 + $0x158] sm:$0xff]
      %v883 = vld [vmem:[#allocation2 + $0x168] sm:$0xff]
      %v884 = vld [vmem:[#allocation2 + $0x170] sm:$0xff]
      %v885 = vpack.c.bf16 %v854, %v853
      %v886 = vpack.c.bf16 %v856, %v855
      %v887 = vpack.c.bf16 %v858, %v857
      %v888 = vpack.c.bf16 %v860, %v859
      %v889 = vpack.c.bf16 %v862, %v861
      %v890 = vpack.c.bf16 %v864, %v863
      %v891 = vpack.c.bf16 %v866, %v865
      %v892 = vpack.c.bf16 %v868, %v867
      %v893 = vpack.c.bf16 %v870, %v869
      %v894 = vpack.c.bf16 %v872, %v871
      %v895 = vpack.c.bf16 %v874, %v873
      %v896 = vpack.c.bf16 %v876, %v875
      %v897 = vpack.c.bf16 %v878, %v877
      %v898 = vpack.c.bf16 %v880, %v879
      %v899 = vpack.c.bf16 %v882, %v881
      %v900 = vpack.c.bf16 %v884, %v883
      %901 = vst.msk [vmem:[#allocation3] sm:$0xff] %vm764, %v885
      %902 = vst.msk [vmem:[#allocation3 + $0x8] sm:$0xff] %vm764, %v886
      %903 = vst.msk [vmem:[#allocation3 + $0x10] sm:$0xff] %vm764, %v887
      %904 = vst.msk [vmem:[#allocation3 + $0x18] sm:$0xff] %vm764, %v888
      %905 = vst.msk [vmem:[#allocation3 + $0x20] sm:$0xff] %vm764, %v889
      %906 = vst.msk [vmem:[#allocation3 + $0x28] sm:$0xff] %vm764, %v890
      %907 = vst.msk [vmem:[#allocation3 + $0x30] sm:$0xff] %vm764, %v891
      %908 = vst.msk [vmem:[#allocation3 + $0x38] sm:$0xff] %vm764, %v892
      %909 = vst.msk [vmem:[#allocation3 + $0x40] sm:$0xff] %vm764, %v893
      %910 = vst.msk [vmem:[#allocation3 + $0x48] sm:$0xff] %vm764, %v894
      %911 = vst.msk [vmem:[#allocation3 + $0x50] sm:$0xff] %vm764, %v895
      %912 = vst.msk [vmem:[#allocation3 + $0x58] sm:$0xff] %vm764, %v896
      %913 = vst.msk [vmem:[#allocation3 + $0x60] sm:$0xff] %vm764, %v897
      %914 = vst.msk [vmem:[#allocation3 + $0x68] sm:$0xff] %vm764, %v898
      %915 = vst.msk [vmem:[#allocation3 + $0x70] sm:$0xff] %vm764, %v899
      %916 = vst.msk [vmem:[#allocation3 + $0x78] sm:$0xff] %vm764, %v900
      %v917 = vld [vmem:[#allocation2 + $0x1] sm:$0xff]
      %v918 = vld [vmem:[#allocation2 + $0x9] sm:$0xff]
      %v919 = vld [vmem:[#allocation2 + $0x19] sm:$0xff]
      %v920 = vld [vmem:[#allocation2 + $0x21] sm:$0xff]
      %v921 = vld [vmem:[#allocation2 + $0x31] sm:$0xff]
      %v922 = vld [vmem:[#allocation2 + $0x39] sm:$0xff]
      %v923 = vld [vmem:[#allocation2 + $0x49] sm:$0xff]
      %v924 = vld [vmem:[#allocation2 + $0x51] sm:$0xff]
      %v925 = vld [vmem:[#allocation2 + $0x61] sm:$0xff]
      %v926 = vld [vmem:[#allocation2 + $0x69] sm:$0xff]
      %v927 = vld [vmem:[#allocation2 + $0x79] sm:$0xff]
      %v928 = vld [vmem:[#allocation2 + $0x81] sm:$0xff]
      %v929 = vld [vmem:[#allocation2 + $0x91] sm:$0xff]
      %v930 = vld [vmem:[#allocation2 + $0x99] sm:$0xff]
      %v931 = vld [vmem:[#allocation2 + $0xa9] sm:$0xff]
      %v932 = vld [vmem:[#allocation2 + $0xb1] sm:$0xff]
      %v933 = vld [vmem:[#allocation2 + $0xc1] sm:$0xff]
      %v934 = vld [vmem:[#allocation2 + $0xc9] sm:$0xff]
      %v935 = vld [vmem:[#allocation2 + $0xd9] sm:$0xff]
      %v936 = vld [vmem:[#allocation2 + $0xe1] sm:$0xff]
      %v937 = vld [vmem:[#allocation2 + $0xf1] sm:$0xff]
      %v938 = vld [vmem:[#allocation2 + $0xf9] sm:$0xff]
      %v939 = vld [vmem:[#allocation2 + $0x109] sm:$0xff]
      %v940 = vld [vmem:[#allocation2 + $0x111] sm:$0xff]
      %v941 = vld [vmem:[#allocation2 + $0x121] sm:$0xff]
      %v942 = vld [vmem:[#allocation2 + $0x129] sm:$0xff]
      %v943 = vld [vmem:[#allocation2 + $0x139] sm:$0xff]
      %v944 = vld [vmem:[#allocation2 + $0x141] sm:$0xff]
      %v945 = vld [vmem:[#allocation2 + $0x151] sm:$0xff]
      %v946 = vld [vmem:[#allocation2 + $0x159] sm:$0xff]
      %v947 = vld [vmem:[#allocation2 + $0x169] sm:$0xff]
      %v948 = vld [vmem:[#allocation2 + $0x171] sm:$0xff]
      %v949 = vpack.c.bf16 %v918, %v917
      %v950 = vpack.c.bf16 %v920, %v919
      %v951 = vpack.c.bf16 %v922, %v921
      %v952 = vpack.c.bf16 %v924, %v923
      %v953 = vpack.c.bf16 %v926, %v925
      %v954 = vpack.c.bf16 %v928, %v927
      %v955 = vpack.c.bf16 %v930, %v929
      %v956 = vpack.c.bf16 %v932, %v931
      %v957 = vpack.c.bf16 %v934, %v933
      %v958 = vpack.c.bf16 %v936, %v935
      %v959 = vpack.c.bf16 %v938, %v937
      %v960 = vpack.c.bf16 %v940, %v939
      %v961 = vpack.c.bf16 %v942, %v941
      %v962 = vpack.c.bf16 %v944, %v943
      %v963 = vpack.c.bf16 %v946, %v945
      %v964 = vpack.c.bf16 %v948, %v947
      %981 = vrot.lane.b32.xlu0 %v949, 4
      %v982 = vpop.permute.xlu0 %981
      %983 = vrot.lane.b32.xlu0 %v950, 4
      %v984 = vpop.permute.xlu0 %983
      %985 = vrot.lane.b32.xlu0 %v951, 4
      %v986 = vpop.permute.xlu0 %985
      %987 = vrot.lane.b32.xlu0 %v952, 4
      %v988 = vpop.permute.xlu0 %987
      %989 = vrot.lane.b32.xlu0 %v953, 4
      %v990 = vpop.permute.xlu0 %989
      %991 = vrot.lane.b32.xlu0 %v954, 4
      %v992 = vpop.permute.xlu0 %991
      %993 = vrot.lane.b32.xlu0 %v955, 4
      %v994 = vpop.permute.xlu0 %993
      %995 = vrot.lane.b32.xlu0 %v956, 4
      %v996 = vpop.permute.xlu0 %995
      %997 = vrot.lane.b32.xlu0 %v957, 4
      %v998 = vpop.permute.xlu0 %997
      %999 = vrot.lane.b32.xlu0 %v958, 4
      %v1000 = vpop.permute.xlu0 %999
      %1001 = vrot.lane.b32.xlu0 %v959, 4
      %v1002 = vpop.permute.xlu0 %1001
      %1003 = vrot.lane.b32.xlu0 %v960, 4
      %v1004 = vpop.permute.xlu0 %1003
      %1005 = vrot.lane.b32.xlu0 %v961, 4
      %v1006 = vpop.permute.xlu0 %1005
      %1007 = vrot.lane.b32.xlu0 %v962, 4
      %v1008 = vpop.permute.xlu0 %1007
      %1009 = vrot.lane.b32.xlu0 %v963, 4
      %v1010 = vpop.permute.xlu0 %1009
      %1011 = vrot.lane.b32.xlu0 %v964, 4
      %v1012 = vpop.permute.xlu0 %1011
      %vm1029 = vcmask 64544
      %1030 = vst.msk [vmem:[#allocation3] sm:$0xff] %vm1029, %v982
      %1031 = vst.msk [vmem:[#allocation3 + $0x8] sm:$0xff] %vm1029, %v984
      %1032 = vst.msk [vmem:[#allocation3 + $0x10] sm:$0xff] %vm1029, %v986
      %1033 = vst.msk [vmem:[#allocation3 + $0x18] sm:$0xff] %vm1029, %v988
      %1034 = vst.msk [vmem:[#allocation3 + $0x20] sm:$0xff] %vm1029, %v990
      %1035 = vst.msk [vmem:[#allocation3 + $0x28] sm:$0xff] %vm1029, %v992
      %1036 = vst.msk [vmem:[#allocation3 + $0x30] sm:$0xff] %vm1029, %v994
      %1037 = vst.msk [vmem:[#allocation3 + $0x38] sm:$0xff] %vm1029, %v996
      %1038 = vst.msk [vmem:[#allocation3 + $0x40] sm:$0xff] %vm1029, %v998
      %1039 = vst.msk [vmem:[#allocation3 + $0x48] sm:$0xff] %vm1029, %v1000
      %1040 = vst.msk [vmem:[#allocation3 + $0x50] sm:$0xff] %vm1029, %v1002
      %1041 = vst.msk [vmem:[#allocation3 + $0x58] sm:$0xff] %vm1029, %v1004
      %1042 = vst.msk [vmem:[#allocation3 + $0x60] sm:$0xff] %vm1029, %v1006
      %1043 = vst.msk [vmem:[#allocation3 + $0x68] sm:$0xff] %vm1029, %v1008
      %1044 = vst.msk [vmem:[#allocation3 + $0x70] sm:$0xff] %vm1029, %v1010
      %1045 = vst.msk [vmem:[#allocation3 + $0x78] sm:$0xff] %vm1029, %v1012
      %v1046 = vld [vmem:[#allocation2 + $0x2] sm:$0xff]
      %v1047 = vld [vmem:[#allocation2 + $0xa] sm:$0xff]
      %v1048 = vld [vmem:[#allocation2 + $0x1a] sm:$0xff]
      %v1049 = vld [vmem:[#allocation2 + $0x22] sm:$0xff]
      %v1050 = vld [vmem:[#allocation2 + $0x32] sm:$0xff]
      %v1051 = vld [vmem:[#allocation2 + $0x3a] sm:$0xff]
      %v1052 = vld [vmem:[#allocation2 + $0x4a] sm:$0xff]
      %v1053 = vld [vmem:[#allocation2 + $0x52] sm:$0xff]
      %v1054 = vld [vmem:[#allocation2 + $0x62] sm:$0xff]
      %v1055 = vld [vmem:[#allocation2 + $0x6a] sm:$0xff]
      %v1056 = vld [vmem:[#allocation2 + $0x7a] sm:$0xff]
      %v1057 = vld [vmem:[#allocation2 + $0x82] sm:$0xff]
      %v1058 = vld [vmem:[#allocation2 + $0x92] sm:$0xff]
      %v1059 = vld [vmem:[#allocation2 + $0x9a] sm:$0xff]
      %v1060 = vld [vmem:[#allocation2 + $0xaa] sm:$0xff]
      %v1061 = vld [vmem:[#allocation2 + $0xb2] sm:$0xff]
      %v1062 = vld [vmem:[#allocation2 + $0xc2] sm:$0xff]
      %v1063 = vld [vmem:[#allocation2 + $0xca] sm:$0xff]
      %v1064 = vld [vmem:[#allocation2 + $0xda] sm:$0xff]
      %v1065 = vld [vmem:[#allocation2 + $0xe2] sm:$0xff]
      %v1066 = vld [vmem:[#allocation2 + $0xf2] sm:$0xff]
      %v1067 = vld [vmem:[#allocation2 + $0xfa] sm:$0xff]
      %v1068 = vld [vmem:[#allocation2 + $0x10a] sm:$0xff]
      %v1069 = vld [vmem:[#allocation2 + $0x112] sm:$0xff]
      %v1070 = vld [vmem:[#allocation2 + $0x122] sm:$0xff]
      %v1071 = vld [vmem:[#allocation2 + $0x12a] sm:$0xff]
      %v1072 = vld [vmem:[#allocation2 + $0x13a] sm:$0xff]
      %v1073 = vld [vmem:[#allocation2 + $0x142] sm:$0xff]
      %v1074 = vld [vmem:[#allocation2 + $0x152] sm:$0xff]
      %v1075 = vld [vmem:[#allocation2 + $0x15a] sm:$0xff]
      %v1076 = vld [vmem:[#allocation2 + $0x16a] sm:$0xff]
      %v1077 = vld [vmem:[#allocation2 + $0x172] sm:$0xff]
      %v1078 = vpack.c.bf16 %v1047, %v1046
      %v1079 = vpack.c.bf16 %v1049, %v1048
      %v1080 = vpack.c.bf16 %v1051, %v1050
      %v1081 = vpack.c.bf16 %v1053, %v1052
      %v1082 = vpack.c.bf16 %v1055, %v1054
      %v1083 = vpack.c.bf16 %v1057, %v1056
      %v1084 = vpack.c.bf16 %v1059, %v1058
      %v1085 = vpack.c.bf16 %v1061, %v1060
      %v1086 = vpack.c.bf16 %v1063, %v1062
      %v1087 = vpack.c.bf16 %v1065, %v1064
      %v1088 = vpack.c.bf16 %v1067, %v1066
      %v1089 = vpack.c.bf16 %v1069, %v1068
      %v1090 = vpack.c.bf16 %v1071, %v1070
      %v1091 = vpack.c.bf16 %v1073, %v1072
      %v1092 = vpack.c.bf16 %v1075, %v1074
      %v1093 = vpack.c.bf16 %v1077, %v1076
      %1110 = vrot.lane.b32.xlu0 %v1078, 8
      %v1111 = vpop.permute.xlu0 %1110
      %1112 = vrot.lane.b32.xlu0 %v1079, 8
      %v1113 = vpop.permute.xlu0 %1112
      %1114 = vrot.lane.b32.xlu0 %v1080, 8
      %v1115 = vpop.permute.xlu0 %1114
      %1116 = vrot.lane.b32.xlu0 %v1081, 8
      %v1117 = vpop.permute.xlu0 %1116
      %1118 = vrot.lane.b32.xlu0 %v1082, 8
      %v1119 = vpop.permute.xlu0 %1118
      %1120 = vrot.lane.b32.xlu0 %v1083, 8
      %v1121 = vpop.permute.xlu0 %1120
      %1122 = vrot.lane.b32.xlu0 %v1084, 8
      %v1123 = vpop.permute.xlu0 %1122
      %1124 = vrot.lane.b32.xlu0 %v1085, 8
      %v1125 = vpop.permute.xlu0 %1124
      %1126 = vrot.lane.b32.xlu0 %v1086, 8
      %v1127 = vpop.permute.xlu0 %1126
      %1128 = vrot.lane.b32.xlu0 %v1087, 8
      %v1129 = vpop.permute.xlu0 %1128
      %1130 = vrot.lane.b32.xlu0 %v1088, 8
      %v1131 = vpop.permute.xlu0 %1130
      %1132 = vrot.lane.b32.xlu0 %v1089, 8
      %v1133 = vpop.permute.xlu0 %1132
      %1134 = vrot.lane.b32.xlu0 %v1090, 8
      %v1135 = vpop.permute.xlu0 %1134
      %1136 = vrot.lane.b32.xlu0 %v1091, 8
      %v1137 = vpop.permute.xlu0 %1136
      %1138 = vrot.lane.b32.xlu0 %v1092, 8
      %v1139 = vpop.permute.xlu0 %1138
      %1140 = vrot.lane.b32.xlu0 %v1093, 8
      %v1141 = vpop.permute.xlu0 %1140
      %vm1158 = vcmask 97344
      %1159 = vst.msk [vmem:[#allocation3] sm:$0xff] %vm1158, %v1111
      %1160 = vst.msk [vmem:[#allocation3 + $0x8] sm:$0xff] %vm1158, %v1113
      %1161 = vst.msk [vmem:[#allocation3 + $0x10] sm:$0xff] %vm1158, %v1115
      %1162 = vst.msk [vmem:[#allocation3 + $0x18] sm:$0xff] %vm1158, %v1117
      %1163 = vst.msk [vmem:[#allocation3 + $0x20] sm:$0xff] %vm1158, %v1119
      %1164 = vst.msk [vmem:[#allocation3 + $0x28] sm:$0xff] %vm1158, %v1121
      %1165 = vst.msk [vmem:[#allocation3 + $0x30] sm:$0xff] %vm1158, %v1123
      %1166 = vst.msk [vmem:[#allocation3 + $0x38] sm:$0xff] %vm1158, %v1125
      %1167 = vst.msk [vmem:[#allocation3 + $0x40] sm:$0xff] %vm1158, %v1127
      %1168 = vst.msk [vmem:[#allocation3 + $0x48] sm:$0xff] %vm1158, %v1129
      %1169 = vst.msk [vmem:[#allocation3 + $0x50] sm:$0xff] %vm1158, %v1131
      %1170 = vst.msk [vmem:[#allocation3 + $0x58] sm:$0xff] %vm1158, %v1133
      %1171 = vst.msk [vmem:[#allocation3 + $0x60] sm:$0xff] %vm1158, %v1135
      %1172 = vst.msk [vmem:[#allocation3 + $0x68] sm:$0xff] %vm1158, %v1137
      %1173 = vst.msk [vmem:[#allocation3 + $0x70] sm:$0xff] %vm1158, %v1139
      %1174 = vst.msk [vmem:[#allocation3 + $0x78] sm:$0xff] %vm1158, %v1141
      %v1175 = vld [vmem:[%s820] sm:$0xff]
      %v1176 = vld [vmem:[%s820 + $0x8] sm:$0xff]
      %v1177 = vld [vmem:[%s820 + $0x18] sm:$0xff]
      %v1178 = vld [vmem:[%s820 + $0x20] sm:$0xff]
      %v1179 = vld [vmem:[%s820 + $0x30] sm:$0xff]
      %v1180 = vld [vmem:[%s820 + $0x38] sm:$0xff]
      %v1181 = vld [vmem:[%s820 + $0x48] sm:$0xff]
      %v1182 = vld [vmem:[%s820 + $0x50] sm:$0xff]
      %v1183 = vld [vmem:[%s820 + $0x60] sm:$0xff]
      %v1184 = vld [vmem:[%s820 + $0x68] sm:$0xff]
      %v1185 = vld [vmem:[%s820 + $0x78] sm:$0xff]
      %v1186 = vld [vmem:[%s820 + $0x80] sm:$0xff]
      %v1187 = vld [vmem:[%s820 + $0x90] sm:$0xff]
      %v1188 = vld [vmem:[%s820 + $0x98] sm:$0xff]
      %v1189 = vld [vmem:[%s820 + $0xa8] sm:$0xff]
      %v1190 = vld [vmem:[%s820 + $0xb0] sm:$0xff]
      %v1191 = vld [vmem:[%s820 + $0xc0] sm:$0xff]
      %v1192 = vld [vmem:[%s820 + $0xc8] sm:$0xff]
      %v1193 = vld [vmem:[%s820 + $0xd8] sm:$0xff]
      %v1194 = vld [vmem:[%s820 + $0xe0] sm:$0xff]
      %v1195 = vld [vmem:[%s820 + $0xf0] sm:$0xff]
      %v1196 = vld [vmem:[%s820 + $0xf8] sm:$0xff]
      %v1197 = vld [vmem:[%s820 + $0x108] sm:$0xff]
      %v1198 = vld [vmem:[%s820 + $0x110] sm:$0xff]
      %v1199 = vld [vmem:[%s820 + $0x120] sm:$0xff]
      %v1200 = vld [vmem:[%s820 + $0x128] sm:$0xff]
      %v1201 = vld [vmem:[%s820 + $0x138] sm:$0xff]
      %v1202 = vld [vmem:[%s820 + $0x140] sm:$0xff]
      %v1203 = vld [vmem:[%s820 + $0x150] sm:$0xff]
      %v1204 = vld [vmem:[%s820 + $0x158] sm:$0xff]
      %v1205 = vld [vmem:[%s820 + $0x168] sm:$0xff]
      %v1206 = vld [vmem:[%s820 + $0x170] sm:$0xff]
      %v1207 = vpack.c.bf16 %v1176, %v1175
      %v1208 = vpack.c.bf16 %v1178, %v1177
      %v1209 = vpack.c.bf16 %v1180, %v1179
      %v1210 = vpack.c.bf16 %v1182, %v1181
      %v1211 = vpack.c.bf16 %v1184, %v1183
      %v1212 = vpack.c.bf16 %v1186, %v1185
      %v1213 = vpack.c.bf16 %v1188, %v1187
      %v1214 = vpack.c.bf16 %v1190, %v1189
      %v1215 = vpack.c.bf16 %v1192, %v1191
      %v1216 = vpack.c.bf16 %v1194, %v1193
      %v1217 = vpack.c.bf16 %v1196, %v1195
      %v1218 = vpack.c.bf16 %v1198, %v1197
      %v1219 = vpack.c.bf16 %v1200, %v1199
      %v1220 = vpack.c.bf16 %v1202, %v1201
      %v1221 = vpack.c.bf16 %v1204, %v1203
      %v1222 = vpack.c.bf16 %v1206, %v1205
      %1239 = vrot.lane.b32.xlu0 %v1207, 12
      %v1240 = vpop.permute.xlu0 %1239
      %1241 = vrot.lane.b32.xlu0 %v1208, 12
      %v1242 = vpop.permute.xlu0 %1241
      %1243 = vrot.lane.b32.xlu0 %v1209, 12
      %v1244 = vpop.permute.xlu0 %1243
      %1245 = vrot.lane.b32.xlu0 %v1210, 12
      %v1246 = vpop.permute.xlu0 %1245
      %1247 = vrot.lane.b32.xlu0 %v1211, 12
      %v1248 = vpop.permute.xlu0 %1247
      %1249 = vrot.lane.b32.xlu0 %v1212, 12
      %v1250 = vpop.permute.xlu0 %1249
      %1251 = vrot.lane.b32.xlu0 %v1213, 12
      %v1252 = vpop.permute.xlu0 %1251
      %1253 = vrot.lane.b32.xlu0 %v1214, 12
      %v1254 = vpop.permute.xlu0 %1253
      %1255 = vrot.lane.b32.xlu0 %v1215, 12
      %v1256 = vpop.permute.xlu0 %1255
      %1257 = vrot.lane.b32.xlu0 %v1216, 12
      %v1258 = vpop.permute.xlu0 %1257
      %1259 = vrot.lane.b32.xlu0 %v1217, 12
      %v1260 = vpop.permute.xlu0 %1259
      %1261 = vrot.lane.b32.xlu0 %v1218, 12
      %v1262 = vpop.permute.xlu0 %1261
      %1263 = vrot.lane.b32.xlu0 %v1219, 12
      %v1264 = vpop.permute.xlu0 %1263
      %1265 = vrot.lane.b32.xlu0 %v1220, 12
      %v1266 = vpop.permute.xlu0 %1265
      %1267 = vrot.lane.b32.xlu0 %v1221, 12
      %v1268 = vpop.permute.xlu0 %1267
      %1269 = vrot.lane.b32.xlu0 %v1222, 12
      %v1270 = vpop.permute.xlu0 %1269
      %vm1287 = vcmask 130144
      %1288 = vst.msk [vmem:[#allocation3] sm:$0xff] %vm1287, %v1240
      %1289 = vst.msk [vmem:[#allocation3 + $0x8] sm:$0xff] %vm1287, %v1242
      %1290 = vst.msk [vmem:[#allocation3 + $0x10] sm:$0xff] %vm1287, %v1244
      %1291 = vst.msk [vmem:[#allocation3 + $0x18] sm:$0xff] %vm1287, %v1246
      %1292 = vst.msk [vmem:[#allocation3 + $0x20] sm:$0xff] %vm1287, %v1248
      %1293 = vst.msk [vmem:[#allocation3 + $0x28] sm:$0xff] %vm1287, %v1250
      %1294 = vst.msk [vmem:[#allocation3 + $0x30] sm:$0xff] %vm1287, %v1252
      %1295 = vst.msk [vmem:[#allocation3 + $0x38] sm:$0xff] %vm1287, %v1254
      %1296 = vst.msk [vmem:[#allocation3 + $0x40] sm:$0xff] %vm1287, %v1256
      %1297 = vst.msk [vmem:[#allocation3 + $0x48] sm:$0xff] %vm1287, %v1258
      %1298 = vst.msk [vmem:[#allocation3 + $0x50] sm:$0xff] %vm1287, %v1260
      %1299 = vst.msk [vmem:[#allocation3 + $0x58] sm:$0xff] %vm1287, %v1262
      %1300 = vst.msk [vmem:[#allocation3 + $0x60] sm:$0xff] %vm1287, %v1264
      %1301 = vst.msk [vmem:[#allocation3 + $0x68] sm:$0xff] %vm1287, %v1266
      %1302 = vst.msk [vmem:[#allocation3 + $0x70] sm:$0xff] %vm1287, %v1268
      %1303 = vst.msk [vmem:[#allocation3 + $0x78] sm:$0xff] %vm1287, %v1270
      %v1304 = vld [vmem:[%s820 + $0x1] sm:$0xff]
      %v1305 = vld [vmem:[%s820 + $0x9] sm:$0xff]
      %v1306 = vld [vmem:[%s820 + $0x19] sm:$0xff]
      %v1307 = vld [vmem:[%s820 + $0x21] sm:$0xff]
      %v1308 = vld [vmem:[%s820 + $0x31] sm:$0xff]
      %v1309 = vld [vmem:[%s820 + $0x39] sm:$0xff]
      %v1310 = vld [vmem:[%s820 + $0x49] sm:$0xff]
      %v1311 = vld [vmem:[%s820 + $0x51] sm:$0xff]
      %v1312 = vld [vmem:[%s820 + $0x61] sm:$0xff]
      %v1313 = vld [vmem:[%s820 + $0x69] sm:$0xff]
      %v1314 = vld [vmem:[%s820 + $0x79] sm:$0xff]
      %v1315 = vld [vmem:[%s820 + $0x81] sm:$0xff]
      %v1316 = vld [vmem:[%s820 + $0x91] sm:$0xff]
      %v1317 = vld [vmem:[%s820 + $0x99] sm:$0xff]
      %v1318 = vld [vmem:[%s820 + $0xa9] sm:$0xff]
      %v1319 = vld [vmem:[%s820 + $0xb1] sm:$0xff]
      %v1320 = vld [vmem:[%s820 + $0xc1] sm:$0xff]
      %v1321 = vld [vmem:[%s820 + $0xc9] sm:$0xff]
      %v1322 = vld [vmem:[%s820 + $0xd9] sm:$0xff]
      %v1323 = vld [vmem:[%s820 + $0xe1] sm:$0xff]
      %v1324 = vld [vmem:[%s820 + $0xf1] sm:$0xff]
      %v1325 = vld [vmem:[%s820 + $0xf9] sm:$0xff]
      %v1326 = vld [vmem:[%s820 + $0x109] sm:$0xff]
      %v1327 = vld [vmem:[%s820 + $0x111] sm:$0xff]
      %v1328 = vld [vmem:[%s820 + $0x121] sm:$0xff]
      %v1329 = vld [vmem:[%s820 + $0x129] sm:$0xff]
      %v1330 = vld [vmem:[%s820 + $0x139] sm:$0xff]
      %v1331 = vld [vmem:[%s820 + $0x141] sm:$0xff]
      %v1332 = vld [vmem:[%s820 + $0x151] sm:$0xff]
      %v1333 = vld [vmem:[%s820 + $0x159] sm:$0xff]
      %v1334 = vld [vmem:[%s820 + $0x169] sm:$0xff]
      %v1335 = vld [vmem:[%s820 + $0x171] sm:$0xff]
      %v1336 = vpack.c.bf16 %v1305, %v1304
      %v1337 = vpack.c.bf16 %v1307, %v1306
      %v1338 = vpack.c.bf16 %v1309, %v1308
      %v1339 = vpack.c.bf16 %v1311, %v1310
      %v1340 = vpack.c.bf16 %v1313, %v1312
      %v1341 = vpack.c.bf16 %v1315, %v1314
      %v1342 = vpack.c.bf16 %v1317, %v1316
      %v1343 = vpack.c.bf16 %v1319, %v1318
      %v1344 = vpack.c.bf16 %v1321, %v1320
      %v1345 = vpack.c.bf16 %v1323, %v1322
      %v1346 = vpack.c.bf16 %v1325, %v1324
      %v1347 = vpack.c.bf16 %v1327, %v1326
      %v1348 = vpack.c.bf16 %v1329, %v1328
      %v1349 = vpack.c.bf16 %v1331, %v1330
      %v1350 = vpack.c.bf16 %v1333, %v1332
      %v1351 = vpack.c.bf16 %v1335, %v1334
      %1368 = vrot.lane.b32.xlu0 %v1336, 16
      %v1369 = vpop.permute.xlu0 %1368
      %1370 = vrot.lane.b32.xlu0 %v1337, 16
      %v1371 = vpop.permute.xlu0 %1370
      %1372 = vrot.lane.b32.xlu0 %v1338, 16
      %v1373 = vpop.permute.xlu0 %1372
      %1374 = vrot.lane.b32.xlu0 %v1339, 16
      %v1375 = vpop.permute.xlu0 %1374
      %1376 = vrot.lane.b32.xlu0 %v1340, 16
      %v1377 = vpop.permute.xlu0 %1376
      %1378 = vrot.lane.b32.xlu0 %v1341, 16
      %v1379 = vpop.permute.xlu0 %1378
      %1380 = vrot.lane.b32.xlu0 %v1342, 16
      %v1381 = vpop.permute.xlu0 %1380
      %1382 = vrot.lane.b32.xlu0 %v1343, 16
      %v1383 = vpop.permute.xlu0 %1382
      %1384 = vrot.lane.b32.xlu0 %v1344, 16
      %v1385 = vpop.permute.xlu0 %1384
      %1386 = vrot.lane.b32.xlu0 %v1345, 16
      %v1387 = vpop.permute.xlu0 %1386
      %1388 = vrot.lane.b32.xlu0 %v1346, 16
      %v1389 = vpop.permute.xlu0 %1388
      %1390 = vrot.lane.b32.xlu0 %v1347, 16
      %v1391 = vpop.permute.xlu0 %1390
      %1392 = vrot.lane.b32.xlu0 %v1348, 16
      %v1393 = vpop.permute.xlu0 %1392
      %1394 = vrot.lane.b32.xlu0 %v1349, 16
      %v1395 = vpop.permute.xlu0 %1394
      %1396 = vrot.lane.b32.xlu0 %v1350, 16
      %v1397 = vpop.permute.xlu0 %1396
      %1398 = vrot.lane.b32.xlu0 %v1351, 16
      %v1399 = vpop.permute.xlu0 %1398
      %vm1416 = vcmask 162944
      %1417 = vst.msk [vmem:[#allocation3] sm:$0xff] %vm1416, %v1369
      %1418 = vst.msk [vmem:[#allocation3 + $0x8] sm:$0xff] %vm1416, %v1371
      %1419 = vst.msk [vmem:[#allocation3 + $0x10] sm:$0xff] %vm1416, %v1373
      %1420 = vst.msk [vmem:[#allocation3 + $0x18] sm:$0xff] %vm1416, %v1375
      %1421 = vst.msk [vmem:[#allocation3 + $0x20] sm:$0xff] %vm1416, %v1377
      %1422 = vst.msk [vmem:[#allocation3 + $0x28] sm:$0xff] %vm1416, %v1379
      %1423 = vst.msk [vmem:[#allocation3 + $0x30] sm:$0xff] %vm1416, %v1381
      %1424 = vst.msk [vmem:[#allocation3 + $0x38] sm:$0xff] %vm1416, %v1383
      %1425 = vst.msk [vmem:[#allocation3 + $0x40] sm:$0xff] %vm1416, %v1385
      %1426 = vst.msk [vmem:[#allocation3 + $0x48] sm:$0xff] %vm1416, %v1387
      %1427 = vst.msk [vmem:[#allocation3 + $0x50] sm:$0xff] %vm1416, %v1389
      %1428 = vst.msk [vmem:[#allocation3 + $0x58] sm:$0xff] %vm1416, %v1391
      %1429 = vst.msk [vmem:[#allocation3 + $0x60] sm:$0xff] %vm1416, %v1393
      %1430 = vst.msk [vmem:[#allocation3 + $0x68] sm:$0xff] %vm1416, %v1395
      %1431 = vst.msk [vmem:[#allocation3 + $0x70] sm:$0xff] %vm1416, %v1397
      %1432 = vst.msk [vmem:[#allocation3 + $0x78] sm:$0xff] %vm1416, %v1399
      %v1433 = vld [vmem:[%s820 + $0x2] sm:$0xff]
      %v1434 = vld [vmem:[%s820 + $0xa] sm:$0xff]
      %v1435 = vld [vmem:[%s820 + $0x1a] sm:$0xff]
      %v1436 = vld [vmem:[%s820 + $0x22] sm:$0xff]
      %v1437 = vld [vmem:[%s820 + $0x32] sm:$0xff]
      %v1438 = vld [vmem:[%s820 + $0x3a] sm:$0xff]
      %v1439 = vld [vmem:[%s820 + $0x4a] sm:$0xff]
      %v1440 = vld [vmem:[%s820 + $0x52] sm:$0xff]
      %v1441 = vld [vmem:[%s820 + $0x62] sm:$0xff]
      %v1442 = vld [vmem:[%s820 + $0x6a] sm:$0xff]
      %v1443 = vld [vmem:[%s820 + $0x7a] sm:$0xff]
      %v1444 = vld [vmem:[%s820 + $0x82] sm:$0xff]
      %v1445 = vld [vmem:[%s820 + $0x92] sm:$0xff]
      %v1446 = vld [vmem:[%s820 + $0x9a] sm:$0xff]
      %v1447 = vld [vmem:[%s820 + $0xaa] sm:$0xff]
      %v1448 = vld [vmem:[%s820 + $0xb2] sm:$0xff]
      %v1449 = vld [vmem:[%s820 + $0xc2] sm:$0xff]
      %v1450 = vld [vmem:[%s820 + $0xca] sm:$0xff]
      %v1451 = vld [vmem:[%s820 + $0xda] sm:$0xff]
      %v1452 = vld [vmem:[%s820 + $0xe2] sm:$0xff]
      %v1453 = vld [vmem:[%s820 + $0xf2] sm:$0xff]
      %v1454 = vld [vmem:[%s820 + $0xfa] sm:$0xff]
      %v1455 = vld [vmem:[%s820 + $0x10a] sm:$0xff]
      %v1456 = vld [vmem:[%s820 + $0x112] sm:$0xff]
      %v1457 = vld [vmem:[%s820 + $0x122] sm:$0xff]
      %v1458 = vld [vmem:[%s820 + $0x12a] sm:$0xff]
      %v1459 = vld [vmem:[%s820 + $0x13a] sm:$0xff]
      %v1460 = vld [vmem:[%s820 + $0x142] sm:$0xff]
      %v1461 = vld [vmem:[%s820 + $0x152] sm:$0xff]
      %v1462 = vld [vmem:[%s820 + $0x15a] sm:$0xff]
      %v1463 = vld [vmem:[%s820 + $0x16a] sm:$0xff]
      %v1464 = vld [vmem:[%s820 + $0x172] sm:$0xff]
      %v1465 = vpack.c.bf16 %v1434, %v1433
      %v1466 = vpack.c.bf16 %v1436, %v1435
      %v1467 = vpack.c.bf16 %v1438, %v1437
      %v1468 = vpack.c.bf16 %v1440, %v1439
      %v1469 = vpack.c.bf16 %v1442, %v1441
      %v1470 = vpack.c.bf16 %v1444, %v1443
      %v1471 = vpack.c.bf16 %v1446, %v1445
      %v1472 = vpack.c.bf16 %v1448, %v1447
      %v1473 = vpack.c.bf16 %v1450, %v1449
      %v1474 = vpack.c.bf16 %v1452, %v1451
      %v1475 = vpack.c.bf16 %v1454, %v1453
      %v1476 = vpack.c.bf16 %v1456, %v1455
      %v1477 = vpack.c.bf16 %v1458, %v1457
      %v1478 = vpack.c.bf16 %v1460, %v1459
      %v1479 = vpack.c.bf16 %v1462, %v1461
      %v1480 = vpack.c.bf16 %v1464, %v1463
      %1497 = vrot.lane.b32.xlu0 %v1465, 20
      %v1498 = vpop.permute.xlu0 %1497
      %1499 = vrot.lane.b32.xlu0 %v1466, 20
      %v1500 = vpop.permute.xlu0 %1499
      %1501 = vrot.lane.b32.xlu0 %v1467, 20
      %v1502 = vpop.permute.xlu0 %1501
      %1503 = vrot.lane.b32.xlu0 %v1468, 20
      %v1504 = vpop.permute.xlu0 %1503
      %1505 = vrot.lane.b32.xlu0 %v1469, 20
      %v1506 = vpop.permute.xlu0 %1505
      %1507 = vrot.lane.b32.xlu0 %v1470, 20
      %v1508 = vpop.permute.xlu0 %1507
      %1509 = vrot.lane.b32.xlu0 %v1471, 20
      %v1510 = vpop.permute.xlu0 %1509
      %1511 = vrot.lane.b32.xlu0 %v1472, 20
      %v1512 = vpop.permute.xlu0 %1511
      %1513 = vrot.lane.b32.xlu0 %v1473, 20
      %v1514 = vpop.permute.xlu0 %1513
      %1515 = vrot.lane.b32.xlu0 %v1474, 20
      %v1516 = vpop.permute.xlu0 %1515
      %1517 = vrot.lane.b32.xlu0 %v1475, 20
      %v1518 = vpop.permute.xlu0 %1517
      %1519 = vrot.lane.b32.xlu0 %v1476, 20
      %v1520 = vpop.permute.xlu0 %1519
      %1521 = vrot.lane.b32.xlu0 %v1477, 20
      %v1522 = vpop.permute.xlu0 %1521
      %1523 = vrot.lane.b32.xlu0 %v1478, 20
      %v1524 = vpop.permute.xlu0 %1523
      %1525 = vrot.lane.b32.xlu0 %v1479, 20
      %v1526 = vpop.permute.xlu0 %1525
      %1527 = vrot.lane.b32.xlu0 %v1480, 20
      %v1528 = vpop.permute.xlu0 %1527
      %vm1545 = vcmask 195744
      %1546 = vst.msk [vmem:[#allocation3] sm:$0xff] %vm1545, %v1498
      %1547 = vst.msk [vmem:[#allocation3 + $0x8] sm:$0xff] %vm1545, %v1500
      %1548 = vst.msk [vmem:[#allocation3 + $0x10] sm:$0xff] %vm1545, %v1502
      %1549 = vst.msk [vmem:[#allocation3 + $0x18] sm:$0xff] %vm1545, %v1504
      %1550 = vst.msk [vmem:[#allocation3 + $0x20] sm:$0xff] %vm1545, %v1506
      %1551 = vst.msk [vmem:[#allocation3 + $0x28] sm:$0xff] %vm1545, %v1508
      %1552 = vst.msk [vmem:[#allocation3 + $0x30] sm:$0xff] %vm1545, %v1510
      %1553 = vst.msk [vmem:[#allocation3 + $0x38] sm:$0xff] %vm1545, %v1512
      %1554 = vst.msk [vmem:[#allocation3 + $0x40] sm:$0xff] %vm1545, %v1514
      %1555 = vst.msk [vmem:[#allocation3 + $0x48] sm:$0xff] %vm1545, %v1516
      %1556 = vst.msk [vmem:[#allocation3 + $0x50] sm:$0xff] %vm1545, %v1518
      %1557 = vst.msk [vmem:[#allocation3 + $0x58] sm:$0xff] %vm1545, %v1520
      %1558 = vst.msk [vmem:[#allocation3 + $0x60] sm:$0xff] %vm1545, %v1522
      %1559 = vst.msk [vmem:[#allocation3 + $0x68] sm:$0xff] %vm1545, %v1524
      %1560 = vst.msk [vmem:[#allocation3 + $0x70] sm:$0xff] %vm1545, %v1526
      %1561 = vst.msk [vmem:[#allocation3 + $0x78] sm:$0xff] %vm1545, %v1528
      %s1562 = scalar_lea.vmem [#allocation2], 48
      %v1563 = vld [vmem:[%s1562] sm:$0xff]
      %v1564 = vld [vmem:[%s1562 + $0x8] sm:$0xff]
      %v1565 = vld [vmem:[%s1562 + $0x18] sm:$0xff]
      %v1566 = vld [vmem:[%s1562 + $0x20] sm:$0xff]
      %v1567 = vld [vmem:[%s1562 + $0x30] sm:$0xff]
      %v1568 = vld [vmem:[%s1562 + $0x38] sm:$0xff]
      %v1569 = vld [vmem:[%s1562 + $0x48] sm:$0xff]
      %v1570 = vld [vmem:[%s1562 + $0x50] sm:$0xff]
      %v1571 = vld [vmem:[%s1562 + $0x60] sm:$0xff]
      %v1572 = vld [vmem:[%s1562 + $0x68] sm:$0xff]
      %v1573 = vld [vmem:[%s1562 + $0x78] sm:$0xff]
      %v1574 = vld [vmem:[%s1562 + $0x80] sm:$0xff]
      %v1575 = vld [vmem:[%s1562 + $0x90] sm:$0xff]
      %v1576 = vld [vmem:[%s1562 + $0x98] sm:$0xff]
      %v1577 = vld [vmem:[%s1562 + $0xa8] sm:$0xff]
      %v1578 = vld [vmem:[%s1562 + $0xb0] sm:$0xff]
      %v1579 = vld [vmem:[%s1562 + $0xc0] sm:$0xff]
      %v1580 = vld [vmem:[%s1562 + $0xc8] sm:$0xff]
      %v1581 = vld [vmem:[%s1562 + $0xd8] sm:$0xff]
      %v1582 = vld [vmem:[%s1562 + $0xe0] sm:$0xff]
      %v1583 = vld [vmem:[%s1562 + $0xf0] sm:$0xff]
      %v1584 = vld [vmem:[%s1562 + $0xf8] sm:$0xff]
      %v1585 = vld [vmem:[%s1562 + $0x108] sm:$0xff]
      %v1586 = vld [vmem:[%s1562 + $0x110] sm:$0xff]
      %v1587 = vld [vmem:[%s1562 + $0x120] sm:$0xff]
      %v1588 = vld [vmem:[%s1562 + $0x128] sm:$0xff]
      %v1589 = vld [vmem:[%s1562 + $0x138] sm:$0xff]
      %v1590 = vld [vmem:[%s1562 + $0x140] sm:$0xff]
      %v1591 = vld [vmem:[%s1562 + $0x150] sm:$0xff]
      %v1592 = vld [vmem:[%s1562 + $0x158] sm:$0xff]
      %v1593 = vld [vmem:[%s1562 + $0x168] sm:$0xff]
      %v1594 = vld [vmem:[%s1562 + $0x170] sm:$0xff]
      %v1595 = vpack.c.bf16 %v1564, %v1563
      %v1596 = vpack.c.bf16 %v1566, %v1565
      %v1597 = vpack.c.bf16 %v1568, %v1567
      %v1598 = vpack.c.bf16 %v1570, %v1569
      %v1599 = vpack.c.bf16 %v1572, %v1571
      %v1600 = vpack.c.bf16 %v1574, %v1573
      %v1601 = vpack.c.bf16 %v1576, %v1575
      %v1602 = vpack.c.bf16 %v1578, %v1577
      %v1603 = vpack.c.bf16 %v1580, %v1579
      %v1604 = vpack.c.bf16 %v1582, %v1581
      %v1605 = vpack.c.bf16 %v1584, %v1583
      %v1606 = vpack.c.bf16 %v1586, %v1585
      %v1607 = vpack.c.bf16 %v1588, %v1587
      %v1608 = vpack.c.bf16 %v1590, %v1589
      %v1609 = vpack.c.bf16 %v1592, %v1591
      %v1610 = vpack.c.bf16 %v1594, %v1593
      %1627 = vrot.lane.b32.xlu0 %v1595, 24
      %v1628 = vpop.permute.xlu0 %1627
      %1629 = vrot.lane.b32.xlu0 %v1596, 24
      %v1630 = vpop.permute.xlu0 %1629
      %1631 = vrot.lane.b32.xlu0 %v1597, 24
      %v1632 = vpop.permute.xlu0 %1631
      %1633 = vrot.lane.b32.xlu0 %v1598, 24
      %v1634 = vpop.permute.xlu0 %1633
      %1635 = vrot.lane.b32.xlu0 %v1599, 24
      %v1636 = vpop.permute.xlu0 %1635
      %1637 = vrot.lane.b32.xlu0 %v1600, 24
      %v1638 = vpop.permute.xlu0 %1637
      %1639 = vrot.lane.b32.xlu0 %v1601, 24
      %v1640 = vpop.permute.xlu0 %1639
      %1641 = vrot.lane.b32.xlu0 %v1602, 24
      %v1642 = vpop.permute.xlu0 %1641
      %1643 = vrot.lane.b32.xlu0 %v1603, 24
      %v1644 = vpop.permute.xlu0 %1643
      %1645 = vrot.lane.b32.xlu0 %v1604, 24
      %v1646 = vpop.permute.xlu0 %1645
      %1647 = vrot.lane.b32.xlu0 %v1605, 24
      %v1648 = vpop.permute.xlu0 %1647
      %1649 = vrot.lane.b32.xlu0 %v1606, 24
      %v1650 = vpop.permute.xlu0 %1649
      %1651 = vrot.lane.b32.xlu0 %v1607, 24
      %v1652 = vpop.permute.xlu0 %1651
      %1653 = vrot.lane.b32.xlu0 %v1608, 24
      %v1654 = vpop.permute.xlu0 %1653
      %1655 = vrot.lane.b32.xlu0 %v1609, 24
      %v1656 = vpop.permute.xlu0 %1655
      %1657 = vrot.lane.b32.xlu0 %v1610, 24
      %v1658 = vpop.permute.xlu0 %1657
      %vm1675 = vcmask 228544
      %1676 = vst.msk [vmem:[#allocation3] sm:$0xff] %vm1675, %v1628
      %1677 = vst.msk [vmem:[#allocation3 + $0x8] sm:$0xff] %vm1675, %v1630
      %1678 = vst.msk [vmem:[#allocation3 + $0x10] sm:$0xff] %vm1675, %v1632
      %1679 = vst.msk [vmem:[#allocation3 + $0x18] sm:$0xff] %vm1675, %v1634
      %1680 = vst.msk [vmem:[#allocation3 + $0x20] sm:$0xff] %vm1675, %v1636
      %1681 = vst.msk [vmem:[#allocation3 + $0x28] sm:$0xff] %vm1675, %v1638
      %1682 = vst.msk [vmem:[#allocation3 + $0x30] sm:$0xff] %vm1675, %v1640
      %1683 = vst.msk [vmem:[#allocation3 + $0x38] sm:$0xff] %vm1675, %v1642
      %1684 = vst.msk [vmem:[#allocation3 + $0x40] sm:$0xff] %vm1675, %v1644
      %1685 = vst.msk [vmem:[#allocation3 + $0x48] sm:$0xff] %vm1675, %v1646
      %1686 = vst.msk [vmem:[#allocation3 + $0x50] sm:$0xff] %vm1675, %v1648
      %1687 = vst.msk [vmem:[#allocation3 + $0x58] sm:$0xff] %vm1675, %v1650
      %1688 = vst.msk [vmem:[#allocation3 + $0x60] sm:$0xff] %vm1675, %v1652
      %1689 = vst.msk [vmem:[#allocation3 + $0x68] sm:$0xff] %vm1675, %v1654
      %1690 = vst.msk [vmem:[#allocation3 + $0x70] sm:$0xff] %vm1675, %v1656
      %1691 = vst.msk [vmem:[#allocation3 + $0x78] sm:$0xff] %vm1675, %v1658
      %v1692 = vld [vmem:[%s1562 + $0x1] sm:$0xff]
      %v1693 = vld [vmem:[%s1562 + $0x9] sm:$0xff]
      %v1694 = vld [vmem:[%s1562 + $0x19] sm:$0xff]
      %v1695 = vld [vmem:[%s1562 + $0x21] sm:$0xff]
      %v1696 = vld [vmem:[%s1562 + $0x31] sm:$0xff]
      %v1697 = vld [vmem:[%s1562 + $0x39] sm:$0xff]
      %v1698 = vld [vmem:[%s1562 + $0x49] sm:$0xff]
      %v1699 = vld [vmem:[%s1562 + $0x51] sm:$0xff]
      %v1700 = vld [vmem:[%s1562 + $0x61] sm:$0xff]
      %v1701 = vld [vmem:[%s1562 + $0x69] sm:$0xff]
      %v1702 = vld [vmem:[%s1562 + $0x79] sm:$0xff]
      %v1703 = vld [vmem:[%s1562 + $0x81] sm:$0xff]
      %v1704 = vld [vmem:[%s1562 + $0x91] sm:$0xff]
      %v1705 = vld [vmem:[%s1562 + $0x99] sm:$0xff]
      %v1706 = vld [vmem:[%s1562 + $0xa9] sm:$0xff]
      %v1707 = vld [vmem:[%s1562 + $0xb1] sm:$0xff]
      %v1708 = vld [vmem:[%s1562 + $0xc1] sm:$0xff]
      %v1709 = vld [vmem:[%s1562 + $0xc9] sm:$0xff]
      %v1710 = vld [vmem:[%s1562 + $0xd9] sm:$0xff]
      %v1711 = vld [vmem:[%s1562 + $0xe1] sm:$0xff]
      %v1712 = vld [vmem:[%s1562 + $0xf1] sm:$0xff]
      %v1713 = vld [vmem:[%s1562 + $0xf9] sm:$0xff]
      %v1714 = vld [vmem:[%s1562 + $0x109] sm:$0xff]
      %v1715 = vld [vmem:[%s1562 + $0x111] sm:$0xff]
      %v1716 = vld [vmem:[%s1562 + $0x121] sm:$0xff]
      %v1717 = vld [vmem:[%s1562 + $0x129] sm:$0xff]
      %v1718 = vld [vmem:[%s1562 + $0x139] sm:$0xff]
      %v1719 = vld [vmem:[%s1562 + $0x141] sm:$0xff]
      %v1720 = vld [vmem:[%s1562 + $0x151] sm:$0xff]
      %v1721 = vld [vmem:[%s1562 + $0x159] sm:$0xff]
      %v1722 = vld [vmem:[%s1562 + $0x169] sm:$0xff]
      %v1723 = vld [vmem:[%s1562 + $0x171] sm:$0xff]
      %v1724 = vpack.c.bf16 %v1693, %v1692
      %v1725 = vpack.c.bf16 %v1695, %v1694
      %v1726 = vpack.c.bf16 %v1697, %v1696
      %v1727 = vpack.c.bf16 %v1699, %v1698
      %v1728 = vpack.c.bf16 %v1701, %v1700
      %v1729 = vpack.c.bf16 %v1703, %v1702
      %v1730 = vpack.c.bf16 %v1705, %v1704
      %v1731 = vpack.c.bf16 %v1707, %v1706
      %v1732 = vpack.c.bf16 %v1709, %v1708
      %v1733 = vpack.c.bf16 %v1711, %v1710
      %v1734 = vpack.c.bf16 %v1713, %v1712
      %v1735 = vpack.c.bf16 %v1715, %v1714
      %v1736 = vpack.c.bf16 %v1717, %v1716
      %v1737 = vpack.c.bf16 %v1719, %v1718
      %v1738 = vpack.c.bf16 %v1721, %v1720
      %v1739 = vpack.c.bf16 %v1723, %v1722
      %1756 = vrot.lane.b32.xlu0 %v1724, 28
      %v1757 = vpop.permute.xlu0 %1756
      %1758 = vrot.lane.b32.xlu0 %v1725, 28
      %v1759 = vpop.permute.xlu0 %1758
      %1760 = vrot.lane.b32.xlu0 %v1726, 28
      %v1761 = vpop.permute.xlu0 %1760
      %1762 = vrot.lane.b32.xlu0 %v1727, 28
      %v1763 = vpop.permute.xlu0 %1762
      %1764 = vrot.lane.b32.xlu0 %v1728, 28
      %v1765 = vpop.permute.xlu0 %1764
      %1766 = vrot.lane.b32.xlu0 %v1729, 28
      %v1767 = vpop.permute.xlu0 %1766
      %1768 = vrot.lane.b32.xlu0 %v1730, 28
      %v1769 = vpop.permute.xlu0 %1768
      %1770 = vrot.lane.b32.xlu0 %v1731, 28
      %v1771 = vpop.permute.xlu0 %1770
      %1772 = vrot.lane.b32.xlu0 %v1732, 28
      %v1773 = vpop.permute.xlu0 %1772
      %1774 = vrot.lane.b32.xlu0 %v1733, 28
      %v1775 = vpop.permute.xlu0 %1774
      %1776 = vrot.lane.b32.xlu0 %v1734, 28
      %v1777 = vpop.permute.xlu0 %1776
      %1778 = vrot.lane.b32.xlu0 %v1735, 28
      %v1779 = vpop.permute.xlu0 %1778
      %1780 = vrot.lane.b32.xlu0 %v1736, 28
      %v1781 = vpop.permute.xlu0 %1780
      %1782 = vrot.lane.b32.xlu0 %v1737, 28
      %v1783 = vpop.permute.xlu0 %1782
      %1784 = vrot.lane.b32.xlu0 %v1738, 28
      %v1785 = vpop.permute.xlu0 %1784
      %1786 = vrot.lane.b32.xlu0 %v1739, 28
      %v1787 = vpop.permute.xlu0 %1786
      %vm1804 = vcmask 261344
      %1805 = vst.msk [vmem:[#allocation3] sm:$0xff] %vm1804, %v1757
      %1806 = vst.msk [vmem:[#allocation3 + $0x8] sm:$0xff] %vm1804, %v1759
      %1807 = vst.msk [vmem:[#allocation3 + $0x10] sm:$0xff] %vm1804, %v1761
      %1808 = vst.msk [vmem:[#allocation3 + $0x18] sm:$0xff] %vm1804, %v1763
      %1809 = vst.msk [vmem:[#allocation3 + $0x20] sm:$0xff] %vm1804, %v1765
      %1810 = vst.msk [vmem:[#allocation3 + $0x28] sm:$0xff] %vm1804, %v1767
      %1811 = vst.msk [vmem:[#allocation3 + $0x30] sm:$0xff] %vm1804, %v1769
      %1812 = vst.msk [vmem:[#allocation3 + $0x38] sm:$0xff] %vm1804, %v1771
      %1813 = vst.msk [vmem:[#allocation3 + $0x40] sm:$0xff] %vm1804, %v1773
      %1814 = vst.msk [vmem:[#allocation3 + $0x48] sm:$0xff] %vm1804, %v1775
      %1815 = vst.msk [vmem:[#allocation3 + $0x50] sm:$0xff] %vm1804, %v1777
      %1816 = vst.msk [vmem:[#allocation3 + $0x58] sm:$0xff] %vm1804, %v1779
      %1817 = vst.msk [vmem:[#allocation3 + $0x60] sm:$0xff] %vm1804, %v1781
      %1818 = vst.msk [vmem:[#allocation3 + $0x68] sm:$0xff] %vm1804, %v1783
      %1819 = vst.msk [vmem:[#allocation3 + $0x70] sm:$0xff] %vm1804, %v1785
      %1820 = vst.msk [vmem:[#allocation3 + $0x78] sm:$0xff] %vm1804, %v1787
      %v1821 = vld [vmem:[%s1562 + $0x2] sm:$0xff]
      %v1822 = vld [vmem:[%s1562 + $0xa] sm:$0xff]
      %v1823 = vld [vmem:[%s1562 + $0x1a] sm:$0xff]
      %v1824 = vld [vmem:[%s1562 + $0x22] sm:$0xff]
      %v1825 = vld [vmem:[%s1562 + $0x32] sm:$0xff]
      %v1826 = vld [vmem:[%s1562 + $0x3a] sm:$0xff]
      %v1827 = vld [vmem:[%s1562 + $0x4a] sm:$0xff]
      %v1828 = vld [vmem:[%s1562 + $0x52] sm:$0xff]
      %v1829 = vld [vmem:[%s1562 + $0x62] sm:$0xff]
      %v1830 = vld [vmem:[%s1562 + $0x6a] sm:$0xff]
      %v1831 = vld [vmem:[%s1562 + $0x7a] sm:$0xff]
      %v1832 = vld [vmem:[%s1562 + $0x82] sm:$0xff]
      %v1833 = vld [vmem:[%s1562 + $0x92] sm:$0xff]
      %v1834 = vld [vmem:[%s1562 + $0x9a] sm:$0xff]
      %v1835 = vld [vmem:[%s1562 + $0xaa] sm:$0xff]
      %v1836 = vld [vmem:[%s1562 + $0xb2] sm:$0xff]
      %v1837 = vld [vmem:[%s1562 + $0xc2] sm:$0xff]
      %v1838 = vld [vmem:[%s1562 + $0xca] sm:$0xff]
      %v1839 = vld [vmem:[%s1562 + $0xda] sm:$0xff]
      %v1840 = vld [vmem:[%s1562 + $0xe2] sm:$0xff]
      %v1841 = vld [vmem:[%s1562 + $0xf2] sm:$0xff]
      %v1842 = vld [vmem:[%s1562 + $0xfa] sm:$0xff]
      %v1843 = vld [vmem:[%s1562 + $0x10a] sm:$0xff]
      %v1844 = vld [vmem:[%s1562 + $0x112] sm:$0xff]
      %v1845 = vld [vmem:[%s1562 + $0x122] sm:$0xff]
      %v1846 = vld [vmem:[%s1562 + $0x12a] sm:$0xff]
      %v1847 = vld [vmem:[%s1562 + $0x13a] sm:$0xff]
      %v1848 = vld [vmem:[%s1562 + $0x142] sm:$0xff]
      %v1849 = vld [vmem:[%s1562 + $0x152] sm:$0xff]
      %v1850 = vld [vmem:[%s1562 + $0x15a] sm:$0xff]
      %v1851 = vld [vmem:[%s1562 + $0x16a] sm:$0xff]
      %v1852 = vld [vmem:[%s1562 + $0x172] sm:$0xff]
      %v1853 = vpack.c.bf16 %v1822, %v1821
      %v1854 = vpack.c.bf16 %v1824, %v1823
      %v1855 = vpack.c.bf16 %v1826, %v1825
      %v1856 = vpack.c.bf16 %v1828, %v1827
      %v1857 = vpack.c.bf16 %v1830, %v1829
      %v1858 = vpack.c.bf16 %v1832, %v1831
      %v1859 = vpack.c.bf16 %v1834, %v1833
      %v1860 = vpack.c.bf16 %v1836, %v1835
      %v1861 = vpack.c.bf16 %v1838, %v1837
      %v1862 = vpack.c.bf16 %v1840, %v1839
      %v1863 = vpack.c.bf16 %v1842, %v1841
      %v1864 = vpack.c.bf16 %v1844, %v1843
      %v1865 = vpack.c.bf16 %v1846, %v1845
      %v1866 = vpack.c.bf16 %v1848, %v1847
      %v1867 = vpack.c.bf16 %v1850, %v1849
      %v1868 = vpack.c.bf16 %v1852, %v1851
      %1885 = vrot.lane.b32.xlu0 %v1853, 32
      %v1886 = vpop.permute.xlu0 %1885
      %1887 = vrot.lane.b32.xlu0 %v1854, 32
      %v1888 = vpop.permute.xlu0 %1887
      %1889 = vrot.lane.b32.xlu0 %v1855, 32
      %v1890 = vpop.permute.xlu0 %1889
      %1891 = vrot.lane.b32.xlu0 %v1856, 32
      %v1892 = vpop.permute.xlu0 %1891
      %1893 = vrot.lane.b32.xlu0 %v1857, 32
      %v1894 = vpop.permute.xlu0 %1893
      %1895 = vrot.lane.b32.xlu0 %v1858, 32
      %v1896 = vpop.permute.xlu0 %1895
      %1897 = vrot.lane.b32.xlu0 %v1859, 32
      %v1898 = vpop.permute.xlu0 %1897
      %1899 = vrot.lane.b32.xlu0 %v1860, 32
      %v1900 = vpop.permute.xlu0 %1899
      %1901 = vrot.lane.b32.xlu0 %v1861, 32
      %v1902 = vpop.permute.xlu0 %1901
      %1903 = vrot.lane.b32.xlu0 %v1862, 32
      %v1904 = vpop.permute.xlu0 %1903
      %1905 = vrot.lane.b32.xlu0 %v1863, 32
      %v1906 = vpop.permute.xlu0 %1905
      %1907 = vrot.lane.b32.xlu0 %v1864, 32
      %v1908 = vpop.permute.xlu0 %1907
      %1909 = vrot.lane.b32.xlu0 %v1865, 32
      %v1910 = vpop.permute.xlu0 %1909
      %1911 = vrot.lane.b32.xlu0 %v1866, 32
      %v1912 = vpop.permute.xlu0 %1911
      %1913 = vrot.lane.b32.xlu0 %v1867, 32
      %v1914 = vpop.permute.xlu0 %1913
      %1915 = vrot.lane.b32.xlu0 %v1868, 32
      %v1916 = vpop.permute.xlu0 %1915
      %vm1933 = vcmask 294144
      %1934 = vst.msk [vmem:[#allocation3] sm:$0xff] %vm1933, %v1886
      %1935 = vst.msk [vmem:[#allocation3 + $0x8] sm:$0xff] %vm1933, %v1888
      %1936 = vst.msk [vmem:[#allocation3 + $0x10] sm:$0xff] %vm1933, %v1890
      %1937 = vst.msk [vmem:[#allocation3 + $0x18] sm:$0xff] %vm1933, %v1892
      %1938 = vst.msk [vmem:[#allocation3 + $0x20] sm:$0xff] %vm1933, %v1894
      %1939 = vst.msk [vmem:[#allocation3 + $0x28] sm:$0xff] %vm1933, %v1896
      %1940 = vst.msk [vmem:[#allocation3 + $0x30] sm:$0xff] %vm1933, %v1898
      %1941 = vst.msk [vmem:[#allocation3 + $0x38] sm:$0xff] %vm1933, %v1900
      %1942 = vst.msk [vmem:[#allocation3 + $0x40] sm:$0xff] %vm1933, %v1902
      %1943 = vst.msk [vmem:[#allocation3 + $0x48] sm:$0xff] %vm1933, %v1904
      %1944 = vst.msk [vmem:[#allocation3 + $0x50] sm:$0xff] %vm1933, %v1906
      %1945 = vst.msk [vmem:[#allocation3 + $0x58] sm:$0xff] %vm1933, %v1908
      %1946 = vst.msk [vmem:[#allocation3 + $0x60] sm:$0xff] %vm1933, %v1910
      %1947 = vst.msk [vmem:[#allocation3 + $0x68] sm:$0xff] %vm1933, %v1912
      %1948 = vst.msk [vmem:[#allocation3 + $0x70] sm:$0xff] %vm1933, %v1914
      %1949 = vst.msk [vmem:[#allocation3 + $0x78] sm:$0xff] %vm1933, %v1916
      %v1950 = vld [vmem:[#allocation3] sm:$0xff]
      %v1951 = vld [vmem:[#allocation3 + $0x8] sm:$0xff]
      %v1952 = vld [vmem:[#allocation3 + $0x10] sm:$0xff]
      %v1953 = vld [vmem:[#allocation3 + $0x18] sm:$0xff]
      %v1954 = vld [vmem:[#allocation3 + $0x20] sm:$0xff]
      %v1955 = vld [vmem:[#allocation3 + $0x28] sm:$0xff]
      %v1956 = vld [vmem:[#allocation3 + $0x30] sm:$0xff]
      %v1957 = vld [vmem:[#allocation3 + $0x38] sm:$0xff]
      %v1958 = vld [vmem:[#allocation3 + $0x40] sm:$0xff]
      %v1959 = vld [vmem:[#allocation3 + $0x48] sm:$0xff]
      %v1960 = vld [vmem:[#allocation3 + $0x50] sm:$0xff]
      %v1961 = vld [vmem:[#allocation3 + $0x58] sm:$0xff]
      %v1962 = vld [vmem:[#allocation3 + $0x60] sm:$0xff]
      %v1963 = vld [vmem:[#allocation3 + $0x68] sm:$0xff]
      %v1964 = vld [vmem:[#allocation3 + $0x70] sm:$0xff]
      %v1965 = vld [vmem:[#allocation3 + $0x78] sm:$0xff]
      %v1966 = vld [vmem:[%s3] sm:$0xf]
      %v1967 = vld [vmem:[%s3 + $0x4] sm:$0xf]
      %v1968 = vld [vmem:[%s3 + $0x8] sm:$0xf]
      %v1969 = vld [vmem:[%s3 + $0xc] sm:$0xf]
      %v1970 = vld [vmem:[%s3 + $0x10] sm:$0x3]
      %v1976 = vunpack.c.l.b16 %v1966
      %v1977 = vunpack.c.l.b16 %v1967
      %v1978 = vunpack.c.l.b16 %v1968
      %v1979 = vunpack.c.l.b16 %v1969
      %v1980 = vunpack.c.l.b16 %v1970
      %v1981 = vpack.c.b16 %v1977, %v1976
      %v1982 = vpack.c.b16 %v1979, %v1978
      %v1983 = vpack.c.b16 %v1980, %v1980
      %vm1986 = vcmask 293888
      %v1988 = vsel %vm1986, %v1950, 0
      %v1991 = vsel %vm1986, %v1951, 0
      %v1994 = vsel %vm1986, %v1952, 0
      %v1997 = vsel %vm1986, %v1953, 0
      %v2000 = vsel %vm1986, %v1954, 0
      %v2003 = vsel %vm1986, %v1955, 0
      %v2006 = vsel %vm1986, %v1956, 0
      %v2009 = vsel %vm1986, %v1957, 0
      %v2012 = vsel %vm1986, %v1958, 0
      %v2015 = vsel %vm1986, %v1959, 0
      %v2018 = vsel %vm1986, %v1960, 0
      %v2021 = vsel %vm1986, %v1961, 0
      %v2024 = vsel %vm1986, %v1962, 0
      %v2027 = vsel %vm1986, %v1963, 0
      %v2030 = vsel %vm1986, %v1964, 0
      %v2033 = vsel %vm1986, %v1965, 0
      %vm2035 = vcmask 1041408
      %v2037 = vsel %vm2035, %v1983, 0
      %2039 = vmatprep.subr.bf16.mxu0 0
      %2040 = vmatpush1.bf16.msra.mxu0 %v1981
      %2041 = vmatprep.subr.bf16.mxu0 0
      %2042 = vmatpush1.bf16.msra.mxu0 %v1982
      %2043 = vmatprep.subr.bf16.mxu0 0
      %2044 = vmatpush1.bf16.msra.mxu0 %v2037
      %2045 = vmatprep.subr.bf16.mxu0 0
      %2046 = vmatpush1.bf16.msra.mxu0 0
      %2047 = vmatprep.subr.bf16.mxu0 0
      %2048 = vmatpush1.bf16.msra.mxu0 0
      %2049 = vmatprep.subr.bf16.mxu0 0
      %2050 = vmatpush1.bf16.msra.mxu0 0
      %2051 = vmatprep.subr.bf16.mxu0 0
      %2052 = vmatpush1.bf16.msra.mxu0 0
      %2053 = vmatprep.subr.bf16.mxu0 0
      %2054 = vmatpush1.bf16.msra.mxu0 0
      %2055 = vmatprep.subr.bf16.mxu0 0
      %2056 = vmatpush1.bf16.msra.mxu0 0
      %2057 = vmatprep.subr.bf16.mxu0 0
      %2058 = vmatpush1.bf16.msra.mxu0 0
      %2059 = vmatprep.subr.bf16.mxu0 0
      %2060 = vmatpush1.bf16.msra.mxu0 0
      %2061 = vmatprep.subr.bf16.mxu0 0
      %2062 = vmatpush1.bf16.msra.mxu0 0
      %2063 = vmatprep.subr.bf16.mxu0 0
      %2064 = vmatpush1.bf16.msra.mxu0 0
      %2065 = vmatprep.subr.bf16.mxu0 0
      %2066 = vmatpush1.bf16.msra.mxu0 0
      %2067 = vmatprep.subr.bf16.mxu0 0
      %2068 = vmatpush1.bf16.msra.mxu0 0
      %2069 = vmatprep.subr.bf16.mxu0 0
      %2070 = vmatpush1.bf16.msra.mxu0 0
      %2071 = vmatprep.mubr.bf16.mxu0 0
      %2072 = vmatmul.mubr.bf16.gmra.mrb[0].mxu0 %v1988
      %v2073 = vpop.f32.mrb[0].mxu0
      %v2074 = vadd.f32 0.0, %v2073
      %v2075 = vpop.f32.mrb[0].mxu0
      %v2076 = vpop.f32.mrb[0].mxu0
      %v2077 = vadd.f32 0.0, %v2076
      %v2078 = vpop.f32.mrb[0].mxu0
      %2079 = vmatprep.mubr.bf16.mxu0 0
      %2080 = vmatmul.mubr.bf16.gmra.mrb[0].mxu0 %v1991
      %v2081 = vpop.f32.mrb[0].mxu0
      %v2082 = vadd.f32 0.0, %v2081
      %v2083 = vpop.f32.mrb[0].mxu0
      %v2084 = vpop.f32.mrb[0].mxu0
      %v2085 = vadd.f32 0.0, %v2084
      %v2086 = vpop.f32.mrb[0].mxu0
      %2087 = vmatprep.mubr.bf16.mxu0 0
      %2088 = vmatmul.mubr.bf16.gmra.mrb[0].mxu0 %v1994
      %v2089 = vpop.f32.mrb[0].mxu0
      %v2090 = vadd.f32 0.0, %v2089
      %v2091 = vpop.f32.mrb[0].mxu0
      %v2092 = vpop.f32.mrb[0].mxu0
      %v2093 = vadd.f32 0.0, %v2092
      %v2094 = vpop.f32.mrb[0].mxu0
      %2095 = vmatprep.mubr.bf16.mxu0 0
      %2096 = vmatmul.mubr.bf16.gmra.mrb[0].mxu0 %v1997
      %v2097 = vpop.f32.mrb[0].mxu0
      %v2098 = vadd.f32 0.0, %v2097
      %v2099 = vpop.f32.mrb[0].mxu0
      %v2100 = vpop.f32.mrb[0].mxu0
      %v2101 = vadd.f32 0.0, %v2100
      %v2102 = vpop.f32.mrb[0].mxu0
      %2103 = vmatprep.mubr.bf16.mxu0 0
      %2104 = vmatmul.mubr.bf16.gmra.mrb[0].mxu0 %v2000
      %v2105 = vpop.f32.mrb[0].mxu0
      %v2106 = vadd.f32 0.0, %v2105
      %v2107 = vpop.f32.mrb[0].mxu0
      %v2108 = vpop.f32.mrb[0].mxu0
      %v2109 = vadd.f32 0.0, %v2108
      %v2110 = vpop.f32.mrb[0].mxu0
      %2111 = vmatprep.mubr.bf16.mxu0 0
      %2112 = vmatmul.mubr.bf16.gmra.mrb[0].mxu0 %v2003
      %v2113 = vpop.f32.mrb[0].mxu0
      %v2114 = vadd.f32 0.0, %v2113
      %v2115 = vpop.f32.mrb[0].mxu0
      %v2116 = vpop.f32.mrb[0].mxu0
      %v2117 = vadd.f32 0.0, %v2116
      %v2118 = vpop.f32.mrb[0].mxu0
      %2119 = vmatprep.mubr.bf16.mxu0 0
      %2120 = vmatmul.mubr.bf16.gmra.mrb[0].mxu0 %v2006
      %v2121 = vpop.f32.mrb[0].mxu0
      %v2122 = vadd.f32 0.0, %v2121
      %v2123 = vpop.f32.mrb[0].mxu0
      %v2124 = vpop.f32.mrb[0].mxu0
      %v2125 = vadd.f32 0.0, %v2124
      %v2126 = vpop.f32.mrb[0].mxu0
      %2127 = vmatprep.mubr.bf16.mxu0 0
      %2128 = vmatmul.mubr.bf16.gmra.mrb[0].mxu0 %v2009
      %v2129 = vpop.f32.mrb[0].mxu0
      %v2130 = vadd.f32 0.0, %v2129
      %v2131 = vpop.f32.mrb[0].mxu0
      %v2132 = vpop.f32.mrb[0].mxu0
      %v2133 = vadd.f32 0.0, %v2132
      %v2134 = vpop.f32.mrb[0].mxu0
      %2135 = vmatprep.mubr.bf16.mxu0 0
      %2136 = vmatmul.mubr.bf16.gmra.mrb[0].mxu0 %v2012
      %v2137 = vpop.f32.mrb[0].mxu0
      %v2138 = vadd.f32 0.0, %v2137
      %v2139 = vpop.f32.mrb[0].mxu0
      %v2140 = vpop.f32.mrb[0].mxu0
      %v2141 = vadd.f32 0.0, %v2140
      %v2142 = vpop.f32.mrb[0].mxu0
      %2143 = vmatprep.mubr.bf16.mxu0 0
      %2144 = vmatmul.mubr.bf16.gmra.mrb[0].mxu0 %v2015
      %v2145 = vpop.f32.mrb[0].mxu0
      %v2146 = vadd.f32 0.0, %v2145
      %v2147 = vpop.f32.mrb[0].mxu0
      %v2148 = vpop.f32.mrb[0].mxu0
      %v2149 = vadd.f32 0.0, %v2148
      %v2150 = vpop.f32.mrb[0].mxu0
      %2151 = vmatprep.mubr.bf16.mxu0 0
      %2152 = vmatmul.mubr.bf16.gmra.mrb[0].mxu0 %v2018
      %v2153 = vpop.f32.mrb[0].mxu0
      %v2154 = vadd.f32 0.0, %v2153
      %v2155 = vpop.f32.mrb[0].mxu0
      %v2156 = vpop.f32.mrb[0].mxu0
      %v2157 = vadd.f32 0.0, %v2156
      %v2158 = vpop.f32.mrb[0].mxu0
      %2159 = vmatprep.mubr.bf16.mxu0 0
      %2160 = vmatmul.mubr.bf16.gmra.mrb[0].mxu0 %v2021
      %v2161 = vpop.f32.mrb[0].mxu0
      %v2162 = vadd.f32 0.0, %v2161
      %v2163 = vpop.f32.mrb[0].mxu0
      %v2164 = vpop.f32.mrb[0].mxu0
      %v2165 = vadd.f32 0.0, %v2164
      %v2166 = vpop.f32.mrb[0].mxu0
      %2167 = vmatprep.mubr.bf16.mxu0 0
      %2168 = vmatmul.mubr.bf16.gmra.mrb[0].mxu0 %v2024
      %v2169 = vpop.f32.mrb[0].mxu0
      %v2170 = vadd.f32 0.0, %v2169
      %v2171 = vpop.f32.mrb[0].mxu0
      %v2172 = vpop.f32.mrb[0].mxu0
      %v2173 = vadd.f32 0.0, %v2172
      %v2174 = vpop.f32.mrb[0].mxu0
      %2175 = vmatprep.mubr.bf16.mxu0 0
      %2176 = vmatmul.mubr.bf16.gmra.mrb[0].mxu0 %v2027
      %v2177 = vpop.f32.mrb[0].mxu0
      %v2178 = vadd.f32 0.0, %v2177
      %v2179 = vpop.f32.mrb[0].mxu0
      %v2180 = vpop.f32.mrb[0].mxu0
      %v2181 = vadd.f32 0.0, %v2180
      %v2182 = vpop.f32.mrb[0].mxu0
      %2183 = vmatprep.mubr.bf16.mxu0 0
      %2184 = vmatmul.mubr.bf16.gmra.mrb[0].mxu0 %v2030
      %v2185 = vpop.f32.mrb[0].mxu0
      %v2186 = vadd.f32 0.0, %v2185
      %v2187 = vpop.f32.mrb[0].mxu0
      %v2188 = vpop.f32.mrb[0].mxu0
      %v2189 = vadd.f32 0.0, %v2188
      %v2190 = vpop.f32.mrb[0].mxu0
      %2191 = vmatprep.mubr.bf16.mxu0 0
      %2192 = vmatmul.mubr.bf16.gmra.mrb[0].mxu0 %v2033
      %v2193 = vpop.f32.mrb[0].mxu0
      %v2194 = vadd.f32 0.0, %v2193
      %v2195 = vpop.f32.mrb[0].mxu0
      %v2196 = vpop.f32.mrb[0].mxu0
      %v2197 = vadd.f32 0.0, %v2196
      %v2198 = vpop.f32.mrb[0].mxu0
      %2199 = vdwg.mxu0
      %2200 = vst.msk [vmem:[%s262] sm:$0xff] %vm764, %v2074
      %2201 = vst.msk [vmem:[%s262 + $0x8] sm:$0xff] %vm764, %v2077
      %2202 = vst.msk [vmem:[%s262 + $0x10] sm:$0xff] %vm764, %v2082
      %2203 = vst.msk [vmem:[%s262 + $0x18] sm:$0xff] %vm764, %v2085
      %2204 = vst.msk [vmem:[%s262 + $0x20] sm:$0xff] %vm764, %v2090
      %2205 = vst.msk [vmem:[%s262 + $0x28] sm:$0xff] %vm764, %v2093
      %2206 = vst.msk [vmem:[%s262 + $0x30] sm:$0xff] %vm764, %v2098
      %2207 = vst.msk [vmem:[%s262 + $0x38] sm:$0xff] %vm764, %v2101
      %2208 = vst.msk [vmem:[%s262 + $0x40] sm:$0xff] %vm764, %v2106
      %2209 = vst.msk [vmem:[%s262 + $0x48] sm:$0xff] %vm764, %v2109
      %2210 = vst.msk [vmem:[%s262 + $0x50] sm:$0xff] %vm764, %v2114
      %2211 = vst.msk [vmem:[%s262 + $0x58] sm:$0xff] %vm764, %v2117
      %2212 = vst.msk [vmem:[%s262 + $0x60] sm:$0xff] %vm764, %v2122
      %2213 = vst.msk [vmem:[%s262 + $0x68] sm:$0xff] %vm764, %v2125
      %2214 = vst.msk [vmem:[%s262 + $0x70] sm:$0xff] %vm764, %v2130
      %2215 = vst.msk [vmem:[%s262 + $0x78] sm:$0xff] %vm764, %v2133
      %2216 = vst.msk [vmem:[%s262 + $0x80] sm:$0xff] %vm764, %v2138
      %2217 = vst.msk [vmem:[%s262 + $0x88] sm:$0xff] %vm764, %v2141
      %2218 = vst.msk [vmem:[%s262 + $0x90] sm:$0xff] %vm764, %v2146
      %2219 = vst.msk [vmem:[%s262 + $0x98] sm:$0xff] %vm764, %v2149
      %2220 = vst.msk [vmem:[%s262 + $0xa0] sm:$0xff] %vm764, %v2154
      %2221 = vst.msk [vmem:[%s262 + $0xa8] sm:$0xff] %vm764, %v2157
      %2222 = vst.msk [vmem:[%s262 + $0xb0] sm:$0xff] %vm764, %v2162
      %2223 = vst.msk [vmem:[%s262 + $0xb8] sm:$0xff] %vm764, %v2165
      %2224 = vst.msk [vmem:[%s262 + $0xc0] sm:$0xff] %vm764, %v2170
      %2225 = vst.msk [vmem:[%s262 + $0xc8] sm:$0xff] %vm764, %v2173
      %2226 = vst.msk [vmem:[%s262 + $0xd0] sm:$0xff] %vm764, %v2178
      %2227 = vst.msk [vmem:[%s262 + $0xd8] sm:$0xff] %vm764, %v2181
      %2228 = vst.msk [vmem:[%s262 + $0xe0] sm:$0xff] %vm764, %v2186
      %2229 = vst.msk [vmem:[%s262 + $0xe8] sm:$0xff] %vm764, %v2189
      %2230 = vst.msk [vmem:[%s262 + $0xf0] sm:$0xff] %vm764, %v2194
      %2231 = vst.msk [vmem:[%s262 + $0xf8] sm:$0xff] %vm764, %v2197
      %v2232 = vsel %vm764, %v2074, 0.0
      %v2233 = vsel %vm764, %v2077, 0.0
      %v2234 = vadd.f32 %v2232, %v2233
      %v2235 = vsel %vm764, %v2082, 0.0
      %v2236 = vadd.f32 %v2234, %v2235
      %v2237 = vsel %vm764, %v2085, 0.0
      %v2238 = vadd.f32 %v2236, %v2237
      %v2239 = vsel %vm764, %v2090, 0.0
      %v2240 = vadd.f32 %v2238, %v2239
      %v2241 = vsel %vm764, %v2093, 0.0
      %v2242 = vadd.f32 %v2240, %v2241
      %v2243 = vsel %vm764, %v2098, 0.0
      %v2244 = vadd.f32 %v2242, %v2243
      %v2245 = vsel %vm764, %v2101, 0.0
      %v2246 = vadd.f32 %v2244, %v2245
      %v2247 = vsel %vm764, %v2106, 0.0
      %v2248 = vadd.f32 %v2246, %v2247
      %v2249 = vsel %vm764, %v2109, 0.0
      %v2250 = vadd.f32 %v2248, %v2249
      %v2251 = vsel %vm764, %v2114, 0.0
      %v2252 = vadd.f32 %v2250, %v2251
      %v2253 = vsel %vm764, %v2117, 0.0
      %v2254 = vadd.f32 %v2252, %v2253
      %v2255 = vsel %vm764, %v2122, 0.0
      %v2256 = vadd.f32 %v2254, %v2255
      %v2257 = vsel %vm764, %v2125, 0.0
      %v2258 = vadd.f32 %v2256, %v2257
      %v2259 = vsel %vm764, %v2130, 0.0
      %v2260 = vadd.f32 %v2258, %v2259
      %v2261 = vsel %vm764, %v2133, 0.0
      %v2262 = vadd.f32 %v2260, %v2261
      %v2263 = vsel %vm764, %v2138, 0.0
      %v2264 = vadd.f32 %v2262, %v2263
      %v2265 = vsel %vm764, %v2141, 0.0
      %v2266 = vadd.f32 %v2264, %v2265
      %v2267 = vsel %vm764, %v2146, 0.0
      %v2268 = vadd.f32 %v2266, %v2267
      %v2269 = vsel %vm764, %v2149, 0.0
      %v2270 = vadd.f32 %v2268, %v2269
      %v2271 = vsel %vm764, %v2154, 0.0
      %v2272 = vadd.f32 %v2270, %v2271
      %v2273 = vsel %vm764, %v2157, 0.0
      %v2274 = vadd.f32 %v2272, %v2273
      %v2275 = vsel %vm764, %v2162, 0.0
      %v2276 = vadd.f32 %v2274, %v2275
      %v2277 = vsel %vm764, %v2165, 0.0
      %v2278 = vadd.f32 %v2276, %v2277
      %v2279 = vsel %vm764, %v2170, 0.0
      %v2280 = vadd.f32 %v2278, %v2279
      %v2281 = vsel %vm764, %v2173, 0.0
      %v2282 = vadd.f32 %v2280, %v2281
      %v2283 = vsel %vm764, %v2178, 0.0
      %v2284 = vadd.f32 %v2282, %v2283
      %v2285 = vsel %vm764, %v2181, 0.0
      %v2286 = vadd.f32 %v2284, %v2285
      %v2287 = vsel %vm764, %v2186, 0.0
      %v2288 = vadd.f32 %v2286, %v2287
      %v2289 = vsel %vm764, %v2189, 0.0
      %v2290 = vadd.f32 %v2288, %v2289
      %v2291 = vsel %vm764, %v2194, 0.0
      %v2292 = vadd.f32 %v2290, %v2291
      %v2293 = vsel %vm764, %v2197, 0.0
      %v2294 = vadd.f32 %v2292, %v2293
      %v2295 = vrot.slane %v2294, 4
      %v2296 = vadd.f32 %v2294, %v2295
      %v2297 = vrot.slane %v2296, 2
      %v2298 = vadd.f32 %v2296, %v2297
      %v2299 = vrot.slane %v2298, 1
      %v2300 = vadd.f32 %v2298, %v2299
      %vm2301 = vcmask 24576
      %2302 = vst.msk [vmem:[%s265] sm:$0x1] %vm2301, %v2300
      %v2303 = vmul.f32 %v2074, %v2074
      %v2304 = vmul.f32 %v2077, %v2077
      %v2305 = vmul.f32 %v2082, %v2082
      %v2306 = vmul.f32 %v2085, %v2085
      %v2307 = vmul.f32 %v2090, %v2090
      %v2308 = vmul.f32 %v2093, %v2093
      %v2309 = vmul.f32 %v2098, %v2098
      %v2310 = vmul.f32 %v2101, %v2101
      %v2311 = vmul.f32 %v2106, %v2106
      %v2312 = vmul.f32 %v2109, %v2109
      %v2313 = vmul.f32 %v2114, %v2114
      %v2314 = vmul.f32 %v2117, %v2117
      %v2315 = vmul.f32 %v2122, %v2122
      %v2316 = vmul.f32 %v2125, %v2125
      %v2317 = vmul.f32 %v2130, %v2130
      %v2318 = vmul.f32 %v2133, %v2133
      %v2319 = vmul.f32 %v2138, %v2138
      %v2320 = vmul.f32 %v2141, %v2141
      %v2321 = vmul.f32 %v2146, %v2146
      %v2322 = vmul.f32 %v2149, %v2149
      %v2323 = vmul.f32 %v2154, %v2154
      %v2324 = vmul.f32 %v2157, %v2157
      %v2325 = vmul.f32 %v2162, %v2162
      %v2326 = vmul.f32 %v2165, %v2165
      %v2327 = vmul.f32 %v2170, %v2170
      %v2328 = vmul.f32 %v2173, %v2173
      %v2329 = vmul.f32 %v2178, %v2178
      %v2330 = vmul.f32 %v2181, %v2181
      %v2331 = vmul.f32 %v2186, %v2186
      %v2332 = vmul.f32 %v2189, %v2189
      %v2333 = vmul.f32 %v2194, %v2194
      %v2334 = vmul.f32 %v2197, %v2197
      %v2335 = vsel %vm764, %v2303, 0.0
      %v2336 = vsel %vm764, %v2304, 0.0
      %v2337 = vadd.f32 %v2335, %v2336
      %v2338 = vsel %vm764, %v2305, 0.0
      %v2339 = vadd.f32 %v2337, %v2338
      %v2340 = vsel %vm764, %v2306, 0.0
      %v2341 = vadd.f32 %v2339, %v2340
      %v2342 = vsel %vm764, %v2307, 0.0
      %v2343 = vadd.f32 %v2341, %v2342
      %v2344 = vsel %vm764, %v2308, 0.0
      %v2345 = vadd.f32 %v2343, %v2344
      %v2346 = vsel %vm764, %v2309, 0.0
      %v2347 = vadd.f32 %v2345, %v2346
      %v2348 = vsel %vm764, %v2310, 0.0
      %v2349 = vadd.f32 %v2347, %v2348
      %v2350 = vsel %vm764, %v2311, 0.0
      %v2351 = vadd.f32 %v2349, %v2350
      %v2352 = vsel %vm764, %v2312, 0.0
      %v2353 = vadd.f32 %v2351, %v2352
      %v2354 = vsel %vm764, %v2313, 0.0
      %v2355 = vadd.f32 %v2353, %v2354
      %v2356 = vsel %vm764, %v2314, 0.0
      %v2357 = vadd.f32 %v2355, %v2356
      %v2358 = vsel %vm764, %v2315, 0.0
      %v2359 = vadd.f32 %v2357, %v2358
      %v2360 = vsel %vm764, %v2316, 0.0
      %v2361 = vadd.f32 %v2359, %v2360
      %v2362 = vsel %vm764, %v2317, 0.0
      %v2363 = vadd.f32 %v2361, %v2362
      %v2364 = vsel %vm764, %v2318, 0.0
      %v2365 = vadd.f32 %v2363, %v2364
      %v2366 = vsel %vm764, %v2319, 0.0
      %v2367 = vadd.f32 %v2365, %v2366
      %v2368 = vsel %vm764, %v2320, 0.0
      %v2369 = vadd.f32 %v2367, %v2368
      %v2370 = vsel %vm764, %v2321, 0.0
      %v2371 = vadd.f32 %v2369, %v2370
      %v2372 = vsel %vm764, %v2322, 0.0
      %v2373 = vadd.f32 %v2371, %v2372
      %v2374 = vsel %vm764, %v2323, 0.0
      %v2375 = vadd.f32 %v2373, %v2374
      %v2376 = vsel %vm764, %v2324, 0.0
      %v2377 = vadd.f32 %v2375, %v2376
      %v2378 = vsel %vm764, %v2325, 0.0
      %v2379 = vadd.f32 %v2377, %v2378
      %v2380 = vsel %vm764, %v2326, 0.0
      %v2381 = vadd.f32 %v2379, %v2380
      %v2382 = vsel %vm764, %v2327, 0.0
      %v2383 = vadd.f32 %v2381, %v2382
      %v2384 = vsel %vm764, %v2328, 0.0
      %v2385 = vadd.f32 %v2383, %v2384
      %v2386 = vsel %vm764, %v2329, 0.0
      %v2387 = vadd.f32 %v2385, %v2386
      %v2388 = vsel %vm764, %v2330, 0.0
      %v2389 = vadd.f32 %v2387, %v2388
      %v2390 = vsel %vm764, %v2331, 0.0
      %v2391 = vadd.f32 %v2389, %v2390
      %v2392 = vsel %vm764, %v2332, 0.0
      %v2393 = vadd.f32 %v2391, %v2392
      %v2394 = vsel %vm764, %v2333, 0.0
      %v2395 = vadd.f32 %v2393, %v2394
      %v2396 = vsel %vm764, %v2334, 0.0
      %v2397 = vadd.f32 %v2395, %v2396
      %v2398 = vrot.slane %v2397, 4
      %v2399 = vadd.f32 %v2397, %v2398
      %v2400 = vrot.slane %v2399, 2
      %v2401 = vadd.f32 %v2399, %v2400
      %v2402 = vrot.slane %v2401, 1
      %v2403 = vadd.f32 %v2401, %v2402
      %2404 = vst.msk [vmem:[%s268] sm:$0x1] %vm2301, %v2403
      %p2405 = scmp.lt.s32.totalorder %s18, 1
      %s2406 = scalar_select %p2405, %s18, 1
      %s2407 = smul.addr %s2406, 32
      %s2408 = smul.addr %s2407, 8
      %s2409 = scalar_lea.vmem %s4, %s2408
      %p2410 = scmp.lt.s32.totalorder %s18, 1
      %s2411 = scalar_select %p2410, %s18, 1
      %s2412 = scalar_lea.vmem %s5, %s2411
      %p2413 = scmp.lt.s32.totalorder %s18, 1
      %s2414 = scalar_select %p2413, %s18, 1
      %s2415 = scalar_lea.vmem %s6, %s2414
      // Predicated region
      $region37: #{residual_block.4} parent=35 // pred_check
        %p2416 = pneg %p125
      $region38: #{residual_block.4} parent=35 // pred_check_branch
        %2418 = sbr.rel (%p2416) target = $region40
      $region39: #{residual_block.4} parent=35 // pred_region
        _
      $region40: #{residual_block.4} parent=35 // pred_fallthru
        _
      // Predicated region
      $region41: #{residual_block.4} parent=35 // pred_check
        %p2419 = pneg %p151
      $region42: #{residual_block.4} parent=35 // pred_check_branch
        %2421 = sbr.rel (%p2419) target = $region44
      $region43: #{residual_block.4} parent=35 // pred_region
        _
      $region44: #{residual_block.4} parent=35 // pred_fallthru
        _
      // Predicated region
      $region45: #{residual_block.4} parent=35 // pred_check
        %p2422 = pneg %p177
      $region46: #{residual_block.4} parent=35 // pred_check_branch
        %2424 = sbr.rel (%p2422) target = $region48
      $region47: #{residual_block.4} parent=35 // pred_region
        _
      $region48: #{residual_block.4} parent=35 // pred_fallthru
        _
    $region36: #{residual_block.4} parent=5 // pred_fallthru
      _
    %p2425 = scmp.le.s32.totalorder 2, %s13
    // Predicated region
    $region49: #{residual_block.4} parent=5 // pred_check
      %p2426 = pneg %p2425
    $region50: #{residual_block.4} parent=5 // pred_check_branch
      %2428 = sbr.rel (%p2426) target = $region52
    $region51: #{residual_block.4} parent=5 // pred_region
      %s2429 = ssub.s32 %s13, 2
      // Predicated region
      $region53: #{residual_block.4} parent=51 // pred_check
        %p2430 = pneg %p131
      $region54: #{residual_block.4} parent=51 // pred_check_branch
        %2432 = sbr.rel (%p2430) target = $region56
      $region55: #{residual_block.4} parent=51 // pred_region
        %p2433 = scmp.lt.s32.totalorder %s19, 1
        %s2434 = scalar_select %p2433, %s19, 1
        %s2435 = smul.addr %s2434, 32
        %s2436 = smul.addr %s2435, 8
        %s2437 = scalar_lea.vmem %s4, %s2436
      $region56: #{residual_block.4} parent=51 // pred_fallthru
        _
      // Predicated region
      $region57: #{residual_block.4} parent=51 // pred_check
        %p2438 = pneg %p157
      $region58: #{residual_block.4} parent=51 // pred_check_branch
        %2440 = sbr.rel (%p2438) target = $region60
      $region59: #{residual_block.4} parent=51 // pred_region
        %p2441 = scmp.lt.s32.totalorder %s19, 1
        %s2442 = scalar_select %p2441, %s19, 1
        %s2443 = scalar_lea.vmem %s5, %s2442
      $region60: #{residual_block.4} parent=51 // pred_fallthru
        _
      // Predicated region
      $region61: #{residual_block.4} parent=51 // pred_check
        %p2444 = pneg %p183
      $region62: #{residual_block.4} parent=51 // pred_check_branch
        %2446 = sbr.rel (%p2444) target = $region64
      $region63: #{residual_block.4} parent=51 // pred_region
        %p2447 = scmp.lt.s32.totalorder %s19, 1
        %s2448 = scalar_select %p2447, %s19, 1
        %s2449 = scalar_lea.vmem %s6, %s2448
      $region64: #{residual_block.4} parent=51 // pred_fallthru
        _
    $region52: #{residual_block.4} parent=5 // pred_fallthru
      _
  $region6: #{residual_block.4} parent=0 // loop_footer
    %s17 = sadd.s32 1, %s13
  $region7: #{residual_block.4} parent=0 // loop_footer_branch
    %12 = sbr.rel target = $region3
  $region8: #{residual_block.4} parent=0 // loop_exit
    _

</llo_original>
